<compile_context>
chip_gen: v5e
topology: v5e:2x2
jax: 0.10.0
libtpu: 0.0.40
codegen_flags: <defaults>
</compile_context>

<pallas_src>
import jax
import jax.numpy as jnp
from jax.experimental import pallas as pl
from jax.experimental.pallas import tpu as pltpu


def _rbm_forward_kernel(v_ref, wt_ref, w_ref, hb_ref, vb_ref, rh_ref, rv_ref,
                        vout_ref):
    v = v_ref[...]                                   # (TB, n_visible)

    # p_h1 = sigmoid(v @ W^T + h_bias); W^T is pre-transposed in the wrapper.
    logits_h = jnp.dot(v, wt_ref[...],
                       preferred_element_type=jnp.float32) + hb_ref[...]
    p_h1 = jax.nn.sigmoid(logits_h)

    # sample_from_p(p) == relu(sign(p - U)) == indicator(p > U)
    h1 = jnp.where(p_h1 > rh_ref[...], 1.0, 0.0)     # (TB, n_hidden), exact {0,1}

    # p_v = sigmoid(h1 @ W + v_bias)
    logits_v = jnp.dot(h1, w_ref[...],
                       preferred_element_type=jnp.float32) + vb_ref[...]
    p_v = jax.nn.sigmoid(logits_v)

    vout_ref[...] = jnp.where(p_v > rv_ref[...], 1.0, 0.0).astype(vout_ref.dtype)


def rbm_forward(v, W, h_bias, v_bias, rand_h, rand_v, *, block_b=256):
    """Returns (v, v_) exactly like RBM.forward. All compute is in the kernel."""
    v_in = v
    B, n_visible = v.shape
    n_hidden = W.shape[0]

    # Batch tile: multiple of 8 (f32 sublane), as large as requested/possible.
    TB = max(8, min(block_b, B))
    TB = ((TB + 7) // 8) * 8
    B_pad = ((B + TB - 1) // TB) * TB

    if B_pad != B:
        pad = B_pad - B
        v = jnp.pad(v, ((0, pad), (0, 0)))
        rand_h = jnp.pad(rand_h, ((0, pad), (0, 0)), constant_values=1.0)
        rand_v = jnp.pad(rand_v, ((0, pad), (0, 0)), constant_values=1.0)

    Wt = W.T                                   # (n_visible, n_hidden)
    hb2 = h_bias.reshape(1, n_hidden)
    vb2 = v_bias.reshape(1, n_visible)

    grid = (B_pad // TB,)

    # VMEM budget: double-buffered streamed tiles + resident weights/biases,
    # clamped to stay comfortably under v7x's 64 MiB physical VMEM.
    f32 = 4
    vmem_bytes = f32 * (
        2 * TB * (2 * n_visible + n_hidden)    # v, rand_v, rand_h tiles (x2 buffers)
        + 2 * TB * n_visible                   # output tiles (x2 buffers)
        + 2 * 2 * n_hidden * n_visible         # W and W^T (x2 buffers each)
        + 2 * 2 * (n_hidden + n_visible)       # biases
    )
    vmem_limit = int(min(max(2 * vmem_bytes + (4 << 20), 32 << 20), 56 << 20))

    v_out = pl.pallas_call(
        _rbm_forward_kernel,
        out_shape=jax.ShapeDtypeStruct((B_pad, n_visible), jnp.float32),
        grid_spec=pltpu.PrefetchScalarGridSpec(
            num_scalar_prefetch=0,
            grid=grid,
            in_specs=[
                pl.BlockSpec((TB, n_visible), lambda i: (i, 0)),        # v (streamed)
                pl.BlockSpec((n_visible, n_hidden), lambda i: (0, 0)),  # W^T (resident)
                pl.BlockSpec((n_hidden, n_visible), lambda i: (0, 0)),  # W (resident)
                pl.BlockSpec((1, n_hidden), lambda i: (0, 0)),          # h_bias (resident)
                pl.BlockSpec((1, n_visible), lambda i: (0, 0)),         # v_bias (resident)
                pl.BlockSpec((TB, n_hidden), lambda i: (i, 0)),         # rand_h (streamed)
                pl.BlockSpec((TB, n_visible), lambda i: (i, 0)),        # rand_v (streamed)
            ],
            out_specs=pl.BlockSpec((TB, n_visible), lambda i: (i, 0)),
        ),
        compiler_params=pltpu.CompilerParams(
            dimension_semantics=("parallel",),
            vmem_limit_bytes=vmem_limit,
        ),
    )(v, Wt, W, hb2, vb2, rand_h, rand_v)

    return v_in, v_out[:B]


if __name__ == "__main__":
    # Small, TPU-friendly shapes consistent with the module (n_visible/n_hidden
    # scaled down from 784/500; batch sized to exercise a multi-tile grid).
    batch = 512
    n_visible = 256
    n_hidden = 128

    key = jax.random.PRNGKey(0)
    k_v, k_w, k_rh, k_rv = jax.random.split(key, 4)

    # Deterministic parameter init mirroring __init__: W ~ N(0,1)*0.01, biases=0.
    W = jax.random.normal(k_w, (n_hidden, n_visible), dtype=jnp.float32) * 0.01
    v_bias = jnp.zeros((n_visible,), dtype=jnp.float32)
    h_bias = jnp.zeros((n_hidden,), dtype=jnp.float32)

    # Input visible units (e.g. binarized pixels in [0, 1)).
    v = jax.random.uniform(k_v, (batch, n_visible), dtype=jnp.float32)

    # Uniform noise consumed by the two sample_from_p calls on the forward path.
    # (Kept host-provided so the result matches the PyTorch/JAX reference stream;
    #  in-kernel pltpu.prng_* would cut HBM traffic further but change the stream.)
    rand_h = jax.random.uniform(k_rh, (batch, n_hidden), dtype=jnp.float32)
    rand_v = jax.random.uniform(k_rv, (batch, n_visible), dtype=jnp.float32)

    v_in, v_sampled = rbm_forward(v, W, h_bias, v_bias, rand_h, rand_v,
                                  block_b=256)
    jax.block_until_ready(v_sampled)

    # Pure-JAX reference of the same forward math.
    p_h1 = jax.nn.sigmoid(v @ W.T + h_bias)
    h1 = jnp.where(p_h1 > rand_h, 1.0, 0.0)
    p_v = jax.nn.sigmoid(h1 @ W + v_bias)
    v_ref = jnp.where(p_v > rand_v, 1.0, 0.0)

    assert v_sampled.shape == (batch, n_visible)
    assert v_in.shape == v.shape
    # Outputs are exact {0,1} indicators.
    assert bool(jnp.all((v_sampled == 0.0) | (v_sampled == 1.0)))
    # Binary samples can only differ from the reference if an f32 logit lands
    # within rounding distance of its uniform threshold; tolerate a vanishing
    # fraction of such flips.
    mismatch = float(jnp.mean(jnp.abs(v_sampled - v_ref)))
    assert mismatch < 5e-3, f"mismatch fraction too high: {mismatch}"

    print("KERNEL_OK")
</pallas_src>

<mosaic_0001>
module attributes {stable_mosaic.version = 11 : i64} {
  func.func @_rbm_forward_kernel(%arg0: i32, %arg1: memref<256x256xf32, #tpu.memory_space<vmem>>, %arg2: memref<256x128xf32, #tpu.memory_space<vmem>>, %arg3: memref<128x256xf32, #tpu.memory_space<vmem>>, %arg4: memref<1x128xf32, #tpu.memory_space<vmem>>, %arg5: memref<1x256xf32, #tpu.memory_space<vmem>>, %arg6: memref<256x128xf32, #tpu.memory_space<vmem>>, %arg7: memref<256x256xf32, #tpu.memory_space<vmem>>, %arg8: memref<256x256xf32, #tpu.memory_space<vmem>>) attributes {dimension_semantics = [#tpu.dimension_semantics<parallel>], iteration_bounds = array<i64: 2>, scalar_prefetch = 0 : i64, scratch_operands = 0 : i64, tpu.core_type = #tpu.core_type<tc>, window_params = [{transform_indices = @transform_0, window_bounds = array<i64: 256, 256>}, {pipeline_mode = #tpu.pipeline_mode<synchronous>, transform_indices = @transform_1, window_bounds = array<i64: 256, 128>}, {pipeline_mode = #tpu.pipeline_mode<synchronous>, transform_indices = @transform_2, window_bounds = array<i64: 128, 256>}, {pipeline_mode = #tpu.pipeline_mode<synchronous>, transform_indices = @transform_3, window_bounds = array<i64: 1, 128>}, {pipeline_mode = #tpu.pipeline_mode<synchronous>, transform_indices = @transform_4, window_bounds = array<i64: 1, 256>}, {transform_indices = @transform_5, window_bounds = array<i64: 256, 128>}, {transform_indices = @transform_6, window_bounds = array<i64: 256, 256>}, {transform_indices = @transform_7, window_bounds = array<i64: 256, 256>}]} {
    %c0 = arith.constant 0 : index
    %c0_0 = arith.constant 0 : index
    %0 = vector.load %arg1[%c0, %c0_0] : memref<256x256xf32, #tpu.memory_space<vmem>>, vector<256x256xf32>
    %c0_1 = arith.constant 0 : index
    %c0_2 = arith.constant 0 : index
    %1 = vector.load %arg2[%c0_1, %c0_2] : memref<256x128xf32, #tpu.memory_space<vmem>>, vector<256x128xf32>
    %cst = arith.constant dense<0.000000e+00> : vector<256x128xf32>
    %2 = tpu.matmul %0, %1, %cst {dimension_numbers = #tpu.dot_dimension_numbers<[1], [0], [0], [1], [0, 0, 1, 1], [], []>} : vector<256x256xf32>, vector<256x128xf32>, vector<256x128xf32> -> vector<256x128xf32>
    %c0_3 = arith.constant 0 : index
    %c0_4 = arith.constant 0 : index
    %3 = vector.load %arg4[%c0_3, %c0_4] : memref<1x128xf32, #tpu.memory_space<vmem>>, vector<1x128xf32>
    %4 = vector.broadcast %3 : vector<1x128xf32> to vector<256x128xf32>
    %5 = arith.addf %2, %4 : vector<256x128xf32>
    %6 = arith.negf %5 : vector<256x128xf32>
    %7 = math.exp %6 : vector<256x128xf32>
    %cst_5 = arith.constant 1.000000e+00 : f32
    %8 = vector.broadcast %cst_5 : f32 to vector<256x128xf32>
    %9 = arith.addf %8, %7 : vector<256x128xf32>
    %10 = arith.divf %8, %9 : vector<256x128xf32>
    %c0_6 = arith.constant 0 : index
    %c0_7 = arith.constant 0 : index
    %11 = vector.load %arg6[%c0_6, %c0_7] : memref<256x128xf32, #tpu.memory_space<vmem>>, vector<256x128xf32>
    %12 = arith.cmpf ogt, %10, %11 : vector<256x128xf32>
    %cst_8 = arith.constant 1.000000e+00 : f32
    %cst_9 = arith.constant 0.000000e+00 : f32
    %13 = vector.broadcast %cst_8 : f32 to vector<256x128xf32>
    %14 = vector.broadcast %cst_9 : f32 to vector<256x128xf32>
    %15 = arith.select %12, %13, %14 : vector<256x128xi1>, vector<256x128xf32>
    %c0_10 = arith.constant 0 : index
    %c0_11 = arith.constant 0 : index
    %16 = vector.load %arg3[%c0_10, %c0_11] : memref<128x256xf32, #tpu.memory_space<vmem>>, vector<128x256xf32>
    %cst_12 = arith.constant dense<0.000000e+00> : vector<256x256xf32>
    %17 = tpu.matmul %15, %16, %cst_12 {dimension_numbers = #tpu.dot_dimension_numbers<[1], [0], [0], [1], [0, 0, 1, 1], [], []>} : vector<256x128xf32>, vector<128x256xf32>, vector<256x256xf32> -> vector<256x256xf32>
    %c0_13 = arith.constant 0 : index
    %c0_14 = arith.constant 0 : index
    %18 = vector.load %arg5[%c0_13, %c0_14] : memref<1x256xf32, #tpu.memory_space<vmem>>, vector<1x256xf32>
    %19 = vector.broadcast %18 : vector<1x256xf32> to vector<256x256xf32>
    %20 = arith.addf %17, %19 : vector<256x256xf32>
    %21 = arith.negf %20 : vector<256x256xf32>
    %22 = math.exp %21 : vector<256x256xf32>
    %cst_15 = arith.constant 1.000000e+00 : f32
    %23 = vector.broadcast %cst_15 : f32 to vector<256x256xf32>
    %24 = arith.addf %23, %22 : vector<256x256xf32>
    %25 = arith.divf %23, %24 : vector<256x256xf32>
    %c0_16 = arith.constant 0 : index
    %c0_17 = arith.constant 0 : index
    %26 = vector.load %arg7[%c0_16, %c0_17] : memref<256x256xf32, #tpu.memory_space<vmem>>, vector<256x256xf32>
    %27 = arith.cmpf ogt, %25, %26 : vector<256x256xf32>
    %cst_18 = arith.constant 1.000000e+00 : f32
    %cst_19 = arith.constant 0.000000e+00 : f32
    %28 = vector.broadcast %cst_18 : f32 to vector<256x256xf32>
    %29 = vector.broadcast %cst_19 : f32 to vector<256x256xf32>
    %30 = arith.select %27, %28, %29 : vector<256x256xi1>, vector<256x256xf32>
    %c0_20 = arith.constant 0 : index
    %c0_21 = arith.constant 0 : index
    %31 = vector.load %arg8[%c0_20, %c0_21] : memref<256x256xf32, #tpu.memory_space<vmem>>, vector<256x256xf32>
    tpu.vector_store %arg8[%c0_20, %c0_21], %30 {strides = array<i32>} : memref<256x256xf32, #tpu.memory_space<vmem>>, vector<256x256xf32>,
    return
  }
  func.func @transform_0(%arg0: i32) -> (i32, i32) {
    %c0_i32 = arith.constant 0 : i32
    %c0_i32_0 = arith.constant 0 : i32
    return %arg0, %c0_i32 : i32, i32
  }
  func.func @transform_1(%arg0: i32) -> (i32, i32) {
    %c0_i32 = arith.constant 0 : i32
    %c0_i32_0 = arith.constant 0 : i32
    %c0_i32_1 = arith.constant 0 : i32
    return %c0_i32, %c0_i32_0 : i32, i32
  }
  func.func @transform_2(%arg0: i32) -> (i32, i32) {
    %c0_i32 = arith.constant 0 : i32
    %c0_i32_0 = arith.constant 0 : i32
    %c0_i32_1 = arith.constant 0 : i32
    return %c0_i32, %c0_i32_0 : i32, i32
  }
  func.func @transform_3(%arg0: i32) -> (i32, i32) {
    %c0_i32 = arith.constant 0 : i32
    %c0_i32_0 = arith.constant 0 : i32
    %c0_i32_1 = arith.constant 0 : i32
    return %c0_i32, %c0_i32_0 : i32, i32
  }
  func.func @transform_4(%arg0: i32) -> (i32, i32) {
    %c0_i32 = arith.constant 0 : i32
    %c0_i32_0 = arith.constant 0 : i32
    %c0_i32_1 = arith.constant 0 : i32
    return %c0_i32, %c0_i32_0 : i32, i32
  }
  func.func @transform_5(%arg0: i32) -> (i32, i32) {
    %c0_i32 = arith.constant 0 : i32
    %c0_i32_0 = arith.constant 0 : i32
    return %arg0, %c0_i32 : i32, i32
  }
  func.func @transform_6(%arg0: i32) -> (i32, i32) {
    %c0_i32 = arith.constant 0 : i32
    %c0_i32_0 = arith.constant 0 : i32
    return %arg0, %c0_i32 : i32, i32
  }
  func.func @transform_7(%arg0: i32) -> (i32, i32) {
    %c0_i32 = arith.constant 0 : i32
    %c0_i32_0 = arith.constant 0 : i32
    return %arg0, %c0_i32 : i32, i32
  }
}

</mosaic_0001>

<llo_original>
// kernel: tpu_custom_call.1
$region0: #{tpu_custom_call.1}
  #allocation0 [shape = 'u32[]', space=smem, size = 0x4, offset = 0x4, fixed_abs, tag = 'smem constant byte address 0x4 - core index']
  #allocation1 [shape = 'u32[72,128]{1,0:T(1,128)}', space=vmem, size = 0x9000, scoped, tag = 'internal scratch']
  %s0 = inlined_call_operand.hbm [shape: f32[512,256], index: 0, kind: input, shape index: {}]
  %s1 = inlined_call_operand.hbm [shape: f32[256,128], index: 1, kind: input, shape index: {}]
  %s2 = inlined_call_operand.hbm [shape: f32[128,256], index: 2, kind: input, shape index: {}]
  %s3 = inlined_call_operand.vmem [shape: f32[1,128], index: 3, kind: input, shape index: {}]
  %s4 = inlined_call_operand.vmem [shape: f32[1,256], index: 4, kind: input, shape index: {}]
  %s5 = inlined_call_operand.hbm [shape: f32[512,128], index: 5, kind: input, shape index: {}]
  %s6 = inlined_call_operand.hbm [shape: f32[512,256], index: 6, kind: input, shape index: {}]
  %s7 = inlined_call_operand.hbm [shape: f32[512,256], index: 7, kind: output, shape index: {}]
  %s8 = sld [smem:[#allocation0]]
  $region81: #{tpu_custom_call.1} parent=0
    _
  %s10 = ssub.s32 1, %s8
  %s11 = scalar_select 0, %s10, %s8
  $region1: #{tpu_custom_call.1} parent=0
    #allocation2 [shape = 'u8[524288]{0}', space=vmem, size = 0x80000, scoped, tag = 'input window, operand 0']
    #allocation3 [shape = 's32[2]{0}', space=sflag, size = 0x8, scoped, tag = 'scoped memory for tpu_custom_call.1']
    #allocation4 [shape = 's32[2]{0}', space=sflag, size = 0x8, scoped, tag = 'scoped memory for tpu_custom_call.1']
    #allocation5 [shape = 'u8[131072]{0}', space=vmem, size = 0x20000, scoped, tag = 'input window, operand 1, single buffered']
    #allocation6 [shape = 's32[1]{0}', space=sflag, size = 0x4, scoped, tag = 'scoped memory for tpu_custom_call.1']
    #allocation7 [shape = 'u8[131072]{0}', space=vmem, size = 0x20000, scoped, tag = 'input window, operand 2, single buffered']
    #allocation8 [shape = 'u8[262144]{0}', space=vmem, size = 0x40000, scoped, tag = 'input window, operand 5']
    #allocation9 [shape = 's32[2]{0}', space=sflag, size = 0x8, scoped, tag = 'scoped memory for tpu_custom_call.1']
    #allocation10 [shape = 'u8[524288]{0}', space=vmem, size = 0x80000, scoped, tag = 'input window, operand 6']
    #allocation11 [shape = 'u8[524288]{0}', space=vmem, size = 0x80000, scoped, tag = 'output window, operand 0']
    %12 = vsyncpa [#allocation3], 0
    %s13 = scalar_lea.sflag [#allocation3], 1
    %14 = vsyncpa %s13, 0
    %15 = vsyncpa [#allocation6], 0
    %16 = vsyncpa [#allocation9], 0
    %s17 = scalar_lea.sflag [#allocation9], 1
    %18 = vsyncpa %s17, 0
    %19 = vsyncpa [#allocation4], 0
    %s20 = scalar_lea.sflag [#allocation4], 1
    %21 = vsyncpa %s20, 0
    loop: start=0, step=1, limit=4
    $region2: #{tpu_custom_call.1} parent=1 // loop_pre_header
      _
    $region3: #{tpu_custom_call.1} parent=1 // loop_header
      %s23 = sphi 0, %s27
      %p24 = scmp.ge.s32.totalorder %s23, 4
      %s33 = sphi 0, %s35
      %s36 = sphi 0, %s33
      %s37 = sphi 0, %s36
      %s53 = sphi 0, %s37
      %s57 = sphi 0, %s57
      %s59 = sphi 0, %s57
      %s60 = sphi 0, %s59
      %s74 = sphi 0, %s60
      %s78 = sphi 0, %s78
      %s80 = sphi 0, %s78
      %s81 = sphi 0, %s80
      %s95 = sphi 0, %s81
      %s99 = sphi 0, %s99
      %s101 = sphi 0, %s99
      %s102 = sphi 0, %s101
      %s116 = sphi 0, %s102
      %s120 = sphi 0, %s120
      %s122 = sphi 0, %s120
      %s123 = sphi 0, %s122
      %s137 = sphi 0, %s123
      %s143 = sphi 0, %s145
      %s146 = sphi 0, %s143
      %s147 = sphi 0, %s146
      %s163 = sphi 0, %s147
      %s169 = sphi 0, %s171
      %s172 = sphi 0, %s169
      %s173 = sphi 0, %s172
      %s189 = sphi 0, %s173
      %s195 = sphi 0, %s197
      %s198 = sphi 0, %s195
      %s199 = sphi 0, %s198
      %s215 = sphi 0, %s199
    $region4: #{tpu_custom_call.1} parent=1 // loop_header_branch
      %26 = sbr.rel (%p24) target = $region8
    $region5: #{tpu_custom_call.1} parent=1 // loop_body
      %s28 = ssub.s32 %s23, 1
      %s29 = ssub.s32 %s23, 2
      %s30 = sadd.s32 %s23, 1
      %s31 = ssub.s32 %s23, %s30
      %p32 = scmp.eq.s32.totalorder %s31, 0
      %s34 = sadd.s32 %s33, 1
      %s35 = scalar_select %p32, %s33, %s34
      %p38 = pneg %p32
      %p39 = scmp.eq.s32.totalorder %s23, 1
      %p40 = por %p38, %p39
      %p41 = scmp.ne.s32.totalorder %s33, %s36
      %p42 = scmp.eq.s32.totalorder %s23, 0
      %p43 = por %p41, %p42
      %p44 = scmp.ne.s32.totalorder %s33, %s36
      %p45 = scmp.eq.s32.totalorder %s28, 1
      %p46 = por %p44, %p45
      %p47 = scmp.ne.s32.totalorder %s36, %s37
      %p48 = scmp.eq.s32.totalorder %s28, 0
      %p49 = por %p47, %p48
      %p50 = scmp.ne.s32.totalorder %s36, %s37
      %p51 = scmp.eq.s32.totalorder %s29, 1
      %p52 = por %p50, %p51
      %p54 = scmp.ne.s32.totalorder %s37, %s53
      %p55 = scmp.eq.s32.totalorder %s29, 0
      %p56 = por %p54, %p55
      %s58 = sadd.s32 %s57, 1
      %p61 = scmp.eq.s32.totalorder %s23, 1
      %p62 = scmp.ne.s32.totalorder %s57, %s59
      %p63 = scmp.eq.s32.totalorder %s23, 0
      %p64 = por %p62, %p63
      %p65 = scmp.ne.s32.totalorder %s57, %s59
      %p66 = scmp.eq.s32.totalorder %s28, 1
      %p67 = por %p65, %p66
      %p68 = scmp.ne.s32.totalorder %s59, %s60
      %p69 = scmp.eq.s32.totalorder %s28, 0
      %p70 = por %p68, %p69
      %p71 = scmp.ne.s32.totalorder %s59, %s60
      %p72 = scmp.eq.s32.totalorder %s29, 1
      %p73 = por %p71, %p72
      %p75 = scmp.ne.s32.totalorder %s60, %s74
      %p76 = scmp.eq.s32.totalorder %s29, 0
      %p77 = por %p75, %p76
      %s79 = sadd.s32 %s78, 1
      %p82 = scmp.eq.s32.totalorder %s23, 1
      %p83 = scmp.ne.s32.totalorder %s78, %s80
      %p84 = scmp.eq.s32.totalorder %s23, 0
      %p85 = por %p83, %p84
      %p86 = scmp.ne.s32.totalorder %s78, %s80
      %p87 = scmp.eq.s32.totalorder %s28, 1
      %p88 = por %p86, %p87
      %p89 = scmp.ne.s32.totalorder %s80, %s81
      %p90 = scmp.eq.s32.totalorder %s28, 0
      %p91 = por %p89, %p90
      %p92 = scmp.ne.s32.totalorder %s80, %s81
      %p93 = scmp.eq.s32.totalorder %s29, 1
      %p94 = por %p92, %p93
      %p96 = scmp.ne.s32.totalorder %s81, %s95
      %p97 = scmp.eq.s32.totalorder %s29, 0
      %p98 = por %p96, %p97
      %s100 = sadd.s32 %s99, 1
      %p103 = scmp.eq.s32.totalorder %s23, 1
      %p104 = scmp.ne.s32.totalorder %s99, %s101
      %p105 = scmp.eq.s32.totalorder %s23, 0
      %p106 = por %p104, %p105
      %p107 = scmp.ne.s32.totalorder %s99, %s101
      %p108 = scmp.eq.s32.totalorder %s28, 1
      %p109 = por %p107, %p108
      %p110 = scmp.ne.s32.totalorder %s101, %s102
      %p111 = scmp.eq.s32.totalorder %s28, 0
      %p112 = por %p110, %p111
      %p113 = scmp.ne.s32.totalorder %s101, %s102
      %p114 = scmp.eq.s32.totalorder %s29, 1
      %p115 = por %p113, %p114
      %p117 = scmp.ne.s32.totalorder %s102, %s116
      %p118 = scmp.eq.s32.totalorder %s29, 0
      %p119 = por %p117, %p118
      %s121 = sadd.s32 %s120, 1
      %p124 = scmp.eq.s32.totalorder %s23, 1
      %p125 = scmp.ne.s32.totalorder %s120, %s122
      %p126 = scmp.eq.s32.totalorder %s23, 0
      %p127 = por %p125, %p126
      %p128 = scmp.ne.s32.totalorder %s120, %s122
      %p129 = scmp.eq.s32.totalorder %s28, 1
      %p130 = por %p128, %p129
      %p131 = scmp.ne.s32.totalorder %s122, %s123
      %p132 = scmp.eq.s32.totalorder %s28, 0
      %p133 = por %p131, %p132
      %p134 = scmp.ne.s32.totalorder %s122, %s123
      %p135 = scmp.eq.s32.totalorder %s29, 1
      %p136 = por %p134, %p135
      %p138 = scmp.ne.s32.totalorder %s123, %s137
      %p139 = scmp.eq.s32.totalorder %s29, 0
      %p140 = por %p138, %p139
      %s141 = ssub.s32 %s23, %s30
      %p142 = scmp.eq.s32.totalorder %s141, 0
      %s144 = sadd.s32 %s143, 1
      %s145 = scalar_select %p142, %s143, %s144
      %p148 = pneg %p142
      %p149 = scmp.eq.s32.totalorder %s23, 1
      %p150 = por %p148, %p149
      %p151 = scmp.ne.s32.totalorder %s143, %s146
      %p152 = scmp.eq.s32.totalorder %s23, 0
      %p153 = por %p151, %p152
      %p154 = scmp.ne.s32.totalorder %s143, %s146
      %p155 = scmp.eq.s32.totalorder %s28, 1
      %p156 = por %p154, %p155
      %p157 = scmp.ne.s32.totalorder %s146, %s147
      %p158 = scmp.eq.s32.totalorder %s28, 0
      %p159 = por %p157, %p158
      %p160 = scmp.ne.s32.totalorder %s146, %s147
      %p161 = scmp.eq.s32.totalorder %s29, 1
      %p162 = por %p160, %p161
      %p164 = scmp.ne.s32.totalorder %s147, %s163
      %p165 = scmp.eq.s32.totalorder %s29, 0
      %p166 = por %p164, %p165
      %s167 = ssub.s32 %s23, %s30
      %p168 = scmp.eq.s32.totalorder %s167, 0
      %s170 = sadd.s32 %s169, 1
      %s171 = scalar_select %p168, %s169, %s170
      %p174 = pneg %p168
      %p175 = scmp.eq.s32.totalorder %s23, 1
      %p176 = por %p174, %p175
      %p177 = scmp.ne.s32.totalorder %s169, %s172
      %p178 = scmp.eq.s32.totalorder %s23, 0
      %p179 = por %p177, %p178
      %p180 = scmp.ne.s32.totalorder %s169, %s172
      %p181 = scmp.eq.s32.totalorder %s28, 1
      %p182 = por %p180, %p181
      %p183 = scmp.ne.s32.totalorder %s172, %s173
      %p184 = scmp.eq.s32.totalorder %s28, 0
      %p185 = por %p183, %p184
      %p186 = scmp.ne.s32.totalorder %s172, %s173
      %p187 = scmp.eq.s32.totalorder %s29, 1
      %p188 = por %p186, %p187
      %p190 = scmp.ne.s32.totalorder %s173, %s189
      %p191 = scmp.eq.s32.totalorder %s29, 0
      %p192 = por %p190, %p191
      %s193 = ssub.s32 %s23, %s30
      %p194 = scmp.eq.s32.totalorder %s193, 0
      %s196 = sadd.s32 %s195, 1
      %s197 = scalar_select %p194, %s195, %s196
      %p200 = pneg %p194
      %p201 = scmp.eq.s32.totalorder %s23, 1
      %p202 = por %p200, %p201
      %p203 = scmp.ne.s32.totalorder %s195, %s198
      %p204 = scmp.eq.s32.totalorder %s23, 0
      %p205 = por %p203, %p204
      %p206 = scmp.ne.s32.totalorder %s195, %s198
      %p207 = scmp.eq.s32.totalorder %s28, 1
      %p208 = por %p206, %p207
      %p209 = scmp.ne.s32.totalorder %s198, %s199
      %p210 = scmp.eq.s32.totalorder %s28, 0
      %p211 = por %p209, %p210
      %p212 = scmp.ne.s32.totalorder %s198, %s199
      %p213 = scmp.eq.s32.totalorder %s29, 1
      %p214 = por %p212, %p213
      %p216 = scmp.ne.s32.totalorder %s199, %s215
      %p217 = scmp.eq.s32.totalorder %s29, 0
      %p218 = por %p216, %p217
      %p219 = scmp.le.s32.totalorder 1, %s23
      %p220 = scmp.lt.s32.totalorder %s23, 3
      %p221 = pnand %p219, %p220
      %p222 = pneg %p221
      // Predicated region
      $region9: #{tpu_custom_call.1} parent=5 // pred_check
        _
      $region10: #{tpu_custom_call.1} parent=5 // pred_check_branch
        %224 = sbr.rel (%p221) target = $region12
      $region11: #{tpu_custom_call.1} parent=5 // pred_region
        %s225 = ssub.s32 %s23, 1
        // Predicated region
        $region13: #{tpu_custom_call.1} parent=11 // pred_check
          %p226 = pneg %p70
        $region14: #{tpu_custom_call.1} parent=11 // pred_check_branch
          %228 = sbr.rel (%p226) target = $region16
        $region15: #{tpu_custom_call.1} parent=11 // pred_region
          %230 = vsyncadd [#allocation6], 0
          %s231 = sshll.u32 %s1, 4
          %s232 = int_to_ptr.hbm [resolvable:$true] %s231
          %s233 = sshll.u32 [#allocation5], 4
          %s234 = int_to_ptr.vmem [resolvable:$true] %s233
          %239 = dma.hbm_to_vmem [thread:$0]  %s232, 4096, %s234, [#allocation6], 128, 128, 8
        $region16: #{tpu_custom_call.1} parent=11 // pred_fallthru
          _
        // Predicated region
        $region17: #{tpu_custom_call.1} parent=11 // pred_check
          %p240 = pneg %p91
        $region18: #{tpu_custom_call.1} parent=11 // pred_check_branch
          %242 = sbr.rel (%p240) target = $region20
        $region19: #{tpu_custom_call.1} parent=11 // pred_region
          %244 = vsyncadd [#allocation6], 0
          %s245 = sshll.u32 %s2, 4
          %s246 = int_to_ptr.hbm [resolvable:$true] %s245
          %s247 = sshll.u32 [#allocation7], 4
          %s248 = int_to_ptr.vmem [resolvable:$true] %s247
          %253 = dma.hbm_to_vmem [thread:$0]  %s246, 4096, %s248, [#allocation6], 256, 256, 16
        $region20: #{tpu_custom_call.1} parent=11 // pred_fallthru
          _
        // Predicated region
        $region21: #{tpu_custom_call.1} parent=11 // pred_check
          %p254 = pneg %p112
        $region22: #{tpu_custom_call.1} parent=11 // pred_check_branch
          %256 = sbr.rel (%p254) target = $region24
        $region23: #{tpu_custom_call.1} parent=11 // pred_region
          _
        $region24: #{tpu_custom_call.1} parent=11 // pred_fallthru
          _
        // Predicated region
        $region25: #{tpu_custom_call.1} parent=11 // pred_check
          %p257 = pneg %p133
        $region26: #{tpu_custom_call.1} parent=11 // pred_check_branch
          %259 = sbr.rel (%p257) target = $region28
        $region27: #{tpu_custom_call.1} parent=11 // pred_region
          _
        $region28: #{tpu_custom_call.1} parent=11 // pred_fallthru
          _
      $region12: #{tpu_custom_call.1} parent=5 // pred_fallthru
        _
      %p260 = scmp.lt.s32.totalorder %s23, 2
      // Predicated region
      $region29: #{tpu_custom_call.1} parent=5 // pred_check
        %p261 = pneg %p260
      $region30: #{tpu_custom_call.1} parent=5 // pred_check_branch
        %263 = sbr.rel (%p261) target = $region32
      $region31: #{tpu_custom_call.1} parent=5 // pred_region
        // Predicated region
        $region33: #{tpu_custom_call.1} parent=31 // pred_check
          %p264 = pneg %p43
        $region34: #{tpu_custom_call.1} parent=31 // pred_check_branch
          %266 = sbr.rel (%p264) target = $region36
        $region35: #{tpu_custom_call.1} parent=31 // pred_region
          %s267 = sand.u32 %s33, 1
          %s268 = scalar_lea.sflag [#allocation3], %s267
          %s269 = sand.u32 %s33, 1
          %s270 = smul.addr %s269, 512
          %s271 = scalar_lea.vmem [#allocation2], %s270
          %s272 = smul.u32 32, %s23
          %274 = vsyncadd %s268, 0
          %s275 = smul.addr %s272, 2
          %s276 = smul.addr %s275, 8
          %s277 = scalar_lea.hbm %s0, %s276
          %s278 = sshll.u32 %s277, 4
          %s279 = int_to_ptr.hbm [resolvable:$true] %s278
          %s280 = sshll.u32 %s271, 4
          %s281 = int_to_ptr.vmem [resolvable:$true] %s280
          %286 = dma.hbm_to_vmem [thread:$0]  %s279, 8192, %s281, %s268, 256, 256, 16
        $region36: #{tpu_custom_call.1} parent=31 // pred_fallthru
          _
        // Predicated region
        $region37: #{tpu_custom_call.1} parent=31 // pred_check
          %p287 = pneg %p153
        $region38: #{tpu_custom_call.1} parent=31 // pred_check_branch
          %289 = sbr.rel (%p287) target = $region40
        $region39: #{tpu_custom_call.1} parent=31 // pred_region
          %s290 = sand.u32 %s23, 1
          %s291 = scalar_lea.sflag [#allocation9], %s290
          %s292 = sand.u32 %s143, 1
          %s293 = smul.addr %s292, 256
          %s294 = scalar_lea.vmem [#allocation8], %s293
          %s295 = smul.u32 32, %s23
          %297 = vsyncadd %s291, 0
          %s298 = smul.addr %s295, 8
          %s299 = scalar_lea.hbm %s5, %s298
          %s300 = sshll.u32 %s299, 4
          %s301 = int_to_ptr.hbm [resolvable:$true] %s300
          %s302 = sshll.u32 %s294, 4
          %s303 = int_to_ptr.vmem [resolvable:$true] %s302
          %308 = dma.hbm_to_vmem [thread:$0]  %s301, 4096, %s303, %s291, 128, 128, 8
        $region40: #{tpu_custom_call.1} parent=31 // pred_fallthru
          _
        // Predicated region
        $region41: #{tpu_custom_call.1} parent=31 // pred_check
          %p309 = pneg %p179
        $region42: #{tpu_custom_call.1} parent=31 // pred_check_branch
          %311 = sbr.rel (%p309) target = $region44
        $region43: #{tpu_custom_call.1} parent=31 // pred_region
          %s312 = sand.u32 %s23, 1
          %s313 = scalar_lea.sflag [#allocation9], %s312
          %s314 = sand.u32 %s169, 1
          %s315 = smul.addr %s314, 512
          %s316 = scalar_lea.vmem [#allocation10], %s315
          %s317 = smul.u32 32, %s23
          %319 = vsyncadd %s313, 0
          %s320 = smul.addr %s317, 2
          %s321 = smul.addr %s320, 8
          %s322 = scalar_lea.hbm %s6, %s321
          %s323 = sshll.u32 %s322, 4
          %s324 = int_to_ptr.hbm [resolvable:$true] %s323
          %s325 = sshll.u32 %s316, 4
          %s326 = int_to_ptr.vmem [resolvable:$true] %s325
          %331 = dma.hbm_to_vmem [thread:$0]  %s324, 8192, %s326, %s313, 256, 256, 16
        $region44: #{tpu_custom_call.1} parent=31 // pred_fallthru
          _
      $region32: #{tpu_custom_call.1} parent=5 // pred_fallthru
        _
      %p332 = scmp.le.s32.totalorder 1, %s23
      %p333 = scmp.lt.s32.totalorder %s23, 3
      %p334 = pnand %p332, %p333
      %p335 = pneg %p334
      // Predicated region
      $region45: #{tpu_custom_call.1} parent=5 // pred_check
        _
      $region46: #{tpu_custom_call.1} parent=5 // pred_check_branch
        %337 = sbr.rel (%p334) target = $region48
      $region47: #{tpu_custom_call.1} parent=5 // pred_region
        %s338 = ssub.s32 %s23, 1
        %s339 = sand.u32 %s36, 1
        %s340 = scalar_lea.sflag [#allocation3], %s339
        %s341 = sand.u32 %s36, 1
        %s342 = smul.addr %s341, 512
        %s343 = scalar_lea.vmem [#allocation2], %s342
        // Predicated region
        $region49: #{tpu_custom_call.1} parent=47 // pred_check
          %p344 = pneg %p49
        $region50: #{tpu_custom_call.1} parent=47 // pred_check_branch
          %346 = sbr.rel (%p344) target = $region52
        $region51: #{tpu_custom_call.1} parent=47 // pred_region
          %348 = dma.done %s340, 8192
        $region52: #{tpu_custom_call.1} parent=47 // pred_fallthru
          _
        // Predicated region
        $region53: #{tpu_custom_call.1} parent=47 // pred_check
          %p349 = pneg %p70
        $region54: #{tpu_custom_call.1} parent=47 // pred_check_branch
          %351 = sbr.rel (%p349) target = $region56
        $region55: #{tpu_custom_call.1} parent=47 // pred_region
          %353 = dma.done [#allocation6], 4096
        $region56: #{tpu_custom_call.1} parent=47 // pred_fallthru
          _
        // Predicated region
        $region57: #{tpu_custom_call.1} parent=47 // pred_check
          %p354 = pneg %p91
        $region58: #{tpu_custom_call.1} parent=47 // pred_check_branch
          %356 = sbr.rel (%p354) target = $region60
        $region59: #{tpu_custom_call.1} parent=47 // pred_region
          %358 = dma.done [#allocation6], 4096
        $region60: #{tpu_custom_call.1} parent=47 // pred_fallthru
          _
        %s359 = sand.u32 %s28, 1
        %s360 = scalar_lea.sflag [#allocation9], %s359
        %s361 = sand.u32 %s146, 1
        %s362 = smul.addr %s361, 256
        %s363 = scalar_lea.vmem [#allocation8], %s362
        // Predicated region
        $region61: #{tpu_custom_call.1} parent=47 // pred_check
          %p364 = pneg %p159
        $region62: #{tpu_custom_call.1} parent=47 // pred_check_branch
          %366 = sbr.rel (%p364) target = $region64
        $region63: #{tpu_custom_call.1} parent=47 // pred_region
          %368 = dma.done %s360, 4096
        $region64: #{tpu_custom_call.1} parent=47 // pred_fallthru
          _
        %s369 = sand.u32 %s28, 1
        %s370 = scalar_lea.sflag [#allocation9], %s369
        %s371 = sand.u32 %s172, 1
        %s372 = smul.addr %s371, 512
        %s373 = scalar_lea.vmem [#allocation10], %s372
        // Predicated region
        $region65: #{tpu_custom_call.1} parent=47 // pred_check
          %p374 = pneg %p185
        $region66: #{tpu_custom_call.1} parent=47 // pred_check_branch
          %376 = sbr.rel (%p374) target = $region68
        $region67: #{tpu_custom_call.1} parent=47 // pred_region
          %378 = dma.done %s370, 8192
        $region68: #{tpu_custom_call.1} parent=47 // pred_fallthru
          _
        %s379 = sand.u32 %s36, 1
        %s380 = scalar_lea.sflag [#allocation3], %s379
        %s381 = sand.u32 %s36, 1
        %s382 = smul.addr %s381, 512
        %s383 = scalar_lea.vmem [#allocation2], %s382
        %p384 = pneg %p49
        %p385 = pneg %p46
        %p386 = pneg %p70
        %p387 = pneg %p67
        %p388 = pneg %p91
        %p389 = pneg %p88
        %p390 = pneg %p112
        %p391 = pneg %p109
        %p392 = pneg %p133
        %p393 = pneg %p130
        %s394 = sand.u32 %s28, 1
        %s395 = scalar_lea.sflag [#allocation9], %s394
        %s396 = sand.u32 %s146, 1
        %s397 = smul.addr %s396, 256
        %s398 = scalar_lea.vmem [#allocation8], %s397
        %p399 = pneg %p159
        %p400 = pneg %p156
        %s401 = sand.u32 %s28, 1
        %s402 = scalar_lea.sflag [#allocation9], %s401
        %s403 = sand.u32 %s172, 1
        %s404 = smul.addr %s403, 512
        %s405 = scalar_lea.vmem [#allocation10], %s404
        %p406 = pneg %p185
        %p407 = pneg %p182
        %p408 = pneg %p211
        %p409 = pneg %p208
        %s410 = sand.u32 %s198, 1
        %s411 = scalar_lea.sflag [#allocation4], %s410
        %s412 = sand.u32 %s198, 1
        %s413 = smul.addr %s412, 512
        %s414 = scalar_lea.vmem [#allocation11], %s413
        %s415 = smul.u32 32, %s28
        %s416 = smul.u32 32, %s28
        %s417 = smul.u32 32, %s28
        %s418 = smul.u32 32, %s28
        %v419 = vld [vmem:[%s343] sm:$0xff]
        %v420 = vld [vmem:[%s343 + $0x8] sm:$0xff]
        %v421 = vld [vmem:[%s343 + $0x10] sm:$0xff]
        %v422 = vld [vmem:[%s343 + $0x18] sm:$0xff]
        %v423 = vld [vmem:[%s343 + $0x20] sm:$0xff]
        %v424 = vld [vmem:[%s343 + $0x28] sm:$0xff]
        %v425 = vld [vmem:[%s343 + $0x30] sm:$0xff]
        %v426 = vld [vmem:[%s343 + $0x38] sm:$0xff]
        %v427 = vld [vmem:[%s343 + $0x40] sm:$0xff]
        %v428 = vld [vmem:[%s343 + $0x48] sm:$0xff]
        %v429 = vld [vmem:[%s343 + $0x50] sm:$0xff]
        %v430 = vld [vmem:[%s343 + $0x58] sm:$0xff]
        %v431 = vld [vmem:[%s343 + $0x60] sm:$0xff]
        %v432 = vld [vmem:[%s343 + $0x68] sm:$0xff]
        %v433 = vld [vmem:[%s343 + $0x70] sm:$0xff]
        %v434 = vld [vmem:[%s343 + $0x78] sm:$0xff]
        %v435 = vld [vmem:[%s343 + $0x80] sm:$0xff]
        %v436 = vld [vmem:[%s343 + $0x88] sm:$0xff]
        %v437 = vld [vmem:[%s343 + $0x90] sm:$0xff]
        %v438 = vld [vmem:[%s343 + $0x98] sm:$0xff]
        %v439 = vld [vmem:[%s343 + $0xa0] sm:$0xff]
        %v440 = vld [vmem:[%s343 + $0xa8] sm:$0xff]
        %v441 = vld [vmem:[%s343 + $0xb0] sm:$0xff]
        %v442 = vld [vmem:[%s343 + $0xb8] sm:$0xff]
        %v443 = vld [vmem:[%s343 + $0xc0] sm:$0xff]
        %v444 = vld [vmem:[%s343 + $0xc8] sm:$0xff]
        %v445 = vld [vmem:[%s343 + $0xd0] sm:$0xff]
        %v446 = vld [vmem:[%s343 + $0xd8] sm:$0xff]
        %v447 = vld [vmem:[%s343 + $0xe0] sm:$0xff]
        %v448 = vld [vmem:[%s343 + $0xe8] sm:$0xff]
        %v449 = vld [vmem:[%s343 + $0xf0] sm:$0xff]
        %v450 = vld [vmem:[%s343 + $0xf8] sm:$0xff]
        %v451 = vld [vmem:[%s343 + $0x100] sm:$0xff]
        %v452 = vld [vmem:[%s343 + $0x108] sm:$0xff]
        %v453 = vld [vmem:[%s343 + $0x110] sm:$0xff]
        %v454 = vld [vmem:[%s343 + $0x118] sm:$0xff]
        %v455 = vld [vmem:[%s343 + $0x120] sm:$0xff]
        %v456 = vld [vmem:[%s343 + $0x128] sm:$0xff]
        %v457 = vld [vmem:[%s343 + $0x130] sm:$0xff]
        %v458 = vld [vmem:[%s343 + $0x138] sm:$0xff]
        %v459 = vld [vmem:[%s343 + $0x140] sm:$0xff]
        %v460 = vld [vmem:[%s343 + $0x148] sm:$0xff]
        %v461 = vld [vmem:[%s343 + $0x150] sm:$0xff]
        %v462 = vld [vmem:[%s343 + $0x158] sm:$0xff]
        %v463 = vld [vmem:[%s343 + $0x160] sm:$0xff]
        %v464 = vld [vmem:[%s343 + $0x168] sm:$0xff]
        %v465 = vld [vmem:[%s343 + $0x170] sm:$0xff]
        %v466 = vld [vmem:[%s343 + $0x178] sm:$0xff]
        %v467 = vld [vmem:[%s343 + $0x180] sm:$0xff]
        %v468 = vld [vmem:[%s343 + $0x188] sm:$0xff]
        %v469 = vld [vmem:[%s343 + $0x190] sm:$0xff]
        %v470 = vld [vmem:[%s343 + $0x198] sm:$0xff]
        %v471 = vld [vmem:[%s343 + $0x1a0] sm:$0xff]
        %v472 = vld [vmem:[%s343 + $0x1a8] sm:$0xff]
        %v473 = vld [vmem:[%s343 + $0x1b0] sm:$0xff]
        %v474 = vld [vmem:[%s343 + $0x1b8] sm:$0xff]
        %v475 = vld [vmem:[%s343 + $0x1c0] sm:$0xff]
        %v476 = vld [vmem:[%s343 + $0x1c8] sm:$0xff]
        %v477 = vld [vmem:[%s343 + $0x1d0] sm:$0xff]
        %v478 = vld [vmem:[%s343 + $0x1d8] sm:$0xff]
        %v479 = vld [vmem:[%s343 + $0x1e0] sm:$0xff]
        %v480 = vld [vmem:[%s343 + $0x1e8] sm:$0xff]
        %v481 = vld [vmem:[%s343 + $0x1f0] sm:$0xff]
        %v482 = vld [vmem:[%s343 + $0x1f8] sm:$0xff]
        %v483 = vld [vmem:[#allocation5] sm:$0xff]
        %v484 = vld [vmem:[#allocation5 + $0x8] sm:$0xff]
        %v485 = vld [vmem:[#allocation5 + $0x10] sm:$0xff]
        %v486 = vld [vmem:[#allocation5 + $0x18] sm:$0xff]
        %v487 = vld [vmem:[#allocation5 + $0x20] sm:$0xff]
        %v488 = vld [vmem:[#allocation5 + $0x28] sm:$0xff]
        %v489 = vld [vmem:[#allocation5 + $0x30] sm:$0xff]
        %v490 = vld [vmem:[#allocation5 + $0x38] sm:$0xff]
        %v491 = vld [vmem:[#allocation5 + $0x40] sm:$0xff]
        %v492 = vld [vmem:[#allocation5 + $0x48] sm:$0xff]
        %v493 = vld [vmem:[#allocation5 + $0x50] sm:$0xff]
        %v494 = vld [vmem:[#allocation5 + $0x58] sm:$0xff]
        %v495 = vld [vmem:[#allocation5 + $0x60] sm:$0xff]
        %v496 = vld [vmem:[#allocation5 + $0x68] sm:$0xff]
        %v497 = vld [vmem:[#allocation5 + $0x70] sm:$0xff]
        %v498 = vld [vmem:[#allocation5 + $0x78] sm:$0xff]
        %v499 = vld [vmem:[#allocation5 + $0x80] sm:$0xff]
        %v500 = vld [vmem:[#allocation5 + $0x88] sm:$0xff]
        %v501 = vld [vmem:[#allocation5 + $0x90] sm:$0xff]
        %v502 = vld [vmem:[#allocation5 + $0x98] sm:$0xff]
        %v503 = vld [vmem:[#allocation5 + $0xa0] sm:$0xff]
        %v504 = vld [vmem:[#allocation5 + $0xa8] sm:$0xff]
        %v505 = vld [vmem:[#allocation5 + $0xb0] sm:$0xff]
        %v506 = vld [vmem:[#allocation5 + $0xb8] sm:$0xff]
        %v507 = vld [vmem:[#allocation5 + $0xc0] sm:$0xff]
        %v508 = vld [vmem:[#allocation5 + $0xc8] sm:$0xff]
        %v509 = vld [vmem:[#allocation5 + $0xd0] sm:$0xff]
        %v510 = vld [vmem:[#allocation5 + $0xd8] sm:$0xff]
        %v511 = vld [vmem:[#allocation5 + $0xe0] sm:$0xff]
        %v512 = vld [vmem:[#allocation5 + $0xe8] sm:$0xff]
        %v513 = vld [vmem:[#allocation5 + $0xf0] sm:$0xff]
        %v514 = vld [vmem:[#allocation5 + $0xf8] sm:$0xff]
        %v515 = vld [vmem:[%s3] sm:$0x1]
        %v517 = vperm.slane %v515, 0
        %519 = vmatpush.msra.mxu0 %v498
        %520 = vmatpush.msra.mxu0 %v497
        %521 = vmatpush.msra.mxu0 %v496
        %522 = vmatpush.msra.mxu0 %v495
        %523 = vmatpush.msra.mxu0 %v494
        %524 = vmatpush.msra.mxu0 %v493
        %525 = vmatpush.msra.mxu0 %v492
        %526 = vmatpush.msra.mxu0 %v491
        %527 = vmatpush.msra.mxu0 %v490
        %528 = vmatpush.msra.mxu0 %v489
        %529 = vmatpush.msra.mxu0 %v488
        %530 = vmatpush.msra.mxu0 %v487
        %531 = vmatpush.msra.mxu0 %v486
        %532 = vmatpush.msra.mxu0 %v485
        %533 = vmatpush.msra.mxu0 %v484
        %534 = vmatpush.msra.mxu0 %v483
        %535 = vmatmul.f32.gmra.mxu0 %v419
        %v536 = vpop.f32.mrf.mxu0
        %v537 = vadd.f32 %v517, %v536
        %538 = vmatmul.f32.gmra.mxu0 %v421
        %v539 = vpop.f32.mrf.mxu0
        %v540 = vadd.f32 %v517, %v539
        %541 = vmatmul.f32.gmra.mxu0 %v423
        %v542 = vpop.f32.mrf.mxu0
        %v543 = vadd.f32 %v517, %v542
        %544 = vmatmul.f32.gmra.mxu0 %v425
        %v545 = vpop.f32.mrf.mxu0
        %v546 = vadd.f32 %v517, %v545
        %547 = vmatmul.f32.gmra.mxu0 %v427
        %v548 = vpop.f32.mrf.mxu0
        %v549 = vadd.f32 %v517, %v548
        %550 = vmatmul.f32.gmra.mxu0 %v429
        %v551 = vpop.f32.mrf.mxu0
        %v552 = vadd.f32 %v517, %v551
        %553 = vmatmul.f32.gmra.mxu0 %v431
        %v554 = vpop.f32.mrf.mxu0
        %v555 = vadd.f32 %v517, %v554
        %556 = vmatmul.f32.gmra.mxu0 %v433
        %v557 = vpop.f32.mrf.mxu0
        %v558 = vadd.f32 %v517, %v557
        %559 = vmatmul.f32.gmra.mxu0 %v435
        %v560 = vpop.f32.mrf.mxu0
        %v561 = vadd.f32 %v517, %v560
        %562 = vmatmul.f32.gmra.mxu0 %v437
        %v563 = vpop.f32.mrf.mxu0
        %v564 = vadd.f32 %v517, %v563
        %565 = vmatmul.f32.gmra.mxu0 %v439
        %v566 = vpop.f32.mrf.mxu0
        %v567 = vadd.f32 %v517, %v566
        %568 = vmatmul.f32.gmra.mxu0 %v441
        %v569 = vpop.f32.mrf.mxu0
        %v570 = vadd.f32 %v517, %v569
        %571 = vmatmul.f32.gmra.mxu0 %v443
        %v572 = vpop.f32.mrf.mxu0
        %v573 = vadd.f32 %v517, %v572
        %574 = vmatmul.f32.gmra.mxu0 %v445
        %v575 = vpop.f32.mrf.mxu0
        %v576 = vadd.f32 %v517, %v575
        %577 = vmatmul.f32.gmra.mxu0 %v447
        %v578 = vpop.f32.mrf.mxu0
        %v579 = vadd.f32 %v517, %v578
        %580 = vmatmul.f32.gmra.mxu0 %v449
        %v581 = vpop.f32.mrf.mxu0
        %v582 = vadd.f32 %v517, %v581
        %583 = vmatmul.f32.gmra.mxu0 %v451
        %v584 = vpop.f32.mrf.mxu0
        %v585 = vadd.f32 %v517, %v584
        %586 = vmatmul.f32.gmra.mxu0 %v453
        %v587 = vpop.f32.mrf.mxu0
        %v588 = vadd.f32 %v517, %v587
        %589 = vmatmul.f32.gmra.mxu0 %v455
        %v590 = vpop.f32.mrf.mxu0
        %v591 = vadd.f32 %v517, %v590
        %592 = vmatmul.f32.gmra.mxu0 %v457
        %v593 = vpop.f32.mrf.mxu0
        %v594 = vadd.f32 %v517, %v593
        %595 = vmatmul.f32.gmra.mxu0 %v459
        %v596 = vpop.f32.mrf.mxu0
        %v597 = vadd.f32 %v517, %v596
        %598 = vmatmul.f32.gmra.mxu0 %v461
        %v599 = vpop.f32.mrf.mxu0
        %v600 = vadd.f32 %v517, %v599
        %601 = vmatmul.f32.gmra.mxu0 %v463
        %v602 = vpop.f32.mrf.mxu0
        %v603 = vadd.f32 %v517, %v602
        %604 = vmatmul.f32.gmra.mxu0 %v465
        %v605 = vpop.f32.mrf.mxu0
        %v606 = vadd.f32 %v517, %v605
        %607 = vmatmul.f32.gmra.mxu0 %v467
        %v608 = vpop.f32.mrf.mxu0
        %v609 = vadd.f32 %v517, %v608
        %610 = vmatmul.f32.gmra.mxu0 %v469
        %v611 = vpop.f32.mrf.mxu0
        %v612 = vadd.f32 %v517, %v611
        %613 = vmatmul.f32.gmra.mxu0 %v471
        %v614 = vpop.f32.mrf.mxu0
        %v615 = vadd.f32 %v517, %v614
        %616 = vmatmul.f32.gmra.mxu0 %v473
        %v617 = vpop.f32.mrf.mxu0
        %v618 = vadd.f32 %v517, %v617
        %619 = vmatmul.f32.gmra.mxu0 %v475
        %v620 = vpop.f32.mrf.mxu0
        %v621 = vadd.f32 %v517, %v620
        %622 = vmatmul.f32.gmra.mxu0 %v477
        %v623 = vpop.f32.mrf.mxu0
        %v624 = vadd.f32 %v517, %v623
        %625 = vmatmul.f32.gmra.mxu0 %v479
        %v626 = vpop.f32.mrf.mxu0
        %v627 = vadd.f32 %v517, %v626
        %628 = vmatmul.f32.gmra.mxu0 %v481
        %v629 = vpop.f32.mrf.mxu0
        %v630 = vadd.f32 %v517, %v629
        %631 = vdwg.mxu0
        %632 = vmatpush.msra.mxu0 %v514
        %633 = vmatpush.msra.mxu0 %v513
        %634 = vmatpush.msra.mxu0 %v512
        %635 = vmatpush.msra.mxu0 %v511
        %636 = vmatpush.msra.mxu0 %v510
        %637 = vmatpush.msra.mxu0 %v509
        %638 = vmatpush.msra.mxu0 %v508
        %639 = vmatpush.msra.mxu0 %v507
        %640 = vmatpush.msra.mxu0 %v506
        %641 = vmatpush.msra.mxu0 %v505
        %642 = vmatpush.msra.mxu0 %v504
        %643 = vmatpush.msra.mxu0 %v503
        %644 = vmatpush.msra.mxu0 %v502
        %645 = vmatpush.msra.mxu0 %v501
        %646 = vmatpush.msra.mxu0 %v500
        %647 = vmatpush.msra.mxu0 %v499
        %648 = vmatmul.f32.gmra.mxu0 %v420
        %v649 = vpop.f32.mrf.mxu0
        %v650 = vadd.f32 %v537, %v649
        %651 = vmatmul.f32.gmra.mxu0 %v422
        %v652 = vpop.f32.mrf.mxu0
        %v653 = vadd.f32 %v540, %v652
        %654 = vmatmul.f32.gmra.mxu0 %v424
        %v655 = vpop.f32.mrf.mxu0
        %v656 = vadd.f32 %v543, %v655
        %657 = vmatmul.f32.gmra.mxu0 %v426
        %v658 = vpop.f32.mrf.mxu0
        %v659 = vadd.f32 %v546, %v658
        %660 = vmatmul.f32.gmra.mxu0 %v428
        %v661 = vpop.f32.mrf.mxu0
        %v662 = vadd.f32 %v549, %v661
        %663 = vmatmul.f32.gmra.mxu0 %v430
        %v664 = vpop.f32.mrf.mxu0
        %v665 = vadd.f32 %v552, %v664
        %666 = vmatmul.f32.gmra.mxu0 %v432
        %v667 = vpop.f32.mrf.mxu0
        %v668 = vadd.f32 %v555, %v667
        %669 = vmatmul.f32.gmra.mxu0 %v434
        %v670 = vpop.f32.mrf.mxu0
        %v671 = vadd.f32 %v558, %v670
        %672 = vmatmul.f32.gmra.mxu0 %v436
        %v673 = vpop.f32.mrf.mxu0
        %v674 = vadd.f32 %v561, %v673
        %675 = vmatmul.f32.gmra.mxu0 %v438
        %v676 = vpop.f32.mrf.mxu0
        %v677 = vadd.f32 %v564, %v676
        %678 = vmatmul.f32.gmra.mxu0 %v440
        %v679 = vpop.f32.mrf.mxu0
        %v680 = vadd.f32 %v567, %v679
        %681 = vmatmul.f32.gmra.mxu0 %v442
        %v682 = vpop.f32.mrf.mxu0
        %v683 = vadd.f32 %v570, %v682
        %684 = vmatmul.f32.gmra.mxu0 %v444
        %v685 = vpop.f32.mrf.mxu0
        %v686 = vadd.f32 %v573, %v685
        %687 = vmatmul.f32.gmra.mxu0 %v446
        %v688 = vpop.f32.mrf.mxu0
        %v689 = vadd.f32 %v576, %v688
        %690 = vmatmul.f32.gmra.mxu0 %v448
        %v691 = vpop.f32.mrf.mxu0
        %v692 = vadd.f32 %v579, %v691
        %693 = vmatmul.f32.gmra.mxu0 %v450
        %v694 = vpop.f32.mrf.mxu0
        %v695 = vadd.f32 %v582, %v694
        %696 = vmatmul.f32.gmra.mxu0 %v452
        %v697 = vpop.f32.mrf.mxu0
        %v698 = vadd.f32 %v585, %v697
        %699 = vmatmul.f32.gmra.mxu0 %v454
        %v700 = vpop.f32.mrf.mxu0
        %v701 = vadd.f32 %v588, %v700
        %702 = vmatmul.f32.gmra.mxu0 %v456
        %v703 = vpop.f32.mrf.mxu0
        %v704 = vadd.f32 %v591, %v703
        %705 = vmatmul.f32.gmra.mxu0 %v458
        %v706 = vpop.f32.mrf.mxu0
        %v707 = vadd.f32 %v594, %v706
        %708 = vmatmul.f32.gmra.mxu0 %v460
        %v709 = vpop.f32.mrf.mxu0
        %v710 = vadd.f32 %v597, %v709
        %711 = vmatmul.f32.gmra.mxu0 %v462
        %v712 = vpop.f32.mrf.mxu0
        %v713 = vadd.f32 %v600, %v712
        %714 = vmatmul.f32.gmra.mxu0 %v464
        %v715 = vpop.f32.mrf.mxu0
        %v716 = vadd.f32 %v603, %v715
        %717 = vmatmul.f32.gmra.mxu0 %v466
        %v718 = vpop.f32.mrf.mxu0
        %v719 = vadd.f32 %v606, %v718
        %720 = vmatmul.f32.gmra.mxu0 %v468
        %v721 = vpop.f32.mrf.mxu0
        %v722 = vadd.f32 %v609, %v721
        %723 = vmatmul.f32.gmra.mxu0 %v470
        %v724 = vpop.f32.mrf.mxu0
        %v725 = vadd.f32 %v612, %v724
        %726 = vmatmul.f32.gmra.mxu0 %v472
        %v727 = vpop.f32.mrf.mxu0
        %v728 = vadd.f32 %v615, %v727
        %729 = vmatmul.f32.gmra.mxu0 %v474
        %v730 = vpop.f32.mrf.mxu0
        %v731 = vadd.f32 %v618, %v730
        %732 = vmatmul.f32.gmra.mxu0 %v476
        %v733 = vpop.f32.mrf.mxu0
        %v734 = vadd.f32 %v621, %v733
        %735 = vmatmul.f32.gmra.mxu0 %v478
        %v736 = vpop.f32.mrf.mxu0
        %v737 = vadd.f32 %v624, %v736
        %738 = vmatmul.f32.gmra.mxu0 %v480
        %v739 = vpop.f32.mrf.mxu0
        %v740 = vadd.f32 %v627, %v739
        %741 = vmatmul.f32.gmra.mxu0 %v482
        %v742 = vpop.f32.mrf.mxu0
        %v743 = vadd.f32 %v630, %v742
        %744 = vdwg.mxu0
        %v745 = vxor.u32 %v650, 2147483648
        %v746 = vxor.u32 %v653, 2147483648
        %v747 = vxor.u32 %v656, 2147483648
        %v748 = vxor.u32 %v659, 2147483648
        %v749 = vxor.u32 %v662, 2147483648
        %v750 = vxor.u32 %v665, 2147483648
        %v751 = vxor.u32 %v668, 2147483648
        %v752 = vxor.u32 %v671, 2147483648
        %v753 = vxor.u32 %v674, 2147483648
        %v754 = vxor.u32 %v677, 2147483648
        %v755 = vxor.u32 %v680, 2147483648
        %v756 = vxor.u32 %v683, 2147483648
        %v757 = vxor.u32 %v686, 2147483648
        %v758 = vxor.u32 %v689, 2147483648
        %v759 = vxor.u32 %v692, 2147483648
        %v760 = vxor.u32 %v695, 2147483648
        %v761 = vxor.u32 %v698, 2147483648
        %v762 = vxor.u32 %v701, 2147483648
        %v763 = vxor.u32 %v704, 2147483648
        %v764 = vxor.u32 %v707, 2147483648
        %v765 = vxor.u32 %v710, 2147483648
        %v766 = vxor.u32 %v713, 2147483648
        %v767 = vxor.u32 %v716, 2147483648
        %v768 = vxor.u32 %v719, 2147483648
        %v769 = vxor.u32 %v722, 2147483648
        %v770 = vxor.u32 %v725, 2147483648
        %v771 = vxor.u32 %v728, 2147483648
        %v772 = vxor.u32 %v731, 2147483648
        %v773 = vxor.u32 %v734, 2147483648
        %v774 = vxor.u32 %v737, 2147483648
        %v775 = vxor.u32 %v740, 2147483648
        %v776 = vxor.u32 %v743, 2147483648
        %v777 = vmul.f32 %v745, 1.442695
        %v778 = vpow.pop %v777
        %v779 = vmul.f32 %v746, 1.442695
        %v780 = vpow.pop %v779
        %v781 = vmul.f32 %v747, 1.442695
        %v782 = vpow.pop %v781
        %v783 = vmul.f32 %v748, 1.442695
        %v784 = vpow.pop %v783
        %v785 = vmul.f32 %v749, 1.442695
        %v786 = vpow.pop %v785
        %v787 = vmul.f32 %v750, 1.442695
        %v788 = vpow.pop %v787
        %v789 = vmul.f32 %v751, 1.442695
        %v790 = vpow.pop %v789
        %v791 = vmul.f32 %v752, 1.442695
        %v792 = vpow.pop %v791
        %v793 = vmul.f32 %v753, 1.442695
        %v794 = vpow.pop %v793
        %v795 = vmul.f32 %v754, 1.442695
        %v796 = vpow.pop %v795
        %v797 = vmul.f32 %v755, 1.442695
        %v798 = vpow.pop %v797
        %v799 = vmul.f32 %v756, 1.442695
        %v800 = vpow.pop %v799
        %v801 = vmul.f32 %v757, 1.442695
        %v802 = vpow.pop %v801
        %v803 = vmul.f32 %v758, 1.442695
        %v804 = vpow.pop %v803
        %v805 = vmul.f32 %v759, 1.442695
        %v806 = vpow.pop %v805
        %v807 = vmul.f32 %v760, 1.442695
        %v808 = vpow.pop %v807
        %v809 = vmul.f32 %v761, 1.442695
        %v810 = vpow.pop %v809
        %v811 = vmul.f32 %v762, 1.442695
        %v812 = vpow.pop %v811
        %v813 = vmul.f32 %v763, 1.442695
        %v814 = vpow.pop %v813
        %v815 = vmul.f32 %v764, 1.442695
        %v816 = vpow.pop %v815
        %v817 = vmul.f32 %v765, 1.442695
        %v818 = vpow.pop %v817
        %v819 = vmul.f32 %v766, 1.442695
        %v820 = vpow.pop %v819
        %v821 = vmul.f32 %v767, 1.442695
        %v822 = vpow.pop %v821
        %v823 = vmul.f32 %v768, 1.442695
        %v824 = vpow.pop %v823
        %v825 = vmul.f32 %v769, 1.442695
        %v826 = vpow.pop %v825
        %v827 = vmul.f32 %v770, 1.442695
        %v828 = vpow.pop %v827
        %v829 = vmul.f32 %v771, 1.442695
        %v830 = vpow.pop %v829
        %v831 = vmul.f32 %v772, 1.442695
        %v832 = vpow.pop %v831
        %v833 = vmul.f32 %v773, 1.442695
        %v834 = vpow.pop %v833
        %v835 = vmul.f32 %v774, 1.442695
        %v836 = vpow.pop %v835
        %v837 = vmul.f32 %v775, 1.442695
        %v838 = vpow.pop %v837
        %v839 = vmul.f32 %v776, 1.442695
        %v840 = vpow.pop %v839
        %v841 = vadd.f32 %v778, 1.0
        %v842 = vadd.f32 %v780, 1.0
        %v843 = vadd.f32 %v782, 1.0
        %v844 = vadd.f32 %v784, 1.0
        %v845 = vadd.f32 %v786, 1.0
        %v846 = vadd.f32 %v788, 1.0
        %v847 = vadd.f32 %v790, 1.0
        %v848 = vadd.f32 %v792, 1.0
        %v849 = vadd.f32 %v794, 1.0
        %v850 = vadd.f32 %v796, 1.0
        %v851 = vadd.f32 %v798, 1.0
        %v852 = vadd.f32 %v800, 1.0
        %v853 = vadd.f32 %v802, 1.0
        %v854 = vadd.f32 %v804, 1.0
        %v855 = vadd.f32 %v806, 1.0
        %v856 = vadd.f32 %v808, 1.0
        %v857 = vadd.f32 %v810, 1.0
        %v858 = vadd.f32 %v812, 1.0
        %v859 = vadd.f32 %v814, 1.0
        %v860 = vadd.f32 %v816, 1.0
        %v861 = vadd.f32 %v818, 1.0
        %v862 = vadd.f32 %v820, 1.0
        %v863 = vadd.f32 %v822, 1.0
        %v864 = vadd.f32 %v824, 1.0
        %v865 = vadd.f32 %v826, 1.0
        %v866 = vadd.f32 %v828, 1.0
        %v867 = vadd.f32 %v830, 1.0
        %v868 = vadd.f32 %v832, 1.0
        %v869 = vadd.f32 %v834, 1.0
        %v870 = vadd.f32 %v836, 1.0
        %v871 = vadd.f32 %v838, 1.0
        %v872 = vadd.f32 %v840, 1.0
        %v873 = vrcp.pop %v841
        %v874 = vmul.f32 %v841, %v873
        %v875 = vsub.f32 1.0, %v874
        %v876 = vmul.f32 %v873, %v875
        %v877 = vadd.f32 %v873, %v876
        %vm878 = vweird.f32 %v841
        %vm879 = vweird.f32 %v873
        %vm880 = vmor %vm878, %vm879
        %v881 = vsel %vm880, %v873, %v877
        %v882 = vand.u32 2147483647, %v841
        %vm883 = vcmp.eq.f32.partialorder %v882, 8.507059e+37
        %v884 = vand.u32 %v841, 2147483648
        %v885 = vor.u32 1.1754944e-38, %v884
        %v886 = vsel %vm883, %v885, %v881
        %v887 = vmul.f32 1.0, %v886
        %v888 = vrcp.pop %v842
        %v889 = vmul.f32 %v842, %v888
        %v890 = vsub.f32 1.0, %v889
        %v891 = vmul.f32 %v888, %v890
        %v892 = vadd.f32 %v888, %v891
        %vm893 = vweird.f32 %v842
        %vm894 = vweird.f32 %v888
        %vm895 = vmor %vm893, %vm894
        %v896 = vsel %vm895, %v888, %v892
        %v897 = vand.u32 2147483647, %v842
        %vm898 = vcmp.eq.f32.partialorder %v897, 8.507059e+37
        %v899 = vand.u32 %v842, 2147483648
        %v900 = vor.u32 1.1754944e-38, %v899
        %v901 = vsel %vm898, %v900, %v896
        %v902 = vmul.f32 1.0, %v901
        %v903 = vrcp.pop %v843
        %v904 = vmul.f32 %v843, %v903
        %v905 = vsub.f32 1.0, %v904
        %v906 = vmul.f32 %v903, %v905
        %v907 = vadd.f32 %v903, %v906
        %vm908 = vweird.f32 %v843
        %vm909 = vweird.f32 %v903
        %vm910 = vmor %vm908, %vm909
        %v911 = vsel %vm910, %v903, %v907
        %v912 = vand.u32 2147483647, %v843
        %vm913 = vcmp.eq.f32.partialorder %v912, 8.507059e+37
        %v914 = vand.u32 %v843, 2147483648
        %v915 = vor.u32 1.1754944e-38, %v914
        %v916 = vsel %vm913, %v915, %v911
        %v917 = vmul.f32 1.0, %v916
        %v918 = vrcp.pop %v844
        %v919 = vmul.f32 %v844, %v918
        %v920 = vsub.f32 1.0, %v919
        %v921 = vmul.f32 %v918, %v920
        %v922 = vadd.f32 %v918, %v921
        %vm923 = vweird.f32 %v844
        %vm924 = vweird.f32 %v918
        %vm925 = vmor %vm923, %vm924
        %v926 = vsel %vm925, %v918, %v922
        %v927 = vand.u32 2147483647, %v844
        %vm928 = vcmp.eq.f32.partialorder %v927, 8.507059e+37
        %v929 = vand.u32 %v844, 2147483648
        %v930 = vor.u32 1.1754944e-38, %v929
        %v931 = vsel %vm928, %v930, %v926
        %v932 = vmul.f32 1.0, %v931
        %v933 = vrcp.pop %v845
        %v934 = vmul.f32 %v845, %v933
        %v935 = vsub.f32 1.0, %v934
        %v936 = vmul.f32 %v933, %v935
        %v937 = vadd.f32 %v933, %v936
        %vm938 = vweird.f32 %v845
        %vm939 = vweird.f32 %v933
        %vm940 = vmor %vm938, %vm939
        %v941 = vsel %vm940, %v933, %v937
        %v942 = vand.u32 2147483647, %v845
        %vm943 = vcmp.eq.f32.partialorder %v942, 8.507059e+37
        %v944 = vand.u32 %v845, 2147483648
        %v945 = vor.u32 1.1754944e-38, %v944
        %v946 = vsel %vm943, %v945, %v941
        %v947 = vmul.f32 1.0, %v946
        %v948 = vrcp.pop %v846
        %v949 = vmul.f32 %v846, %v948
        %v950 = vsub.f32 1.0, %v949
        %v951 = vmul.f32 %v948, %v950
        %v952 = vadd.f32 %v948, %v951
        %vm953 = vweird.f32 %v846
        %vm954 = vweird.f32 %v948
        %vm955 = vmor %vm953, %vm954
        %v956 = vsel %vm955, %v948, %v952
        %v957 = vand.u32 2147483647, %v846
        %vm958 = vcmp.eq.f32.partialorder %v957, 8.507059e+37
        %v959 = vand.u32 %v846, 2147483648
        %v960 = vor.u32 1.1754944e-38, %v959
        %v961 = vsel %vm958, %v960, %v956
        %v962 = vmul.f32 1.0, %v961
        %v963 = vrcp.pop %v847
        %v964 = vmul.f32 %v847, %v963
        %v965 = vsub.f32 1.0, %v964
        %v966 = vmul.f32 %v963, %v965
        %v967 = vadd.f32 %v963, %v966
        %vm968 = vweird.f32 %v847
        %vm969 = vweird.f32 %v963
        %vm970 = vmor %vm968, %vm969
        %v971 = vsel %vm970, %v963, %v967
        %v972 = vand.u32 2147483647, %v847
        %vm973 = vcmp.eq.f32.partialorder %v972, 8.507059e+37
        %v974 = vand.u32 %v847, 2147483648
        %v975 = vor.u32 1.1754944e-38, %v974
        %v976 = vsel %vm973, %v975, %v971
        %v977 = vmul.f32 1.0, %v976
        %v978 = vrcp.pop %v848
        %v979 = vmul.f32 %v848, %v978
        %v980 = vsub.f32 1.0, %v979
        %v981 = vmul.f32 %v978, %v980
        %v982 = vadd.f32 %v978, %v981
        %vm983 = vweird.f32 %v848
        %vm984 = vweird.f32 %v978
        %vm985 = vmor %vm983, %vm984
        %v986 = vsel %vm985, %v978, %v982
        %v987 = vand.u32 2147483647, %v848
        %vm988 = vcmp.eq.f32.partialorder %v987, 8.507059e+37
        %v989 = vand.u32 %v848, 2147483648
        %v990 = vor.u32 1.1754944e-38, %v989
        %v991 = vsel %vm988, %v990, %v986
        %v992 = vmul.f32 1.0, %v991
        %v993 = vrcp.pop %v849
        %v994 = vmul.f32 %v849, %v993
        %v995 = vsub.f32 1.0, %v994
        %v996 = vmul.f32 %v993, %v995
        %v997 = vadd.f32 %v993, %v996
        %vm998 = vweird.f32 %v849
        %vm999 = vweird.f32 %v993
        %vm1000 = vmor %vm998, %vm999
        %v1001 = vsel %vm1000, %v993, %v997
        %v1002 = vand.u32 2147483647, %v849
        %vm1003 = vcmp.eq.f32.partialorder %v1002, 8.507059e+37
        %v1004 = vand.u32 %v849, 2147483648
        %v1005 = vor.u32 1.1754944e-38, %v1004
        %v1006 = vsel %vm1003, %v1005, %v1001
        %v1007 = vmul.f32 1.0, %v1006
        %v1008 = vrcp.pop %v850
        %v1009 = vmul.f32 %v850, %v1008
        %v1010 = vsub.f32 1.0, %v1009
        %v1011 = vmul.f32 %v1008, %v1010
        %v1012 = vadd.f32 %v1008, %v1011
        %vm1013 = vweird.f32 %v850
        %vm1014 = vweird.f32 %v1008
        %vm1015 = vmor %vm1013, %vm1014
        %v1016 = vsel %vm1015, %v1008, %v1012
        %v1017 = vand.u32 2147483647, %v850
        %vm1018 = vcmp.eq.f32.partialorder %v1017, 8.507059e+37
        %v1019 = vand.u32 %v850, 2147483648
        %v1020 = vor.u32 1.1754944e-38, %v1019
        %v1021 = vsel %vm1018, %v1020, %v1016
        %v1022 = vmul.f32 1.0, %v1021
        %v1023 = vrcp.pop %v851
        %v1024 = vmul.f32 %v851, %v1023
        %v1025 = vsub.f32 1.0, %v1024
        %v1026 = vmul.f32 %v1023, %v1025
        %v1027 = vadd.f32 %v1023, %v1026
        %vm1028 = vweird.f32 %v851
        %vm1029 = vweird.f32 %v1023
        %vm1030 = vmor %vm1028, %vm1029
        %v1031 = vsel %vm1030, %v1023, %v1027
        %v1032 = vand.u32 2147483647, %v851
        %vm1033 = vcmp.eq.f32.partialorder %v1032, 8.507059e+37
        %v1034 = vand.u32 %v851, 2147483648
        %v1035 = vor.u32 1.1754944e-38, %v1034
        %v1036 = vsel %vm1033, %v1035, %v1031
        %v1037 = vmul.f32 1.0, %v1036
        %v1038 = vrcp.pop %v852
        %v1039 = vmul.f32 %v852, %v1038
        %v1040 = vsub.f32 1.0, %v1039
        %v1041 = vmul.f32 %v1038, %v1040
        %v1042 = vadd.f32 %v1038, %v1041
        %vm1043 = vweird.f32 %v852
        %vm1044 = vweird.f32 %v1038
        %vm1045 = vmor %vm1043, %vm1044
        %v1046 = vsel %vm1045, %v1038, %v1042
        %v1047 = vand.u32 2147483647, %v852
        %vm1048 = vcmp.eq.f32.partialorder %v1047, 8.507059e+37
        %v1049 = vand.u32 %v852, 2147483648
        %v1050 = vor.u32 1.1754944e-38, %v1049
        %v1051 = vsel %vm1048, %v1050, %v1046
        %v1052 = vmul.f32 1.0, %v1051
        %v1053 = vrcp.pop %v853
        %v1054 = vmul.f32 %v853, %v1053
        %v1055 = vsub.f32 1.0, %v1054
        %v1056 = vmul.f32 %v1053, %v1055
        %v1057 = vadd.f32 %v1053, %v1056
        %vm1058 = vweird.f32 %v853
        %vm1059 = vweird.f32 %v1053
        %vm1060 = vmor %vm1058, %vm1059
        %v1061 = vsel %vm1060, %v1053, %v1057
        %v1062 = vand.u32 2147483647, %v853
        %vm1063 = vcmp.eq.f32.partialorder %v1062, 8.507059e+37
        %v1064 = vand.u32 %v853, 2147483648
        %v1065 = vor.u32 1.1754944e-38, %v1064
        %v1066 = vsel %vm1063, %v1065, %v1061
        %v1067 = vmul.f32 1.0, %v1066
        %v1068 = vrcp.pop %v854
        %v1069 = vmul.f32 %v854, %v1068
        %v1070 = vsub.f32 1.0, %v1069
        %v1071 = vmul.f32 %v1068, %v1070
        %v1072 = vadd.f32 %v1068, %v1071
        %vm1073 = vweird.f32 %v854
        %vm1074 = vweird.f32 %v1068
        %vm1075 = vmor %vm1073, %vm1074
        %v1076 = vsel %vm1075, %v1068, %v1072
        %v1077 = vand.u32 2147483647, %v854
        %vm1078 = vcmp.eq.f32.partialorder %v1077, 8.507059e+37
        %v1079 = vand.u32 %v854, 2147483648
        %v1080 = vor.u32 1.1754944e-38, %v1079
        %v1081 = vsel %vm1078, %v1080, %v1076
        %v1082 = vmul.f32 1.0, %v1081
        %v1083 = vrcp.pop %v855
        %v1084 = vmul.f32 %v855, %v1083
        %v1085 = vsub.f32 1.0, %v1084
        %v1086 = vmul.f32 %v1083, %v1085
        %v1087 = vadd.f32 %v1083, %v1086
        %vm1088 = vweird.f32 %v855
        %vm1089 = vweird.f32 %v1083
        %vm1090 = vmor %vm1088, %vm1089
        %v1091 = vsel %vm1090, %v1083, %v1087
        %v1092 = vand.u32 2147483647, %v855
        %vm1093 = vcmp.eq.f32.partialorder %v1092, 8.507059e+37
        %v1094 = vand.u32 %v855, 2147483648
        %v1095 = vor.u32 1.1754944e-38, %v1094
        %v1096 = vsel %vm1093, %v1095, %v1091
        %v1097 = vmul.f32 1.0, %v1096
        %v1098 = vrcp.pop %v856
        %v1099 = vmul.f32 %v856, %v1098
        %v1100 = vsub.f32 1.0, %v1099
        %v1101 = vmul.f32 %v1098, %v1100
        %v1102 = vadd.f32 %v1098, %v1101
        %vm1103 = vweird.f32 %v856
        %vm1104 = vweird.f32 %v1098
        %vm1105 = vmor %vm1103, %vm1104
        %v1106 = vsel %vm1105, %v1098, %v1102
        %v1107 = vand.u32 2147483647, %v856
        %vm1108 = vcmp.eq.f32.partialorder %v1107, 8.507059e+37
        %v1109 = vand.u32 %v856, 2147483648
        %v1110 = vor.u32 1.1754944e-38, %v1109
        %v1111 = vsel %vm1108, %v1110, %v1106
        %v1112 = vmul.f32 1.0, %v1111
        %v1113 = vrcp.pop %v857
        %v1114 = vmul.f32 %v857, %v1113
        %v1115 = vsub.f32 1.0, %v1114
        %v1116 = vmul.f32 %v1113, %v1115
        %v1117 = vadd.f32 %v1113, %v1116
        %vm1118 = vweird.f32 %v857
        %vm1119 = vweird.f32 %v1113
        %vm1120 = vmor %vm1118, %vm1119
        %v1121 = vsel %vm1120, %v1113, %v1117
        %v1122 = vand.u32 2147483647, %v857
        %vm1123 = vcmp.eq.f32.partialorder %v1122, 8.507059e+37
        %v1124 = vand.u32 %v857, 2147483648
        %v1125 = vor.u32 1.1754944e-38, %v1124
        %v1126 = vsel %vm1123, %v1125, %v1121
        %v1127 = vmul.f32 1.0, %v1126
        %v1128 = vrcp.pop %v858
        %v1129 = vmul.f32 %v858, %v1128
        %v1130 = vsub.f32 1.0, %v1129
        %v1131 = vmul.f32 %v1128, %v1130
        %v1132 = vadd.f32 %v1128, %v1131
        %vm1133 = vweird.f32 %v858
        %vm1134 = vweird.f32 %v1128
        %vm1135 = vmor %vm1133, %vm1134
        %v1136 = vsel %vm1135, %v1128, %v1132
        %v1137 = vand.u32 2147483647, %v858
        %vm1138 = vcmp.eq.f32.partialorder %v1137, 8.507059e+37
        %v1139 = vand.u32 %v858, 2147483648
        %v1140 = vor.u32 1.1754944e-38, %v1139
        %v1141 = vsel %vm1138, %v1140, %v1136
        %v1142 = vmul.f32 1.0, %v1141
        %v1143 = vrcp.pop %v859
        %v1144 = vmul.f32 %v859, %v1143
        %v1145 = vsub.f32 1.0, %v1144
        %v1146 = vmul.f32 %v1143, %v1145
        %v1147 = vadd.f32 %v1143, %v1146
        %vm1148 = vweird.f32 %v859
        %vm1149 = vweird.f32 %v1143
        %vm1150 = vmor %vm1148, %vm1149
        %v1151 = vsel %vm1150, %v1143, %v1147
        %v1152 = vand.u32 2147483647, %v859
        %vm1153 = vcmp.eq.f32.partialorder %v1152, 8.507059e+37
        %v1154 = vand.u32 %v859, 2147483648
        %v1155 = vor.u32 1.1754944e-38, %v1154
        %v1156 = vsel %vm1153, %v1155, %v1151
        %v1157 = vmul.f32 1.0, %v1156
        %v1158 = vrcp.pop %v860
        %v1159 = vmul.f32 %v860, %v1158
        %v1160 = vsub.f32 1.0, %v1159
        %v1161 = vmul.f32 %v1158, %v1160
        %v1162 = vadd.f32 %v1158, %v1161
        %vm1163 = vweird.f32 %v860
        %vm1164 = vweird.f32 %v1158
        %vm1165 = vmor %vm1163, %vm1164
        %v1166 = vsel %vm1165, %v1158, %v1162
        %v1167 = vand.u32 2147483647, %v860
        %vm1168 = vcmp.eq.f32.partialorder %v1167, 8.507059e+37
        %v1169 = vand.u32 %v860, 2147483648
        %v1170 = vor.u32 1.1754944e-38, %v1169
        %v1171 = vsel %vm1168, %v1170, %v1166
        %v1172 = vmul.f32 1.0, %v1171
        %v1173 = vrcp.pop %v861
        %v1174 = vmul.f32 %v861, %v1173
        %v1175 = vsub.f32 1.0, %v1174
        %v1176 = vmul.f32 %v1173, %v1175
        %v1177 = vadd.f32 %v1173, %v1176
        %vm1178 = vweird.f32 %v861
        %vm1179 = vweird.f32 %v1173
        %vm1180 = vmor %vm1178, %vm1179
        %v1181 = vsel %vm1180, %v1173, %v1177
        %v1182 = vand.u32 2147483647, %v861
        %vm1183 = vcmp.eq.f32.partialorder %v1182, 8.507059e+37
        %v1184 = vand.u32 %v861, 2147483648
        %v1185 = vor.u32 1.1754944e-38, %v1184
        %v1186 = vsel %vm1183, %v1185, %v1181
        %v1187 = vmul.f32 1.0, %v1186
        %v1188 = vrcp.pop %v862
        %v1189 = vmul.f32 %v862, %v1188
        %v1190 = vsub.f32 1.0, %v1189
        %v1191 = vmul.f32 %v1188, %v1190
        %v1192 = vadd.f32 %v1188, %v1191
        %vm1193 = vweird.f32 %v862
        %vm1194 = vweird.f32 %v1188
        %vm1195 = vmor %vm1193, %vm1194
        %v1196 = vsel %vm1195, %v1188, %v1192
        %v1197 = vand.u32 2147483647, %v862
        %vm1198 = vcmp.eq.f32.partialorder %v1197, 8.507059e+37
        %v1199 = vand.u32 %v862, 2147483648
        %v1200 = vor.u32 1.1754944e-38, %v1199
        %v1201 = vsel %vm1198, %v1200, %v1196
        %v1202 = vmul.f32 1.0, %v1201
        %v1203 = vrcp.pop %v863
        %v1204 = vmul.f32 %v863, %v1203
        %v1205 = vsub.f32 1.0, %v1204
        %v1206 = vmul.f32 %v1203, %v1205
        %v1207 = vadd.f32 %v1203, %v1206
        %vm1208 = vweird.f32 %v863
        %vm1209 = vweird.f32 %v1203
        %vm1210 = vmor %vm1208, %vm1209
        %v1211 = vsel %vm1210, %v1203, %v1207
        %v1212 = vand.u32 2147483647, %v863
        %vm1213 = vcmp.eq.f32.partialorder %v1212, 8.507059e+37
        %v1214 = vand.u32 %v863, 2147483648
        %v1215 = vor.u32 1.1754944e-38, %v1214
        %v1216 = vsel %vm1213, %v1215, %v1211
        %v1217 = vmul.f32 1.0, %v1216
        %v1218 = vrcp.pop %v864
        %v1219 = vmul.f32 %v864, %v1218
        %v1220 = vsub.f32 1.0, %v1219
        %v1221 = vmul.f32 %v1218, %v1220
        %v1222 = vadd.f32 %v1218, %v1221
        %vm1223 = vweird.f32 %v864
        %vm1224 = vweird.f32 %v1218
        %vm1225 = vmor %vm1223, %vm1224
        %v1226 = vsel %vm1225, %v1218, %v1222
        %v1227 = vand.u32 2147483647, %v864
        %vm1228 = vcmp.eq.f32.partialorder %v1227, 8.507059e+37
        %v1229 = vand.u32 %v864, 2147483648
        %v1230 = vor.u32 1.1754944e-38, %v1229
        %v1231 = vsel %vm1228, %v1230, %v1226
        %v1232 = vmul.f32 1.0, %v1231
        %v1233 = vrcp.pop %v865
        %v1234 = vmul.f32 %v865, %v1233
        %v1235 = vsub.f32 1.0, %v1234
        %v1236 = vmul.f32 %v1233, %v1235
        %v1237 = vadd.f32 %v1233, %v1236
        %vm1238 = vweird.f32 %v865
        %vm1239 = vweird.f32 %v1233
        %vm1240 = vmor %vm1238, %vm1239
        %v1241 = vsel %vm1240, %v1233, %v1237
        %v1242 = vand.u32 2147483647, %v865
        %vm1243 = vcmp.eq.f32.partialorder %v1242, 8.507059e+37
        %v1244 = vand.u32 %v865, 2147483648
        %v1245 = vor.u32 1.1754944e-38, %v1244
        %v1246 = vsel %vm1243, %v1245, %v1241
        %v1247 = vmul.f32 1.0, %v1246
        %v1248 = vrcp.pop %v866
        %v1249 = vmul.f32 %v866, %v1248
        %v1250 = vsub.f32 1.0, %v1249
        %v1251 = vmul.f32 %v1248, %v1250
        %v1252 = vadd.f32 %v1248, %v1251
        %vm1253 = vweird.f32 %v866
        %vm1254 = vweird.f32 %v1248
        %vm1255 = vmor %vm1253, %vm1254
        %v1256 = vsel %vm1255, %v1248, %v1252
        %v1257 = vand.u32 2147483647, %v866
        %vm1258 = vcmp.eq.f32.partialorder %v1257, 8.507059e+37
        %v1259 = vand.u32 %v866, 2147483648
        %v1260 = vor.u32 1.1754944e-38, %v1259
        %v1261 = vsel %vm1258, %v1260, %v1256
        %v1262 = vmul.f32 1.0, %v1261
        %v1263 = vrcp.pop %v867
        %v1264 = vmul.f32 %v867, %v1263
        %v1265 = vsub.f32 1.0, %v1264
        %v1266 = vmul.f32 %v1263, %v1265
        %v1267 = vadd.f32 %v1263, %v1266
        %vm1268 = vweird.f32 %v867
        %vm1269 = vweird.f32 %v1263
        %vm1270 = vmor %vm1268, %vm1269
        %v1271 = vsel %vm1270, %v1263, %v1267
        %v1272 = vand.u32 2147483647, %v867
        %vm1273 = vcmp.eq.f32.partialorder %v1272, 8.507059e+37
        %v1274 = vand.u32 %v867, 2147483648
        %v1275 = vor.u32 1.1754944e-38, %v1274
        %v1276 = vsel %vm1273, %v1275, %v1271
        %v1277 = vmul.f32 1.0, %v1276
        %v1278 = vrcp.pop %v868
        %v1279 = vmul.f32 %v868, %v1278
        %v1280 = vsub.f32 1.0, %v1279
        %v1281 = vmul.f32 %v1278, %v1280
        %v1282 = vadd.f32 %v1278, %v1281
        %vm1283 = vweird.f32 %v868
        %vm1284 = vweird.f32 %v1278
        %vm1285 = vmor %vm1283, %vm1284
        %v1286 = vsel %vm1285, %v1278, %v1282
        %v1287 = vand.u32 2147483647, %v868
        %vm1288 = vcmp.eq.f32.partialorder %v1287, 8.507059e+37
        %v1289 = vand.u32 %v868, 2147483648
        %v1290 = vor.u32 1.1754944e-38, %v1289
        %v1291 = vsel %vm1288, %v1290, %v1286
        %v1292 = vmul.f32 1.0, %v1291
        %v1293 = vrcp.pop %v869
        %v1294 = vmul.f32 %v869, %v1293
        %v1295 = vsub.f32 1.0, %v1294
        %v1296 = vmul.f32 %v1293, %v1295
        %v1297 = vadd.f32 %v1293, %v1296
        %vm1298 = vweird.f32 %v869
        %vm1299 = vweird.f32 %v1293
        %vm1300 = vmor %vm1298, %vm1299
        %v1301 = vsel %vm1300, %v1293, %v1297
        %v1302 = vand.u32 2147483647, %v869
        %vm1303 = vcmp.eq.f32.partialorder %v1302, 8.507059e+37
        %v1304 = vand.u32 %v869, 2147483648
        %v1305 = vor.u32 1.1754944e-38, %v1304
        %v1306 = vsel %vm1303, %v1305, %v1301
        %v1307 = vmul.f32 1.0, %v1306
        %v1308 = vrcp.pop %v870
        %v1309 = vmul.f32 %v870, %v1308
        %v1310 = vsub.f32 1.0, %v1309
        %v1311 = vmul.f32 %v1308, %v1310
        %v1312 = vadd.f32 %v1308, %v1311
        %vm1313 = vweird.f32 %v870
        %vm1314 = vweird.f32 %v1308
        %vm1315 = vmor %vm1313, %vm1314
        %v1316 = vsel %vm1315, %v1308, %v1312
        %v1317 = vand.u32 2147483647, %v870
        %vm1318 = vcmp.eq.f32.partialorder %v1317, 8.507059e+37
        %v1319 = vand.u32 %v870, 2147483648
        %v1320 = vor.u32 1.1754944e-38, %v1319
        %v1321 = vsel %vm1318, %v1320, %v1316
        %v1322 = vmul.f32 1.0, %v1321
        %v1323 = vrcp.pop %v871
        %v1324 = vmul.f32 %v871, %v1323
        %v1325 = vsub.f32 1.0, %v1324
        %v1326 = vmul.f32 %v1323, %v1325
        %v1327 = vadd.f32 %v1323, %v1326
        %vm1328 = vweird.f32 %v871
        %vm1329 = vweird.f32 %v1323
        %vm1330 = vmor %vm1328, %vm1329
        %v1331 = vsel %vm1330, %v1323, %v1327
        %v1332 = vand.u32 2147483647, %v871
        %vm1333 = vcmp.eq.f32.partialorder %v1332, 8.507059e+37
        %v1334 = vand.u32 %v871, 2147483648
        %v1335 = vor.u32 1.1754944e-38, %v1334
        %v1336 = vsel %vm1333, %v1335, %v1331
        %v1337 = vmul.f32 1.0, %v1336
        %v1338 = vrcp.pop %v872
        %v1339 = vmul.f32 %v872, %v1338
        %v1340 = vsub.f32 1.0, %v1339
        %v1341 = vmul.f32 %v1338, %v1340
        %v1342 = vadd.f32 %v1338, %v1341
        %vm1343 = vweird.f32 %v872
        %vm1344 = vweird.f32 %v1338
        %vm1345 = vmor %vm1343, %vm1344
        %v1346 = vsel %vm1345, %v1338, %v1342
        %v1347 = vand.u32 2147483647, %v872
        %vm1348 = vcmp.eq.f32.partialorder %v1347, 8.507059e+37
        %v1349 = vand.u32 %v872, 2147483648
        %v1350 = vor.u32 1.1754944e-38, %v1349
        %v1351 = vsel %vm1348, %v1350, %v1346
        %v1352 = vmul.f32 1.0, %v1351
        %v1353 = vld [vmem:[%s363] sm:$0xff]
        %v1354 = vld [vmem:[%s363 + $0x8] sm:$0xff]
        %v1355 = vld [vmem:[%s363 + $0x10] sm:$0xff]
        %v1356 = vld [vmem:[%s363 + $0x18] sm:$0xff]
        %v1357 = vld [vmem:[%s363 + $0x20] sm:$0xff]
        %v1358 = vld [vmem:[%s363 + $0x28] sm:$0xff]
        %v1359 = vld [vmem:[%s363 + $0x30] sm:$0xff]
        %v1360 = vld [vmem:[%s363 + $0x38] sm:$0xff]
        %v1361 = vld [vmem:[%s363 + $0x40] sm:$0xff]
        %v1362 = vld [vmem:[%s363 + $0x48] sm:$0xff]
        %v1363 = vld [vmem:[%s363 + $0x50] sm:$0xff]
        %v1364 = vld [vmem:[%s363 + $0x58] sm:$0xff]
        %v1365 = vld [vmem:[%s363 + $0x60] sm:$0xff]
        %v1366 = vld [vmem:[%s363 + $0x68] sm:$0xff]
        %v1367 = vld [vmem:[%s363 + $0x70] sm:$0xff]
        %v1368 = vld [vmem:[%s363 + $0x78] sm:$0xff]
        %v1369 = vld [vmem:[%s363 + $0x80] sm:$0xff]
        %v1370 = vld [vmem:[%s363 + $0x88] sm:$0xff]
        %v1371 = vld [vmem:[%s363 + $0x90] sm:$0xff]
        %v1372 = vld [vmem:[%s363 + $0x98] sm:$0xff]
        %v1373 = vld [vmem:[%s363 + $0xa0] sm:$0xff]
        %v1374 = vld [vmem:[%s363 + $0xa8] sm:$0xff]
        %v1375 = vld [vmem:[%s363 + $0xb0] sm:$0xff]
        %v1376 = vld [vmem:[%s363 + $0xb8] sm:$0xff]
        %v1377 = vld [vmem:[%s363 + $0xc0] sm:$0xff]
        %v1378 = vld [vmem:[%s363 + $0xc8] sm:$0xff]
        %v1379 = vld [vmem:[%s363 + $0xd0] sm:$0xff]
        %v1380 = vld [vmem:[%s363 + $0xd8] sm:$0xff]
        %v1381 = vld [vmem:[%s363 + $0xe0] sm:$0xff]
        %v1382 = vld [vmem:[%s363 + $0xe8] sm:$0xff]
        %v1383 = vld [vmem:[%s363 + $0xf0] sm:$0xff]
        %v1384 = vld [vmem:[%s363 + $0xf8] sm:$0xff]
        %vm1385 = vcmp.gt.f32.partialorder %v887, %v1353
        %vm1386 = vcmp.gt.f32.partialorder %v902, %v1354
        %vm1387 = vcmp.gt.f32.partialorder %v917, %v1355
        %vm1388 = vcmp.gt.f32.partialorder %v932, %v1356
        %vm1389 = vcmp.gt.f32.partialorder %v947, %v1357
        %vm1390 = vcmp.gt.f32.partialorder %v962, %v1358
        %vm1391 = vcmp.gt.f32.partialorder %v977, %v1359
        %vm1392 = vcmp.gt.f32.partialorder %v992, %v1360
        %vm1393 = vcmp.gt.f32.partialorder %v1007, %v1361
        %vm1394 = vcmp.gt.f32.partialorder %v1022, %v1362
        %vm1395 = vcmp.gt.f32.partialorder %v1037, %v1363
        %vm1396 = vcmp.gt.f32.partialorder %v1052, %v1364
        %vm1397 = vcmp.gt.f32.partialorder %v1067, %v1365
        %vm1398 = vcmp.gt.f32.partialorder %v1082, %v1366
        %vm1399 = vcmp.gt.f32.partialorder %v1097, %v1367
        %vm1400 = vcmp.gt.f32.partialorder %v1112, %v1368
        %vm1401 = vcmp.gt.f32.partialorder %v1127, %v1369
        %vm1402 = vcmp.gt.f32.partialorder %v1142, %v1370
        %vm1403 = vcmp.gt.f32.partialorder %v1157, %v1371
        %vm1404 = vcmp.gt.f32.partialorder %v1172, %v1372
        %vm1405 = vcmp.gt.f32.partialorder %v1187, %v1373
        %vm1406 = vcmp.gt.f32.partialorder %v1202, %v1374
        %vm1407 = vcmp.gt.f32.partialorder %v1217, %v1375
        %vm1408 = vcmp.gt.f32.partialorder %v1232, %v1376
        %vm1409 = vcmp.gt.f32.partialorder %v1247, %v1377
        %vm1410 = vcmp.gt.f32.partialorder %v1262, %v1378
        %vm1411 = vcmp.gt.f32.partialorder %v1277, %v1379
        %vm1412 = vcmp.gt.f32.partialorder %v1292, %v1380
        %vm1413 = vcmp.gt.f32.partialorder %v1307, %v1381
        %vm1414 = vcmp.gt.f32.partialorder %v1322, %v1382
        %vm1415 = vcmp.gt.f32.partialorder %v1337, %v1383
        %vm1416 = vcmp.gt.f32.partialorder %v1352, %v1384
        %v1417 = vsel %vm1385, 1.0, 0.0
        %v1418 = vsel %vm1386, 1.0, 0.0
        %v1419 = vsel %vm1387, 1.0, 0.0
        %v1420 = vsel %vm1388, 1.0, 0.0
        %v1421 = vsel %vm1389, 1.0, 0.0
        %v1422 = vsel %vm1390, 1.0, 0.0
        %v1423 = vsel %vm1391, 1.0, 0.0
        %v1424 = vsel %vm1392, 1.0, 0.0
        %v1425 = vsel %vm1393, 1.0, 0.0
        %v1426 = vsel %vm1394, 1.0, 0.0
        %v1427 = vsel %vm1395, 1.0, 0.0
        %v1428 = vsel %vm1396, 1.0, 0.0
        %v1429 = vsel %vm1397, 1.0, 0.0
        %v1430 = vsel %vm1398, 1.0, 0.0
        %v1431 = vsel %vm1399, 1.0, 0.0
        %v1432 = vsel %vm1400, 1.0, 0.0
        %v1433 = vsel %vm1401, 1.0, 0.0
        %v1434 = vsel %vm1402, 1.0, 0.0
        %v1435 = vsel %vm1403, 1.0, 0.0
        %v1436 = vsel %vm1404, 1.0, 0.0
        %v1437 = vsel %vm1405, 1.0, 0.0
        %v1438 = vsel %vm1406, 1.0, 0.0
        %v1439 = vsel %vm1407, 1.0, 0.0
        %v1440 = vsel %vm1408, 1.0, 0.0
        %v1441 = vsel %vm1409, 1.0, 0.0
        %v1442 = vsel %vm1410, 1.0, 0.0
        %v1443 = vsel %vm1411, 1.0, 0.0
        %v1444 = vsel %vm1412, 1.0, 0.0
        %v1445 = vsel %vm1413, 1.0, 0.0
        %v1446 = vsel %vm1414, 1.0, 0.0
        %v1447 = vsel %vm1415, 1.0, 0.0
        %v1448 = vsel %vm1416, 1.0, 0.0
        %v1449 = vld [vmem:[#allocation7] sm:$0xff]
        %v1450 = vld [vmem:[#allocation7 + $0x8] sm:$0xff]
        %v1451 = vld [vmem:[#allocation7 + $0x10] sm:$0xff]
        %v1452 = vld [vmem:[#allocation7 + $0x18] sm:$0xff]
        %v1453 = vld [vmem:[#allocation7 + $0x20] sm:$0xff]
        %v1454 = vld [vmem:[#allocation7 + $0x28] sm:$0xff]
        %v1455 = vld [vmem:[#allocation7 + $0x30] sm:$0xff]
        %v1456 = vld [vmem:[#allocation7 + $0x38] sm:$0xff]
        %v1457 = vld [vmem:[#allocation7 + $0x40] sm:$0xff]
        %v1458 = vld [vmem:[#allocation7 + $0x48] sm:$0xff]
        %v1459 = vld [vmem:[#allocation7 + $0x50] sm:$0xff]
        %v1460 = vld [vmem:[#allocation7 + $0x58] sm:$0xff]
        %v1461 = vld [vmem:[#allocation7 + $0x60] sm:$0xff]
        %v1462 = vld [vmem:[#allocation7 + $0x68] sm:$0xff]
        %v1463 = vld [vmem:[#allocation7 + $0x70] sm:$0xff]
        %v1464 = vld [vmem:[#allocation7 + $0x78] sm:$0xff]
        %v1465 = vld [vmem:[#allocation7 + $0x80] sm:$0xff]
        %v1466 = vld [vmem:[#allocation7 + $0x88] sm:$0xff]
        %v1467 = vld [vmem:[#allocation7 + $0x90] sm:$0xff]
        %v1468 = vld [vmem:[#allocation7 + $0x98] sm:$0xff]
        %v1469 = vld [vmem:[#allocation7 + $0xa0] sm:$0xff]
        %v1470 = vld [vmem:[#allocation7 + $0xa8] sm:$0xff]
        %v1471 = vld [vmem:[#allocation7 + $0xb0] sm:$0xff]
        %v1472 = vld [vmem:[#allocation7 + $0xb8] sm:$0xff]
        %v1473 = vld [vmem:[#allocation7 + $0xc0] sm:$0xff]
        %v1474 = vld [vmem:[#allocation7 + $0xc8] sm:$0xff]
        %v1475 = vld [vmem:[#allocation7 + $0xd0] sm:$0xff]
        %v1476 = vld [vmem:[#allocation7 + $0xd8] sm:$0xff]
        %v1477 = vld [vmem:[#allocation7 + $0xe0] sm:$0xff]
        %v1478 = vld [vmem:[#allocation7 + $0xe8] sm:$0xff]
        %v1479 = vld [vmem:[#allocation7 + $0xf0] sm:$0xff]
        %v1480 = vld [vmem:[#allocation7 + $0xf8] sm:$0xff]
        %v1481 = vld [vmem:[%s4] sm:$0x3]
        %v1483 = vperm.slane %v1481, 0
        %v1484 = vperm.slane %v1481, 1
        %1487 = vmatpush.msra.mxu0 %v1479
        %1488 = vmatpush.msra.mxu0 %v1477
        %1489 = vmatpush.msra.mxu0 %v1475
        %1490 = vmatpush.msra.mxu0 %v1473
        %1491 = vmatpush.msra.mxu0 %v1471
        %1492 = vmatpush.msra.mxu0 %v1469
        %1493 = vmatpush.msra.mxu0 %v1467
        %1494 = vmatpush.msra.mxu0 %v1465
        %1495 = vmatpush.msra.mxu0 %v1463
        %1496 = vmatpush.msra.mxu0 %v1461
        %1497 = vmatpush.msra.mxu0 %v1459
        %1498 = vmatpush.msra.mxu0 %v1457
        %1499 = vmatpush.msra.mxu0 %v1455
        %1500 = vmatpush.msra.mxu0 %v1453
        %1501 = vmatpush.msra.mxu0 %v1451
        %1502 = vmatpush.msra.mxu0 %v1449
        %1503 = vmatmul.f32.gmra.mxu0 %v1417
        %v1504 = vpop.f32.mrf.mxu0
        %v1505 = vadd.f32 %v1483, %v1504
        %1506 = vmatmul.f32.gmra.mxu0 %v1418
        %v1507 = vpop.f32.mrf.mxu0
        %v1508 = vadd.f32 %v1483, %v1507
        %1509 = vmatmul.f32.gmra.mxu0 %v1419
        %v1510 = vpop.f32.mrf.mxu0
        %v1511 = vadd.f32 %v1483, %v1510
        %1512 = vmatmul.f32.gmra.mxu0 %v1420
        %v1513 = vpop.f32.mrf.mxu0
        %v1514 = vadd.f32 %v1483, %v1513
        %1515 = vmatmul.f32.gmra.mxu0 %v1421
        %v1516 = vpop.f32.mrf.mxu0
        %v1517 = vadd.f32 %v1483, %v1516
        %1518 = vmatmul.f32.gmra.mxu0 %v1422
        %v1519 = vpop.f32.mrf.mxu0
        %v1520 = vadd.f32 %v1483, %v1519
        %1521 = vmatmul.f32.gmra.mxu0 %v1423
        %v1522 = vpop.f32.mrf.mxu0
        %v1523 = vadd.f32 %v1483, %v1522
        %1524 = vmatmul.f32.gmra.mxu0 %v1424
        %v1525 = vpop.f32.mrf.mxu0
        %v1526 = vadd.f32 %v1483, %v1525
        %1527 = vmatmul.f32.gmra.mxu0 %v1425
        %v1528 = vpop.f32.mrf.mxu0
        %v1529 = vadd.f32 %v1483, %v1528
        %1530 = vmatmul.f32.gmra.mxu0 %v1426
        %v1531 = vpop.f32.mrf.mxu0
        %v1532 = vadd.f32 %v1483, %v1531
        %1533 = vmatmul.f32.gmra.mxu0 %v1427
        %v1534 = vpop.f32.mrf.mxu0
        %v1535 = vadd.f32 %v1483, %v1534
        %1536 = vmatmul.f32.gmra.mxu0 %v1428
        %v1537 = vpop.f32.mrf.mxu0
        %v1538 = vadd.f32 %v1483, %v1537
        %1539 = vmatmul.f32.gmra.mxu0 %v1429
        %v1540 = vpop.f32.mrf.mxu0
        %v1541 = vadd.f32 %v1483, %v1540
        %1542 = vmatmul.f32.gmra.mxu0 %v1430
        %v1543 = vpop.f32.mrf.mxu0
        %v1544 = vadd.f32 %v1483, %v1543
        %1545 = vmatmul.f32.gmra.mxu0 %v1431
        %v1546 = vpop.f32.mrf.mxu0
        %v1547 = vadd.f32 %v1483, %v1546
        %1548 = vmatmul.f32.gmra.mxu0 %v1432
        %v1549 = vpop.f32.mrf.mxu0
        %v1550 = vadd.f32 %v1483, %v1549
        %1551 = vmatmul.f32.gmra.mxu0 %v1433
        %v1552 = vpop.f32.mrf.mxu0
        %v1553 = vadd.f32 %v1483, %v1552
        %1554 = vmatmul.f32.gmra.mxu0 %v1434
        %v1555 = vpop.f32.mrf.mxu0
        %v1556 = vadd.f32 %v1483, %v1555
        %1557 = vmatmul.f32.gmra.mxu0 %v1435
        %v1558 = vpop.f32.mrf.mxu0
        %v1559 = vadd.f32 %v1483, %v1558
        %1560 = vmatmul.f32.gmra.mxu0 %v1436
        %v1561 = vpop.f32.mrf.mxu0
        %v1562 = vadd.f32 %v1483, %v1561
        %1563 = vmatmul.f32.gmra.mxu0 %v1437
        %v1564 = vpop.f32.mrf.mxu0
        %v1565 = vadd.f32 %v1483, %v1564
        %1566 = vmatmul.f32.gmra.mxu0 %v1438
        %v1567 = vpop.f32.mrf.mxu0
        %v1568 = vadd.f32 %v1483, %v1567
        %1569 = vmatmul.f32.gmra.mxu0 %v1439
        %v1570 = vpop.f32.mrf.mxu0
        %v1571 = vadd.f32 %v1483, %v1570
        %1572 = vmatmul.f32.gmra.mxu0 %v1440
        %v1573 = vpop.f32.mrf.mxu0
        %v1574 = vadd.f32 %v1483, %v1573
        %1575 = vmatmul.f32.gmra.mxu0 %v1441
        %v1576 = vpop.f32.mrf.mxu0
        %v1577 = vadd.f32 %v1483, %v1576
        %1578 = vmatmul.f32.gmra.mxu0 %v1442
        %v1579 = vpop.f32.mrf.mxu0
        %v1580 = vadd.f32 %v1483, %v1579
        %1581 = vmatmul.f32.gmra.mxu0 %v1443
        %v1582 = vpop.f32.mrf.mxu0
        %v1583 = vadd.f32 %v1483, %v1582
        %1584 = vmatmul.f32.gmra.mxu0 %v1444
        %v1585 = vpop.f32.mrf.mxu0
        %v1586 = vadd.f32 %v1483, %v1585
        %1587 = vmatmul.f32.gmra.mxu0 %v1445
        %v1588 = vpop.f32.mrf.mxu0
        %v1589 = vadd.f32 %v1483, %v1588
        %1590 = vmatmul.f32.gmra.mxu0 %v1446
        %v1591 = vpop.f32.mrf.mxu0
        %v1592 = vadd.f32 %v1483, %v1591
        %1593 = vmatmul.f32.gmra.mxu0 %v1447
        %v1594 = vpop.f32.mrf.mxu0
        %v1595 = vadd.f32 %v1483, %v1594
        %1596 = vmatmul.f32.gmra.mxu0 %v1448
        %v1597 = vpop.f32.mrf.mxu0
        %v1598 = vadd.f32 %v1483, %v1597
        %1599 = vdwg.mxu0
        %1600 = vmatpush.msra.mxu0 %v1480
        %1601 = vmatpush.msra.mxu0 %v1478
        %1602 = vmatpush.msra.mxu0 %v1476
        %1603 = vmatpush.msra.mxu0 %v1474
        %1604 = vmatpush.msra.mxu0 %v1472
        %1605 = vmatpush.msra.mxu0 %v1470
        %1606 = vmatpush.msra.mxu0 %v1468
        %1607 = vmatpush.msra.mxu0 %v1466
        %1608 = vmatpush.msra.mxu0 %v1464
        %1609 = vmatpush.msra.mxu0 %v1462
        %1610 = vmatpush.msra.mxu0 %v1460
        %1611 = vmatpush.msra.mxu0 %v1458
        %1612 = vmatpush.msra.mxu0 %v1456
        %1613 = vmatpush.msra.mxu0 %v1454
        %1614 = vmatpush.msra.mxu0 %v1452
        %1615 = vmatpush.msra.mxu0 %v1450
        %1616 = vmatmul.f32.gmra.mxu0 %v1417
        %v1617 = vpop.f32.mrf.mxu0
        %v1618 = vadd.f32 %v1484, %v1617
        %1619 = vmatmul.f32.gmra.mxu0 %v1418
        %v1620 = vpop.f32.mrf.mxu0
        %v1621 = vadd.f32 %v1484, %v1620
        %1622 = vmatmul.f32.gmra.mxu0 %v1419
        %v1623 = vpop.f32.mrf.mxu0
        %v1624 = vadd.f32 %v1484, %v1623
        %1625 = vmatmul.f32.gmra.mxu0 %v1420
        %v1626 = vpop.f32.mrf.mxu0
        %v1627 = vadd.f32 %v1484, %v1626
        %1628 = vmatmul.f32.gmra.mxu0 %v1421
        %v1629 = vpop.f32.mrf.mxu0
        %v1630 = vadd.f32 %v1484, %v1629
        %1631 = vmatmul.f32.gmra.mxu0 %v1422
        %v1632 = vpop.f32.mrf.mxu0
        %v1633 = vadd.f32 %v1484, %v1632
        %1634 = vmatmul.f32.gmra.mxu0 %v1423
        %v1635 = vpop.f32.mrf.mxu0
        %v1636 = vadd.f32 %v1484, %v1635
        %1637 = vmatmul.f32.gmra.mxu0 %v1424
        %v1638 = vpop.f32.mrf.mxu0
        %v1639 = vadd.f32 %v1484, %v1638
        %1640 = vmatmul.f32.gmra.mxu0 %v1425
        %v1641 = vpop.f32.mrf.mxu0
        %v1642 = vadd.f32 %v1484, %v1641
        %1643 = vmatmul.f32.gmra.mxu0 %v1426
        %v1644 = vpop.f32.mrf.mxu0
        %v1645 = vadd.f32 %v1484, %v1644
        %1646 = vmatmul.f32.gmra.mxu0 %v1427
        %v1647 = vpop.f32.mrf.mxu0
        %v1648 = vadd.f32 %v1484, %v1647
        %1649 = vmatmul.f32.gmra.mxu0 %v1428
        %v1650 = vpop.f32.mrf.mxu0
        %v1651 = vadd.f32 %v1484, %v1650
        %1652 = vmatmul.f32.gmra.mxu0 %v1429
        %v1653 = vpop.f32.mrf.mxu0
        %v1654 = vadd.f32 %v1484, %v1653
        %1655 = vmatmul.f32.gmra.mxu0 %v1430
        %v1656 = vpop.f32.mrf.mxu0
        %v1657 = vadd.f32 %v1484, %v1656
        %1658 = vmatmul.f32.gmra.mxu0 %v1431
        %v1659 = vpop.f32.mrf.mxu0
        %v1660 = vadd.f32 %v1484, %v1659
        %1661 = vmatmul.f32.gmra.mxu0 %v1432
        %v1662 = vpop.f32.mrf.mxu0
        %v1663 = vadd.f32 %v1484, %v1662
        %1664 = vmatmul.f32.gmra.mxu0 %v1433
        %v1665 = vpop.f32.mrf.mxu0
        %v1666 = vadd.f32 %v1484, %v1665
        %1667 = vmatmul.f32.gmra.mxu0 %v1434
        %v1668 = vpop.f32.mrf.mxu0
        %v1669 = vadd.f32 %v1484, %v1668
        %1670 = vmatmul.f32.gmra.mxu0 %v1435
        %v1671 = vpop.f32.mrf.mxu0
        %v1672 = vadd.f32 %v1484, %v1671
        %1673 = vmatmul.f32.gmra.mxu0 %v1436
        %v1674 = vpop.f32.mrf.mxu0
        %v1675 = vadd.f32 %v1484, %v1674
        %1676 = vmatmul.f32.gmra.mxu0 %v1437
        %v1677 = vpop.f32.mrf.mxu0
        %v1678 = vadd.f32 %v1484, %v1677
        %1679 = vmatmul.f32.gmra.mxu0 %v1438
        %v1680 = vpop.f32.mrf.mxu0
        %v1681 = vadd.f32 %v1484, %v1680
        %1682 = vmatmul.f32.gmra.mxu0 %v1439
        %v1683 = vpop.f32.mrf.mxu0
        %v1684 = vadd.f32 %v1484, %v1683
        %1685 = vmatmul.f32.gmra.mxu0 %v1440
        %v1686 = vpop.f32.mrf.mxu0
        %v1687 = vadd.f32 %v1484, %v1686
        %1688 = vmatmul.f32.gmra.mxu0 %v1441
        %v1689 = vpop.f32.mrf.mxu0
        %v1690 = vadd.f32 %v1484, %v1689
        %1691 = vmatmul.f32.gmra.mxu0 %v1442
        %v1692 = vpop.f32.mrf.mxu0
        %v1693 = vadd.f32 %v1484, %v1692
        %1694 = vmatmul.f32.gmra.mxu0 %v1443
        %v1695 = vpop.f32.mrf.mxu0
        %v1696 = vadd.f32 %v1484, %v1695
        %1697 = vmatmul.f32.gmra.mxu0 %v1444
        %v1698 = vpop.f32.mrf.mxu0
        %v1699 = vadd.f32 %v1484, %v1698
        %1700 = vmatmul.f32.gmra.mxu0 %v1445
        %v1701 = vpop.f32.mrf.mxu0
        %v1702 = vadd.f32 %v1484, %v1701
        %1703 = vmatmul.f32.gmra.mxu0 %v1446
        %v1704 = vpop.f32.mrf.mxu0
        %v1705 = vadd.f32 %v1484, %v1704
        %1706 = vmatmul.f32.gmra.mxu0 %v1447
        %v1707 = vpop.f32.mrf.mxu0
        %v1708 = vadd.f32 %v1484, %v1707
        %1709 = vmatmul.f32.gmra.mxu0 %v1448
        %v1710 = vpop.f32.mrf.mxu0
        %v1711 = vadd.f32 %v1484, %v1710
        %1712 = vdwg.mxu0
        %v1713 = vxor.u32 %v1505, 2147483648
        %v1714 = vxor.u32 %v1618, 2147483648
        %v1715 = vxor.u32 %v1508, 2147483648
        %v1716 = vxor.u32 %v1621, 2147483648
        %v1717 = vxor.u32 %v1511, 2147483648
        %v1718 = vxor.u32 %v1624, 2147483648
        %v1719 = vxor.u32 %v1514, 2147483648
        %v1720 = vxor.u32 %v1627, 2147483648
        %v1721 = vxor.u32 %v1517, 2147483648
        %v1722 = vxor.u32 %v1630, 2147483648
        %v1723 = vxor.u32 %v1520, 2147483648
        %v1724 = vxor.u32 %v1633, 2147483648
        %v1725 = vxor.u32 %v1523, 2147483648
        %v1726 = vxor.u32 %v1636, 2147483648
        %v1727 = vxor.u32 %v1526, 2147483648
        %v1728 = vxor.u32 %v1639, 2147483648
        %v1729 = vxor.u32 %v1529, 2147483648
        %v1730 = vxor.u32 %v1642, 2147483648
        %v1731 = vxor.u32 %v1532, 2147483648
        %v1732 = vxor.u32 %v1645, 2147483648
        %v1733 = vxor.u32 %v1535, 2147483648
        %v1734 = vxor.u32 %v1648, 2147483648
        %v1735 = vxor.u32 %v1538, 2147483648
        %v1736 = vxor.u32 %v1651, 2147483648
        %v1737 = vxor.u32 %v1541, 2147483648
        %v1738 = vxor.u32 %v1654, 2147483648
        %v1739 = vxor.u32 %v1544, 2147483648
        %v1740 = vxor.u32 %v1657, 2147483648
        %v1741 = vxor.u32 %v1547, 2147483648
        %v1742 = vxor.u32 %v1660, 2147483648
        %v1743 = vxor.u32 %v1550, 2147483648
        %v1744 = vxor.u32 %v1663, 2147483648
        %v1745 = vxor.u32 %v1553, 2147483648
        %v1746 = vxor.u32 %v1666, 2147483648
        %v1747 = vxor.u32 %v1556, 2147483648
        %v1748 = vxor.u32 %v1669, 2147483648
        %v1749 = vxor.u32 %v1559, 2147483648
        %v1750 = vxor.u32 %v1672, 2147483648
        %v1751 = vxor.u32 %v1562, 2147483648
        %v1752 = vxor.u32 %v1675, 2147483648
        %v1753 = vxor.u32 %v1565, 2147483648
        %v1754 = vxor.u32 %v1678, 2147483648
        %v1755 = vxor.u32 %v1568, 2147483648
        %v1756 = vxor.u32 %v1681, 2147483648
        %v1757 = vxor.u32 %v1571, 2147483648
        %v1758 = vxor.u32 %v1684, 2147483648
        %v1759 = vxor.u32 %v1574, 2147483648
        %v1760 = vxor.u32 %v1687, 2147483648
        %v1761 = vxor.u32 %v1577, 2147483648
        %v1762 = vxor.u32 %v1690, 2147483648
        %v1763 = vxor.u32 %v1580, 2147483648
        %v1764 = vxor.u32 %v1693, 2147483648
        %v1765 = vxor.u32 %v1583, 2147483648
        %v1766 = vxor.u32 %v1696, 2147483648
        %v1767 = vxor.u32 %v1586, 2147483648
        %v1768 = vxor.u32 %v1699, 2147483648
        %v1769 = vxor.u32 %v1589, 2147483648
        %v1770 = vxor.u32 %v1702, 2147483648
        %v1771 = vxor.u32 %v1592, 2147483648
        %v1772 = vxor.u32 %v1705, 2147483648
        %v1773 = vxor.u32 %v1595, 2147483648
        %v1774 = vxor.u32 %v1708, 2147483648
        %v1775 = vxor.u32 %v1598, 2147483648
        %v1776 = vxor.u32 %v1711, 2147483648
        %v1777 = vmul.f32 %v1713, 1.442695
        %v1778 = vpow.pop %v1777
        %v1779 = vmul.f32 %v1714, 1.442695
        %v1780 = vpow.pop %v1779
        %v1781 = vmul.f32 %v1715, 1.442695
        %v1782 = vpow.pop %v1781
        %v1783 = vmul.f32 %v1716, 1.442695
        %v1784 = vpow.pop %v1783
        %v1785 = vmul.f32 %v1717, 1.442695
        %v1786 = vpow.pop %v1785
        %v1787 = vmul.f32 %v1718, 1.442695
        %v1788 = vpow.pop %v1787
        %v1789 = vmul.f32 %v1719, 1.442695
        %v1790 = vpow.pop %v1789
        %v1791 = vmul.f32 %v1720, 1.442695
        %v1792 = vpow.pop %v1791
        %v1793 = vmul.f32 %v1721, 1.442695
        %v1794 = vpow.pop %v1793
        %v1795 = vmul.f32 %v1722, 1.442695
        %v1796 = vpow.pop %v1795
        %v1797 = vmul.f32 %v1723, 1.442695
        %v1798 = vpow.pop %v1797
        %v1799 = vmul.f32 %v1724, 1.442695
        %v1800 = vpow.pop %v1799
        %v1801 = vmul.f32 %v1725, 1.442695
        %v1802 = vpow.pop %v1801
        %v1803 = vmul.f32 %v1726, 1.442695
        %v1804 = vpow.pop %v1803
        %v1805 = vmul.f32 %v1727, 1.442695
        %v1806 = vpow.pop %v1805
        %v1807 = vmul.f32 %v1728, 1.442695
        %v1808 = vpow.pop %v1807
        %v1809 = vmul.f32 %v1729, 1.442695
        %v1810 = vpow.pop %v1809
        %v1811 = vmul.f32 %v1730, 1.442695
        %v1812 = vpow.pop %v1811
        %v1813 = vmul.f32 %v1731, 1.442695
        %v1814 = vpow.pop %v1813
        %v1815 = vmul.f32 %v1732, 1.442695
        %v1816 = vpow.pop %v1815
        %v1817 = vmul.f32 %v1733, 1.442695
        %v1818 = vpow.pop %v1817
        %v1819 = vmul.f32 %v1734, 1.442695
        %v1820 = vpow.pop %v1819
        %v1821 = vmul.f32 %v1735, 1.442695
        %v1822 = vpow.pop %v1821
        %v1823 = vmul.f32 %v1736, 1.442695
        %v1824 = vpow.pop %v1823
        %v1825 = vmul.f32 %v1737, 1.442695
        %v1826 = vpow.pop %v1825
        %v1827 = vmul.f32 %v1738, 1.442695
        %v1828 = vpow.pop %v1827
        %v1829 = vmul.f32 %v1739, 1.442695
        %v1830 = vpow.pop %v1829
        %v1831 = vmul.f32 %v1740, 1.442695
        %v1832 = vpow.pop %v1831
        %v1833 = vmul.f32 %v1741, 1.442695
        %v1834 = vpow.pop %v1833
        %v1835 = vmul.f32 %v1742, 1.442695
        %v1836 = vpow.pop %v1835
        %v1837 = vmul.f32 %v1743, 1.442695
        %v1838 = vpow.pop %v1837
        %v1839 = vmul.f32 %v1744, 1.442695
        %v1840 = vpow.pop %v1839
        %v1841 = vmul.f32 %v1745, 1.442695
        %v1842 = vpow.pop %v1841
        %v1843 = vmul.f32 %v1746, 1.442695
        %v1844 = vpow.pop %v1843
        %v1845 = vmul.f32 %v1747, 1.442695
        %v1846 = vpow.pop %v1845
        %v1847 = vmul.f32 %v1748, 1.442695
        %v1848 = vpow.pop %v1847
        %v1849 = vmul.f32 %v1749, 1.442695
        %v1850 = vpow.pop %v1849
        %v1851 = vmul.f32 %v1750, 1.442695
        %v1852 = vpow.pop %v1851
        %v1853 = vmul.f32 %v1751, 1.442695
        %v1854 = vpow.pop %v1853
        %v1855 = vmul.f32 %v1752, 1.442695
        %v1856 = vpow.pop %v1855
        %v1857 = vmul.f32 %v1753, 1.442695
        %v1858 = vpow.pop %v1857
        %v1859 = vmul.f32 %v1754, 1.442695
        %v1860 = vpow.pop %v1859
        %v1861 = vmul.f32 %v1755, 1.442695
        %v1862 = vpow.pop %v1861
        %v1863 = vmul.f32 %v1756, 1.442695
        %v1864 = vpow.pop %v1863
        %v1865 = vmul.f32 %v1757, 1.442695
        %v1866 = vpow.pop %v1865
        %v1867 = vmul.f32 %v1758, 1.442695
        %v1868 = vpow.pop %v1867
        %v1869 = vmul.f32 %v1759, 1.442695
        %v1870 = vpow.pop %v1869
        %v1871 = vmul.f32 %v1760, 1.442695
        %v1872 = vpow.pop %v1871
        %v1873 = vmul.f32 %v1761, 1.442695
        %v1874 = vpow.pop %v1873
        %v1875 = vmul.f32 %v1762, 1.442695
        %v1876 = vpow.pop %v1875
        %v1877 = vmul.f32 %v1763, 1.442695
        %v1878 = vpow.pop %v1877
        %v1879 = vmul.f32 %v1764, 1.442695
        %v1880 = vpow.pop %v1879
        %v1881 = vmul.f32 %v1765, 1.442695
        %v1882 = vpow.pop %v1881
        %v1883 = vmul.f32 %v1766, 1.442695
        %v1884 = vpow.pop %v1883
        %v1885 = vmul.f32 %v1767, 1.442695
        %v1886 = vpow.pop %v1885
        %v1887 = vmul.f32 %v1768, 1.442695
        %v1888 = vpow.pop %v1887
        %v1889 = vmul.f32 %v1769, 1.442695
        %v1890 = vpow.pop %v1889
        %v1891 = vmul.f32 %v1770, 1.442695
        %v1892 = vpow.pop %v1891
        %v1893 = vmul.f32 %v1771, 1.442695
        %v1894 = vpow.pop %v1893
        %v1895 = vmul.f32 %v1772, 1.442695
        %v1896 = vpow.pop %v1895
        %v1897 = vmul.f32 %v1773, 1.442695
        %v1898 = vpow.pop %v1897
        %v1899 = vmul.f32 %v1774, 1.442695
        %v1900 = vpow.pop %v1899
        %v1901 = vmul.f32 %v1775, 1.442695
        %v1902 = vpow.pop %v1901
        %v1903 = vmul.f32 %v1776, 1.442695
        %v1904 = vpow.pop %v1903
        %v1905 = vadd.f32 %v1778, 1.0
        %v1906 = vadd.f32 %v1780, 1.0
        %v1907 = vadd.f32 %v1782, 1.0
        %v1908 = vadd.f32 %v1784, 1.0
        %v1909 = vadd.f32 %v1786, 1.0
        %v1910 = vadd.f32 %v1788, 1.0
        %v1911 = vadd.f32 %v1790, 1.0
        %v1912 = vadd.f32 %v1792, 1.0
        %v1913 = vadd.f32 %v1794, 1.0
        %v1914 = vadd.f32 %v1796, 1.0
        %v1915 = vadd.f32 %v1798, 1.0
        %v1916 = vadd.f32 %v1800, 1.0
        %v1917 = vadd.f32 %v1802, 1.0
        %v1918 = vadd.f32 %v1804, 1.0
        %v1919 = vadd.f32 %v1806, 1.0
        %v1920 = vadd.f32 %v1808, 1.0
        %v1921 = vadd.f32 %v1810, 1.0
        %v1922 = vadd.f32 %v1812, 1.0
        %v1923 = vadd.f32 %v1814, 1.0
        %v1924 = vadd.f32 %v1816, 1.0
        %v1925 = vadd.f32 %v1818, 1.0
        %v1926 = vadd.f32 %v1820, 1.0
        %v1927 = vadd.f32 %v1822, 1.0
        %v1928 = vadd.f32 %v1824, 1.0
        %v1929 = vadd.f32 %v1826, 1.0
        %v1930 = vadd.f32 %v1828, 1.0
        %v1931 = vadd.f32 %v1830, 1.0
        %v1932 = vadd.f32 %v1832, 1.0
        %v1933 = vadd.f32 %v1834, 1.0
        %v1934 = vadd.f32 %v1836, 1.0
        %v1935 = vadd.f32 %v1838, 1.0
        %v1936 = vadd.f32 %v1840, 1.0
        %v1937 = vadd.f32 %v1842, 1.0
        %v1938 = vadd.f32 %v1844, 1.0
        %v1939 = vadd.f32 %v1846, 1.0
        %v1940 = vadd.f32 %v1848, 1.0
        %v1941 = vadd.f32 %v1850, 1.0
        %v1942 = vadd.f32 %v1852, 1.0
        %v1943 = vadd.f32 %v1854, 1.0
        %v1944 = vadd.f32 %v1856, 1.0
        %v1945 = vadd.f32 %v1858, 1.0
        %v1946 = vadd.f32 %v1860, 1.0
        %v1947 = vadd.f32 %v1862, 1.0
        %v1948 = vadd.f32 %v1864, 1.0
        %v1949 = vadd.f32 %v1866, 1.0
        %v1950 = vadd.f32 %v1868, 1.0
        %v1951 = vadd.f32 %v1870, 1.0
        %v1952 = vadd.f32 %v1872, 1.0
        %v1953 = vadd.f32 %v1874, 1.0
        %v1954 = vadd.f32 %v1876, 1.0
        %v1955 = vadd.f32 %v1878, 1.0
        %v1956 = vadd.f32 %v1880, 1.0
        %v1957 = vadd.f32 %v1882, 1.0
        %v1958 = vadd.f32 %v1884, 1.0
        %v1959 = vadd.f32 %v1886, 1.0
        %v1960 = vadd.f32 %v1888, 1.0
        %v1961 = vadd.f32 %v1890, 1.0
        %v1962 = vadd.f32 %v1892, 1.0
        %v1963 = vadd.f32 %v1894, 1.0
        %v1964 = vadd.f32 %v1896, 1.0
        %v1965 = vadd.f32 %v1898, 1.0
        %v1966 = vadd.f32 %v1900, 1.0
        %v1967 = vadd.f32 %v1902, 1.0
        %v1968 = vadd.f32 %v1904, 1.0
        %v1969 = vrcp.pop %v1905
        %v1970 = vmul.f32 %v1905, %v1969
        %v1971 = vsub.f32 1.0, %v1970
        %v1972 = vmul.f32 %v1969, %v1971
        %v1973 = vadd.f32 %v1969, %v1972
        %vm1974 = vweird.f32 %v1905
        %vm1975 = vweird.f32 %v1969
        %vm1976 = vmor %vm1974, %vm1975
        %v1977 = vsel %vm1976, %v1969, %v1973
        %v1978 = vand.u32 2147483647, %v1905
        %vm1979 = vcmp.eq.f32.partialorder %v1978, 8.507059e+37
        %v1980 = vand.u32 %v1905, 2147483648
        %v1981 = vor.u32 1.1754944e-38, %v1980
        %v1982 = vsel %vm1979, %v1981, %v1977
        %v1983 = vmul.f32 1.0, %v1982
        %v1984 = vrcp.pop %v1906
        %v1985 = vmul.f32 %v1906, %v1984
        %v1986 = vsub.f32 1.0, %v1985
        %v1987 = vmul.f32 %v1984, %v1986
        %v1988 = vadd.f32 %v1984, %v1987
        %vm1989 = vweird.f32 %v1906
        %vm1990 = vweird.f32 %v1984
        %vm1991 = vmor %vm1989, %vm1990
        %v1992 = vsel %vm1991, %v1984, %v1988
        %v1993 = vand.u32 2147483647, %v1906
        %vm1994 = vcmp.eq.f32.partialorder %v1993, 8.507059e+37
        %v1995 = vand.u32 %v1906, 2147483648
        %v1996 = vor.u32 1.1754944e-38, %v1995
        %v1997 = vsel %vm1994, %v1996, %v1992
        %v1998 = vmul.f32 1.0, %v1997
        %v1999 = vrcp.pop %v1907
        %v2000 = vmul.f32 %v1907, %v1999
        %v2001 = vsub.f32 1.0, %v2000
        %v2002 = vmul.f32 %v1999, %v2001
        %v2003 = vadd.f32 %v1999, %v2002
        %vm2004 = vweird.f32 %v1907
        %vm2005 = vweird.f32 %v1999
        %vm2006 = vmor %vm2004, %vm2005
        %v2007 = vsel %vm2006, %v1999, %v2003
        %v2008 = vand.u32 2147483647, %v1907
        %vm2009 = vcmp.eq.f32.partialorder %v2008, 8.507059e+37
        %v2010 = vand.u32 %v1907, 2147483648
        %v2011 = vor.u32 1.1754944e-38, %v2010
        %v2012 = vsel %vm2009, %v2011, %v2007
        %v2013 = vmul.f32 1.0, %v2012
        %v2014 = vrcp.pop %v1908
        %v2015 = vmul.f32 %v1908, %v2014
        %v2016 = vsub.f32 1.0, %v2015
        %v2017 = vmul.f32 %v2014, %v2016
        %v2018 = vadd.f32 %v2014, %v2017
        %vm2019 = vweird.f32 %v1908
        %vm2020 = vweird.f32 %v2014
        %vm2021 = vmor %vm2019, %vm2020
        %v2022 = vsel %vm2021, %v2014, %v2018
        %v2023 = vand.u32 2147483647, %v1908
        %vm2024 = vcmp.eq.f32.partialorder %v2023, 8.507059e+37
        %v2025 = vand.u32 %v1908, 2147483648
        %v2026 = vor.u32 1.1754944e-38, %v2025
        %v2027 = vsel %vm2024, %v2026, %v2022
        %v2028 = vmul.f32 1.0, %v2027
        %v2029 = vrcp.pop %v1909
        %v2030 = vmul.f32 %v1909, %v2029
        %v2031 = vsub.f32 1.0, %v2030
        %v2032 = vmul.f32 %v2029, %v2031
        %v2033 = vadd.f32 %v2029, %v2032
        %vm2034 = vweird.f32 %v1909
        %vm2035 = vweird.f32 %v2029
        %vm2036 = vmor %vm2034, %vm2035
        %v2037 = vsel %vm2036, %v2029, %v2033
        %v2038 = vand.u32 2147483647, %v1909
        %vm2039 = vcmp.eq.f32.partialorder %v2038, 8.507059e+37
        %v2040 = vand.u32 %v1909, 2147483648
        %v2041 = vor.u32 1.1754944e-38, %v2040
        %v2042 = vsel %vm2039, %v2041, %v2037
        %v2043 = vmul.f32 1.0, %v2042
        %v2044 = vrcp.pop %v1910
        %v2045 = vmul.f32 %v1910, %v2044
        %v2046 = vsub.f32 1.0, %v2045
        %v2047 = vmul.f32 %v2044, %v2046
        %v2048 = vadd.f32 %v2044, %v2047
        %vm2049 = vweird.f32 %v1910
        %vm2050 = vweird.f32 %v2044
        %vm2051 = vmor %vm2049, %vm2050
        %v2052 = vsel %vm2051, %v2044, %v2048
        %v2053 = vand.u32 2147483647, %v1910
        %vm2054 = vcmp.eq.f32.partialorder %v2053, 8.507059e+37
        %v2055 = vand.u32 %v1910, 2147483648
        %v2056 = vor.u32 1.1754944e-38, %v2055
        %v2057 = vsel %vm2054, %v2056, %v2052
        %v2058 = vmul.f32 1.0, %v2057
        %v2059 = vrcp.pop %v1911
        %v2060 = vmul.f32 %v1911, %v2059
        %v2061 = vsub.f32 1.0, %v2060
        %v2062 = vmul.f32 %v2059, %v2061
        %v2063 = vadd.f32 %v2059, %v2062
        %vm2064 = vweird.f32 %v1911
        %vm2065 = vweird.f32 %v2059
        %vm2066 = vmor %vm2064, %vm2065
        %v2067 = vsel %vm2066, %v2059, %v2063
        %v2068 = vand.u32 2147483647, %v1911
        %vm2069 = vcmp.eq.f32.partialorder %v2068, 8.507059e+37
        %v2070 = vand.u32 %v1911, 2147483648
        %v2071 = vor.u32 1.1754944e-38, %v2070
        %v2072 = vsel %vm2069, %v2071, %v2067
        %v2073 = vmul.f32 1.0, %v2072
        %v2074 = vrcp.pop %v1912
        %v2075 = vmul.f32 %v1912, %v2074
        %v2076 = vsub.f32 1.0, %v2075
        %v2077 = vmul.f32 %v2074, %v2076
        %v2078 = vadd.f32 %v2074, %v2077
        %vm2079 = vweird.f32 %v1912
        %vm2080 = vweird.f32 %v2074
        %vm2081 = vmor %vm2079, %vm2080
        %v2082 = vsel %vm2081, %v2074, %v2078
        %v2083 = vand.u32 2147483647, %v1912
        %vm2084 = vcmp.eq.f32.partialorder %v2083, 8.507059e+37
        %v2085 = vand.u32 %v1912, 2147483648
        %v2086 = vor.u32 1.1754944e-38, %v2085
        %v2087 = vsel %vm2084, %v2086, %v2082
        %v2088 = vmul.f32 1.0, %v2087
        %v2089 = vrcp.pop %v1913
        %v2090 = vmul.f32 %v1913, %v2089
        %v2091 = vsub.f32 1.0, %v2090
        %v2092 = vmul.f32 %v2089, %v2091
        %v2093 = vadd.f32 %v2089, %v2092
        %vm2094 = vweird.f32 %v1913
        %vm2095 = vweird.f32 %v2089
        %vm2096 = vmor %vm2094, %vm2095
        %v2097 = vsel %vm2096, %v2089, %v2093
        %v2098 = vand.u32 2147483647, %v1913
        %vm2099 = vcmp.eq.f32.partialorder %v2098, 8.507059e+37
        %v2100 = vand.u32 %v1913, 2147483648
        %v2101 = vor.u32 1.1754944e-38, %v2100
        %v2102 = vsel %vm2099, %v2101, %v2097
        %v2103 = vmul.f32 1.0, %v2102
        %v2104 = vrcp.pop %v1914
        %v2105 = vmul.f32 %v1914, %v2104
        %v2106 = vsub.f32 1.0, %v2105
        %v2107 = vmul.f32 %v2104, %v2106
        %v2108 = vadd.f32 %v2104, %v2107
        %vm2109 = vweird.f32 %v1914
        %vm2110 = vweird.f32 %v2104
        %vm2111 = vmor %vm2109, %vm2110
        %v2112 = vsel %vm2111, %v2104, %v2108
        %v2113 = vand.u32 2147483647, %v1914
        %vm2114 = vcmp.eq.f32.partialorder %v2113, 8.507059e+37
        %v2115 = vand.u32 %v1914, 2147483648
        %v2116 = vor.u32 1.1754944e-38, %v2115
        %v2117 = vsel %vm2114, %v2116, %v2112
        %v2118 = vmul.f32 1.0, %v2117
        %v2119 = vrcp.pop %v1915
        %v2120 = vmul.f32 %v1915, %v2119
        %v2121 = vsub.f32 1.0, %v2120
        %v2122 = vmul.f32 %v2119, %v2121
        %v2123 = vadd.f32 %v2119, %v2122
        %vm2124 = vweird.f32 %v1915
        %vm2125 = vweird.f32 %v2119
        %vm2126 = vmor %vm2124, %vm2125
        %v2127 = vsel %vm2126, %v2119, %v2123
        %v2128 = vand.u32 2147483647, %v1915
        %vm2129 = vcmp.eq.f32.partialorder %v2128, 8.507059e+37
        %v2130 = vand.u32 %v1915, 2147483648
        %v2131 = vor.u32 1.1754944e-38, %v2130
        %v2132 = vsel %vm2129, %v2131, %v2127
        %v2133 = vmul.f32 1.0, %v2132
        %v2134 = vrcp.pop %v1916
        %v2135 = vmul.f32 %v1916, %v2134
        %v2136 = vsub.f32 1.0, %v2135
        %v2137 = vmul.f32 %v2134, %v2136
        %v2138 = vadd.f32 %v2134, %v2137
        %vm2139 = vweird.f32 %v1916
        %vm2140 = vweird.f32 %v2134
        %vm2141 = vmor %vm2139, %vm2140
        %v2142 = vsel %vm2141, %v2134, %v2138
        %v2143 = vand.u32 2147483647, %v1916
        %vm2144 = vcmp.eq.f32.partialorder %v2143, 8.507059e+37
        %v2145 = vand.u32 %v1916, 2147483648
        %v2146 = vor.u32 1.1754944e-38, %v2145
        %v2147 = vsel %vm2144, %v2146, %v2142
        %v2148 = vmul.f32 1.0, %v2147
        %v2149 = vrcp.pop %v1917
        %v2150 = vmul.f32 %v1917, %v2149
        %v2151 = vsub.f32 1.0, %v2150
        %v2152 = vmul.f32 %v2149, %v2151
        %v2153 = vadd.f32 %v2149, %v2152
        %vm2154 = vweird.f32 %v1917
        %vm2155 = vweird.f32 %v2149
        %vm2156 = vmor %vm2154, %vm2155
        %v2157 = vsel %vm2156, %v2149, %v2153
        %v2158 = vand.u32 2147483647, %v1917
        %vm2159 = vcmp.eq.f32.partialorder %v2158, 8.507059e+37
        %v2160 = vand.u32 %v1917, 2147483648
        %v2161 = vor.u32 1.1754944e-38, %v2160
        %v2162 = vsel %vm2159, %v2161, %v2157
        %v2163 = vmul.f32 1.0, %v2162
        %v2164 = vrcp.pop %v1918
        %v2165 = vmul.f32 %v1918, %v2164
        %v2166 = vsub.f32 1.0, %v2165
        %v2167 = vmul.f32 %v2164, %v2166
        %v2168 = vadd.f32 %v2164, %v2167
        %vm2169 = vweird.f32 %v1918
        %vm2170 = vweird.f32 %v2164
        %vm2171 = vmor %vm2169, %vm2170
        %v2172 = vsel %vm2171, %v2164, %v2168
        %v2173 = vand.u32 2147483647, %v1918
        %vm2174 = vcmp.eq.f32.partialorder %v2173, 8.507059e+37
        %v2175 = vand.u32 %v1918, 2147483648
        %v2176 = vor.u32 1.1754944e-38, %v2175
        %v2177 = vsel %vm2174, %v2176, %v2172
        %v2178 = vmul.f32 1.0, %v2177
        %v2179 = vrcp.pop %v1919
        %v2180 = vmul.f32 %v1919, %v2179
        %v2181 = vsub.f32 1.0, %v2180
        %v2182 = vmul.f32 %v2179, %v2181
        %v2183 = vadd.f32 %v2179, %v2182
        %vm2184 = vweird.f32 %v1919
        %vm2185 = vweird.f32 %v2179
        %vm2186 = vmor %vm2184, %vm2185
        %v2187 = vsel %vm2186, %v2179, %v2183
        %v2188 = vand.u32 2147483647, %v1919
        %vm2189 = vcmp.eq.f32.partialorder %v2188, 8.507059e+37
        %v2190 = vand.u32 %v1919, 2147483648
        %v2191 = vor.u32 1.1754944e-38, %v2190
        %v2192 = vsel %vm2189, %v2191, %v2187
        %v2193 = vmul.f32 1.0, %v2192
        %v2194 = vrcp.pop %v1920
        %v2195 = vmul.f32 %v1920, %v2194
        %v2196 = vsub.f32 1.0, %v2195
        %v2197 = vmul.f32 %v2194, %v2196
        %v2198 = vadd.f32 %v2194, %v2197
        %vm2199 = vweird.f32 %v1920
        %vm2200 = vweird.f32 %v2194
        %vm2201 = vmor %vm2199, %vm2200
        %v2202 = vsel %vm2201, %v2194, %v2198
        %v2203 = vand.u32 2147483647, %v1920
        %vm2204 = vcmp.eq.f32.partialorder %v2203, 8.507059e+37
        %v2205 = vand.u32 %v1920, 2147483648
        %v2206 = vor.u32 1.1754944e-38, %v2205
        %v2207 = vsel %vm2204, %v2206, %v2202
        %v2208 = vmul.f32 1.0, %v2207
        %v2209 = vrcp.pop %v1921
        %v2210 = vmul.f32 %v1921, %v2209
        %v2211 = vsub.f32 1.0, %v2210
        %v2212 = vmul.f32 %v2209, %v2211
        %v2213 = vadd.f32 %v2209, %v2212
        %vm2214 = vweird.f32 %v1921
        %vm2215 = vweird.f32 %v2209
        %vm2216 = vmor %vm2214, %vm2215
        %v2217 = vsel %vm2216, %v2209, %v2213
        %v2218 = vand.u32 2147483647, %v1921
        %vm2219 = vcmp.eq.f32.partialorder %v2218, 8.507059e+37
        %v2220 = vand.u32 %v1921, 2147483648
        %v2221 = vor.u32 1.1754944e-38, %v2220
        %v2222 = vsel %vm2219, %v2221, %v2217
        %v2223 = vmul.f32 1.0, %v2222
        %v2224 = vrcp.pop %v1922
        %v2225 = vmul.f32 %v1922, %v2224
        %v2226 = vsub.f32 1.0, %v2225
        %v2227 = vmul.f32 %v2224, %v2226
        %v2228 = vadd.f32 %v2224, %v2227
        %vm2229 = vweird.f32 %v1922
        %vm2230 = vweird.f32 %v2224
        %vm2231 = vmor %vm2229, %vm2230
        %v2232 = vsel %vm2231, %v2224, %v2228
        %v2233 = vand.u32 2147483647, %v1922
        %vm2234 = vcmp.eq.f32.partialorder %v2233, 8.507059e+37
        %v2235 = vand.u32 %v1922, 2147483648
        %v2236 = vor.u32 1.1754944e-38, %v2235
        %v2237 = vsel %vm2234, %v2236, %v2232
        %v2238 = vmul.f32 1.0, %v2237
        %v2239 = vrcp.pop %v1923
        %v2240 = vmul.f32 %v1923, %v2239
        %v2241 = vsub.f32 1.0, %v2240
        %v2242 = vmul.f32 %v2239, %v2241
        %v2243 = vadd.f32 %v2239, %v2242
        %vm2244 = vweird.f32 %v1923
        %vm2245 = vweird.f32 %v2239
        %vm2246 = vmor %vm2244, %vm2245
        %v2247 = vsel %vm2246, %v2239, %v2243
        %v2248 = vand.u32 2147483647, %v1923
        %vm2249 = vcmp.eq.f32.partialorder %v2248, 8.507059e+37
        %v2250 = vand.u32 %v1923, 2147483648
        %v2251 = vor.u32 1.1754944e-38, %v2250
        %v2252 = vsel %vm2249, %v2251, %v2247
        %v2253 = vmul.f32 1.0, %v2252
        %v2254 = vrcp.pop %v1924
        %v2255 = vmul.f32 %v1924, %v2254
        %v2256 = vsub.f32 1.0, %v2255
        %v2257 = vmul.f32 %v2254, %v2256
        %v2258 = vadd.f32 %v2254, %v2257
        %vm2259 = vweird.f32 %v1924
        %vm2260 = vweird.f32 %v2254
        %vm2261 = vmor %vm2259, %vm2260
        %v2262 = vsel %vm2261, %v2254, %v2258
        %v2263 = vand.u32 2147483647, %v1924
        %vm2264 = vcmp.eq.f32.partialorder %v2263, 8.507059e+37
        %v2265 = vand.u32 %v1924, 2147483648
        %v2266 = vor.u32 1.1754944e-38, %v2265
        %v2267 = vsel %vm2264, %v2266, %v2262
        %v2268 = vmul.f32 1.0, %v2267
        %v2269 = vrcp.pop %v1925
        %v2270 = vmul.f32 %v1925, %v2269
        %v2271 = vsub.f32 1.0, %v2270
        %v2272 = vmul.f32 %v2269, %v2271
        %v2273 = vadd.f32 %v2269, %v2272
        %vm2274 = vweird.f32 %v1925
        %vm2275 = vweird.f32 %v2269
        %vm2276 = vmor %vm2274, %vm2275
        %v2277 = vsel %vm2276, %v2269, %v2273
        %v2278 = vand.u32 2147483647, %v1925
        %vm2279 = vcmp.eq.f32.partialorder %v2278, 8.507059e+37
        %v2280 = vand.u32 %v1925, 2147483648
        %v2281 = vor.u32 1.1754944e-38, %v2280
        %v2282 = vsel %vm2279, %v2281, %v2277
        %v2283 = vmul.f32 1.0, %v2282
        %v2284 = vrcp.pop %v1926
        %v2285 = vmul.f32 %v1926, %v2284
        %v2286 = vsub.f32 1.0, %v2285
        %v2287 = vmul.f32 %v2284, %v2286
        %v2288 = vadd.f32 %v2284, %v2287
        %vm2289 = vweird.f32 %v1926
        %vm2290 = vweird.f32 %v2284
        %vm2291 = vmor %vm2289, %vm2290
        %v2292 = vsel %vm2291, %v2284, %v2288
        %v2293 = vand.u32 2147483647, %v1926
        %vm2294 = vcmp.eq.f32.partialorder %v2293, 8.507059e+37
        %v2295 = vand.u32 %v1926, 2147483648
        %v2296 = vor.u32 1.1754944e-38, %v2295
        %v2297 = vsel %vm2294, %v2296, %v2292
        %v2298 = vmul.f32 1.0, %v2297
        %v2299 = vrcp.pop %v1927
        %v2300 = vmul.f32 %v1927, %v2299
        %v2301 = vsub.f32 1.0, %v2300
        %v2302 = vmul.f32 %v2299, %v2301
        %v2303 = vadd.f32 %v2299, %v2302
        %vm2304 = vweird.f32 %v1927
        %vm2305 = vweird.f32 %v2299
        %vm2306 = vmor %vm2304, %vm2305
        %v2307 = vsel %vm2306, %v2299, %v2303
        %v2308 = vand.u32 2147483647, %v1927
        %vm2309 = vcmp.eq.f32.partialorder %v2308, 8.507059e+37
        %v2310 = vand.u32 %v1927, 2147483648
        %v2311 = vor.u32 1.1754944e-38, %v2310
        %v2312 = vsel %vm2309, %v2311, %v2307
        %v2313 = vmul.f32 1.0, %v2312
        %v2314 = vrcp.pop %v1928
        %v2315 = vmul.f32 %v1928, %v2314
        %v2316 = vsub.f32 1.0, %v2315
        %v2317 = vmul.f32 %v2314, %v2316
        %v2318 = vadd.f32 %v2314, %v2317
        %vm2319 = vweird.f32 %v1928
        %vm2320 = vweird.f32 %v2314
        %vm2321 = vmor %vm2319, %vm2320
        %v2322 = vsel %vm2321, %v2314, %v2318
        %v2323 = vand.u32 2147483647, %v1928
        %vm2324 = vcmp.eq.f32.partialorder %v2323, 8.507059e+37
        %v2325 = vand.u32 %v1928, 2147483648
        %v2326 = vor.u32 1.1754944e-38, %v2325
        %v2327 = vsel %vm2324, %v2326, %v2322
        %v2328 = vmul.f32 1.0, %v2327
        %v2329 = vrcp.pop %v1929
        %v2330 = vmul.f32 %v1929, %v2329
        %v2331 = vsub.f32 1.0, %v2330
        %v2332 = vmul.f32 %v2329, %v2331
        %v2333 = vadd.f32 %v2329, %v2332
        %vm2334 = vweird.f32 %v1929
        %vm2335 = vweird.f32 %v2329
        %vm2336 = vmor %vm2334, %vm2335
        %v2337 = vsel %vm2336, %v2329, %v2333
        %v2338 = vand.u32 2147483647, %v1929
        %vm2339 = vcmp.eq.f32.partialorder %v2338, 8.507059e+37
        %v2340 = vand.u32 %v1929, 2147483648
        %v2341 = vor.u32 1.1754944e-38, %v2340
        %v2342 = vsel %vm2339, %v2341, %v2337
        %v2343 = vmul.f32 1.0, %v2342
        %v2344 = vrcp.pop %v1930
        %v2345 = vmul.f32 %v1930, %v2344
        %v2346 = vsub.f32 1.0, %v2345
        %v2347 = vmul.f32 %v2344, %v2346
        %v2348 = vadd.f32 %v2344, %v2347
        %vm2349 = vweird.f32 %v1930
        %vm2350 = vweird.f32 %v2344
        %vm2351 = vmor %vm2349, %vm2350
        %v2352 = vsel %vm2351, %v2344, %v2348
        %v2353 = vand.u32 2147483647, %v1930
        %vm2354 = vcmp.eq.f32.partialorder %v2353, 8.507059e+37
        %v2355 = vand.u32 %v1930, 2147483648
        %v2356 = vor.u32 1.1754944e-38, %v2355
        %v2357 = vsel %vm2354, %v2356, %v2352
        %v2358 = vmul.f32 1.0, %v2357
        %v2359 = vrcp.pop %v1931
        %v2360 = vmul.f32 %v1931, %v2359
        %v2361 = vsub.f32 1.0, %v2360
        %v2362 = vmul.f32 %v2359, %v2361
        %v2363 = vadd.f32 %v2359, %v2362
        %vm2364 = vweird.f32 %v1931
        %vm2365 = vweird.f32 %v2359
        %vm2366 = vmor %vm2364, %vm2365
        %v2367 = vsel %vm2366, %v2359, %v2363
        %v2368 = vand.u32 2147483647, %v1931
        %vm2369 = vcmp.eq.f32.partialorder %v2368, 8.507059e+37
        %v2370 = vand.u32 %v1931, 2147483648
        %v2371 = vor.u32 1.1754944e-38, %v2370
        %v2372 = vsel %vm2369, %v2371, %v2367
        %v2373 = vmul.f32 1.0, %v2372
        %v2374 = vrcp.pop %v1932
        %v2375 = vmul.f32 %v1932, %v2374
        %v2376 = vsub.f32 1.0, %v2375
        %v2377 = vmul.f32 %v2374, %v2376
        %v2378 = vadd.f32 %v2374, %v2377
        %vm2379 = vweird.f32 %v1932
        %vm2380 = vweird.f32 %v2374
        %vm2381 = vmor %vm2379, %vm2380
        %v2382 = vsel %vm2381, %v2374, %v2378
        %v2383 = vand.u32 2147483647, %v1932
        %vm2384 = vcmp.eq.f32.partialorder %v2383, 8.507059e+37
        %v2385 = vand.u32 %v1932, 2147483648
        %v2386 = vor.u32 1.1754944e-38, %v2385
        %v2387 = vsel %vm2384, %v2386, %v2382
        %v2388 = vmul.f32 1.0, %v2387
        %v2389 = vrcp.pop %v1933
        %v2390 = vmul.f32 %v1933, %v2389
        %v2391 = vsub.f32 1.0, %v2390
        %v2392 = vmul.f32 %v2389, %v2391
        %v2393 = vadd.f32 %v2389, %v2392
        %vm2394 = vweird.f32 %v1933
        %vm2395 = vweird.f32 %v2389
        %vm2396 = vmor %vm2394, %vm2395
        %v2397 = vsel %vm2396, %v2389, %v2393
        %v2398 = vand.u32 2147483647, %v1933
        %vm2399 = vcmp.eq.f32.partialorder %v2398, 8.507059e+37
        %v2400 = vand.u32 %v1933, 2147483648
        %v2401 = vor.u32 1.1754944e-38, %v2400
        %v2402 = vsel %vm2399, %v2401, %v2397
        %v2403 = vmul.f32 1.0, %v2402
        %v2404 = vrcp.pop %v1934
        %v2405 = vmul.f32 %v1934, %v2404
        %v2406 = vsub.f32 1.0, %v2405
        %v2407 = vmul.f32 %v2404, %v2406
        %v2408 = vadd.f32 %v2404, %v2407
        %vm2409 = vweird.f32 %v1934
        %vm2410 = vweird.f32 %v2404
        %vm2411 = vmor %vm2409, %vm2410
        %v2412 = vsel %vm2411, %v2404, %v2408
        %v2413 = vand.u32 2147483647, %v1934
        %vm2414 = vcmp.eq.f32.partialorder %v2413, 8.507059e+37
        %v2415 = vand.u32 %v1934, 2147483648
        %v2416 = vor.u32 1.1754944e-38, %v2415
        %v2417 = vsel %vm2414, %v2416, %v2412
        %v2418 = vmul.f32 1.0, %v2417
        %v2419 = vrcp.pop %v1935
        %v2420 = vmul.f32 %v1935, %v2419
        %v2421 = vsub.f32 1.0, %v2420
        %v2422 = vmul.f32 %v2419, %v2421
        %v2423 = vadd.f32 %v2419, %v2422
        %vm2424 = vweird.f32 %v1935
        %vm2425 = vweird.f32 %v2419
        %vm2426 = vmor %vm2424, %vm2425
        %v2427 = vsel %vm2426, %v2419, %v2423
        %v2428 = vand.u32 2147483647, %v1935
        %vm2429 = vcmp.eq.f32.partialorder %v2428, 8.507059e+37
        %v2430 = vand.u32 %v1935, 2147483648
        %v2431 = vor.u32 1.1754944e-38, %v2430
        %v2432 = vsel %vm2429, %v2431, %v2427
        %v2433 = vmul.f32 1.0, %v2432
        %v2434 = vrcp.pop %v1936
        %v2435 = vmul.f32 %v1936, %v2434
        %v2436 = vsub.f32 1.0, %v2435
        %v2437 = vmul.f32 %v2434, %v2436
        %v2438 = vadd.f32 %v2434, %v2437
        %vm2439 = vweird.f32 %v1936
        %vm2440 = vweird.f32 %v2434
        %vm2441 = vmor %vm2439, %vm2440
        %v2442 = vsel %vm2441, %v2434, %v2438
        %v2443 = vand.u32 2147483647, %v1936
        %vm2444 = vcmp.eq.f32.partialorder %v2443, 8.507059e+37
        %v2445 = vand.u32 %v1936, 2147483648
        %v2446 = vor.u32 1.1754944e-38, %v2445
        %v2447 = vsel %vm2444, %v2446, %v2442
        %v2448 = vmul.f32 1.0, %v2447
        %v2449 = vrcp.pop %v1937
        %v2450 = vmul.f32 %v1937, %v2449
        %v2451 = vsub.f32 1.0, %v2450
        %v2452 = vmul.f32 %v2449, %v2451
        %v2453 = vadd.f32 %v2449, %v2452
        %vm2454 = vweird.f32 %v1937
        %vm2455 = vweird.f32 %v2449
        %vm2456 = vmor %vm2454, %vm2455
        %v2457 = vsel %vm2456, %v2449, %v2453
        %v2458 = vand.u32 2147483647, %v1937
        %vm2459 = vcmp.eq.f32.partialorder %v2458, 8.507059e+37
        %v2460 = vand.u32 %v1937, 2147483648
        %v2461 = vor.u32 1.1754944e-38, %v2460
        %v2462 = vsel %vm2459, %v2461, %v2457
        %v2463 = vmul.f32 1.0, %v2462
        %v2464 = vrcp.pop %v1938
        %v2465 = vmul.f32 %v1938, %v2464
        %v2466 = vsub.f32 1.0, %v2465
        %v2467 = vmul.f32 %v2464, %v2466
        %v2468 = vadd.f32 %v2464, %v2467
        %vm2469 = vweird.f32 %v1938
        %vm2470 = vweird.f32 %v2464
        %vm2471 = vmor %vm2469, %vm2470
        %v2472 = vsel %vm2471, %v2464, %v2468
        %v2473 = vand.u32 2147483647, %v1938
        %vm2474 = vcmp.eq.f32.partialorder %v2473, 8.507059e+37
        %v2475 = vand.u32 %v1938, 2147483648
        %v2476 = vor.u32 1.1754944e-38, %v2475
        %v2477 = vsel %vm2474, %v2476, %v2472
        %v2478 = vmul.f32 1.0, %v2477
        %v2479 = vrcp.pop %v1939
        %v2480 = vmul.f32 %v1939, %v2479
        %v2481 = vsub.f32 1.0, %v2480
        %v2482 = vmul.f32 %v2479, %v2481
        %v2483 = vadd.f32 %v2479, %v2482
        %vm2484 = vweird.f32 %v1939
        %vm2485 = vweird.f32 %v2479
        %vm2486 = vmor %vm2484, %vm2485
        %v2487 = vsel %vm2486, %v2479, %v2483
        %v2488 = vand.u32 2147483647, %v1939
        %vm2489 = vcmp.eq.f32.partialorder %v2488, 8.507059e+37
        %v2490 = vand.u32 %v1939, 2147483648
        %v2491 = vor.u32 1.1754944e-38, %v2490
        %v2492 = vsel %vm2489, %v2491, %v2487
        %v2493 = vmul.f32 1.0, %v2492
        %v2494 = vrcp.pop %v1940
        %v2495 = vmul.f32 %v1940, %v2494
        %v2496 = vsub.f32 1.0, %v2495
        %v2497 = vmul.f32 %v2494, %v2496
        %v2498 = vadd.f32 %v2494, %v2497
        %vm2499 = vweird.f32 %v1940
        %vm2500 = vweird.f32 %v2494
        %vm2501 = vmor %vm2499, %vm2500
        %v2502 = vsel %vm2501, %v2494, %v2498
        %v2503 = vand.u32 2147483647, %v1940
        %vm2504 = vcmp.eq.f32.partialorder %v2503, 8.507059e+37
        %v2505 = vand.u32 %v1940, 2147483648
        %v2506 = vor.u32 1.1754944e-38, %v2505
        %v2507 = vsel %vm2504, %v2506, %v2502
        %v2508 = vmul.f32 1.0, %v2507
        %v2509 = vrcp.pop %v1941
        %v2510 = vmul.f32 %v1941, %v2509
        %v2511 = vsub.f32 1.0, %v2510
        %v2512 = vmul.f32 %v2509, %v2511
        %v2513 = vadd.f32 %v2509, %v2512
        %vm2514 = vweird.f32 %v1941
        %vm2515 = vweird.f32 %v2509
        %vm2516 = vmor %vm2514, %vm2515
        %v2517 = vsel %vm2516, %v2509, %v2513
        %v2518 = vand.u32 2147483647, %v1941
        %vm2519 = vcmp.eq.f32.partialorder %v2518, 8.507059e+37
        %v2520 = vand.u32 %v1941, 2147483648
        %v2521 = vor.u32 1.1754944e-38, %v2520
        %v2522 = vsel %vm2519, %v2521, %v2517
        %v2523 = vmul.f32 1.0, %v2522
        %v2524 = vrcp.pop %v1942
        %v2525 = vmul.f32 %v1942, %v2524
        %v2526 = vsub.f32 1.0, %v2525
        %v2527 = vmul.f32 %v2524, %v2526
        %v2528 = vadd.f32 %v2524, %v2527
        %vm2529 = vweird.f32 %v1942
        %vm2530 = vweird.f32 %v2524
        %vm2531 = vmor %vm2529, %vm2530
        %v2532 = vsel %vm2531, %v2524, %v2528
        %v2533 = vand.u32 2147483647, %v1942
        %vm2534 = vcmp.eq.f32.partialorder %v2533, 8.507059e+37
        %v2535 = vand.u32 %v1942, 2147483648
        %v2536 = vor.u32 1.1754944e-38, %v2535
        %v2537 = vsel %vm2534, %v2536, %v2532
        %v2538 = vmul.f32 1.0, %v2537
        %v2539 = vrcp.pop %v1943
        %v2540 = vmul.f32 %v1943, %v2539
        %v2541 = vsub.f32 1.0, %v2540
        %v2542 = vmul.f32 %v2539, %v2541
        %v2543 = vadd.f32 %v2539, %v2542
        %vm2544 = vweird.f32 %v1943
        %vm2545 = vweird.f32 %v2539
        %vm2546 = vmor %vm2544, %vm2545
        %v2547 = vsel %vm2546, %v2539, %v2543
        %v2548 = vand.u32 2147483647, %v1943
        %vm2549 = vcmp.eq.f32.partialorder %v2548, 8.507059e+37
        %v2550 = vand.u32 %v1943, 2147483648
        %v2551 = vor.u32 1.1754944e-38, %v2550
        %v2552 = vsel %vm2549, %v2551, %v2547
        %v2553 = vmul.f32 1.0, %v2552
        %v2554 = vrcp.pop %v1944
        %v2555 = vmul.f32 %v1944, %v2554
        %v2556 = vsub.f32 1.0, %v2555
        %v2557 = vmul.f32 %v2554, %v2556
        %v2558 = vadd.f32 %v2554, %v2557
        %vm2559 = vweird.f32 %v1944
        %vm2560 = vweird.f32 %v2554
        %vm2561 = vmor %vm2559, %vm2560
        %v2562 = vsel %vm2561, %v2554, %v2558
        %v2563 = vand.u32 2147483647, %v1944
        %vm2564 = vcmp.eq.f32.partialorder %v2563, 8.507059e+37
        %v2565 = vand.u32 %v1944, 2147483648
        %v2566 = vor.u32 1.1754944e-38, %v2565
        %v2567 = vsel %vm2564, %v2566, %v2562
        %v2568 = vmul.f32 1.0, %v2567
        %v2569 = vrcp.pop %v1945
        %v2570 = vmul.f32 %v1945, %v2569
        %v2571 = vsub.f32 1.0, %v2570
        %v2572 = vmul.f32 %v2569, %v2571
        %v2573 = vadd.f32 %v2569, %v2572
        %vm2574 = vweird.f32 %v1945
        %vm2575 = vweird.f32 %v2569
        %vm2576 = vmor %vm2574, %vm2575
        %v2577 = vsel %vm2576, %v2569, %v2573
        %v2578 = vand.u32 2147483647, %v1945
        %vm2579 = vcmp.eq.f32.partialorder %v2578, 8.507059e+37
        %v2580 = vand.u32 %v1945, 2147483648
        %v2581 = vor.u32 1.1754944e-38, %v2580
        %v2582 = vsel %vm2579, %v2581, %v2577
        %v2583 = vmul.f32 1.0, %v2582
        %v2584 = vrcp.pop %v1946
        %v2585 = vmul.f32 %v1946, %v2584
        %v2586 = vsub.f32 1.0, %v2585
        %v2587 = vmul.f32 %v2584, %v2586
        %v2588 = vadd.f32 %v2584, %v2587
        %vm2589 = vweird.f32 %v1946
        %vm2590 = vweird.f32 %v2584
        %vm2591 = vmor %vm2589, %vm2590
        %v2592 = vsel %vm2591, %v2584, %v2588
        %v2593 = vand.u32 2147483647, %v1946
        %vm2594 = vcmp.eq.f32.partialorder %v2593, 8.507059e+37
        %v2595 = vand.u32 %v1946, 2147483648
        %v2596 = vor.u32 1.1754944e-38, %v2595
        %v2597 = vsel %vm2594, %v2596, %v2592
        %v2598 = vmul.f32 1.0, %v2597
        %v2599 = vrcp.pop %v1947
        %v2600 = vmul.f32 %v1947, %v2599
        %v2601 = vsub.f32 1.0, %v2600
        %v2602 = vmul.f32 %v2599, %v2601
        %v2603 = vadd.f32 %v2599, %v2602
        %vm2604 = vweird.f32 %v1947
        %vm2605 = vweird.f32 %v2599
        %vm2606 = vmor %vm2604, %vm2605
        %v2607 = vsel %vm2606, %v2599, %v2603
        %v2608 = vand.u32 2147483647, %v1947
        %vm2609 = vcmp.eq.f32.partialorder %v2608, 8.507059e+37
        %v2610 = vand.u32 %v1947, 2147483648
        %v2611 = vor.u32 1.1754944e-38, %v2610
        %v2612 = vsel %vm2609, %v2611, %v2607
        %v2613 = vmul.f32 1.0, %v2612
        %v2614 = vrcp.pop %v1948
        %v2615 = vmul.f32 %v1948, %v2614
        %v2616 = vsub.f32 1.0, %v2615
        %v2617 = vmul.f32 %v2614, %v2616
        %v2618 = vadd.f32 %v2614, %v2617
        %vm2619 = vweird.f32 %v1948
        %vm2620 = vweird.f32 %v2614
        %vm2621 = vmor %vm2619, %vm2620
        %v2622 = vsel %vm2621, %v2614, %v2618
        %v2623 = vand.u32 2147483647, %v1948
        %vm2624 = vcmp.eq.f32.partialorder %v2623, 8.507059e+37
        %v2625 = vand.u32 %v1948, 2147483648
        %v2626 = vor.u32 1.1754944e-38, %v2625
        %v2627 = vsel %vm2624, %v2626, %v2622
        %v2628 = vmul.f32 1.0, %v2627
        %v2629 = vrcp.pop %v1949
        %v2630 = vmul.f32 %v1949, %v2629
        %v2631 = vsub.f32 1.0, %v2630
        %v2632 = vmul.f32 %v2629, %v2631
        %v2633 = vadd.f32 %v2629, %v2632
        %vm2634 = vweird.f32 %v1949
        %vm2635 = vweird.f32 %v2629
        %vm2636 = vmor %vm2634, %vm2635
        %v2637 = vsel %vm2636, %v2629, %v2633
        %v2638 = vand.u32 2147483647, %v1949
        %vm2639 = vcmp.eq.f32.partialorder %v2638, 8.507059e+37
        %v2640 = vand.u32 %v1949, 2147483648
        %v2641 = vor.u32 1.1754944e-38, %v2640
        %v2642 = vsel %vm2639, %v2641, %v2637
        %v2643 = vmul.f32 1.0, %v2642
        %v2644 = vrcp.pop %v1950
        %v2645 = vmul.f32 %v1950, %v2644
        %v2646 = vsub.f32 1.0, %v2645
        %v2647 = vmul.f32 %v2644, %v2646
        %v2648 = vadd.f32 %v2644, %v2647
        %vm2649 = vweird.f32 %v1950
        %vm2650 = vweird.f32 %v2644
        %vm2651 = vmor %vm2649, %vm2650
        %v2652 = vsel %vm2651, %v2644, %v2648
        %v2653 = vand.u32 2147483647, %v1950
        %vm2654 = vcmp.eq.f32.partialorder %v2653, 8.507059e+37
        %v2655 = vand.u32 %v1950, 2147483648
        %v2656 = vor.u32 1.1754944e-38, %v2655
        %v2657 = vsel %vm2654, %v2656, %v2652
        %v2658 = vmul.f32 1.0, %v2657
        %v2659 = vrcp.pop %v1951
        %v2660 = vmul.f32 %v1951, %v2659
        %v2661 = vsub.f32 1.0, %v2660
        %v2662 = vmul.f32 %v2659, %v2661
        %v2663 = vadd.f32 %v2659, %v2662
        %vm2664 = vweird.f32 %v1951
        %vm2665 = vweird.f32 %v2659
        %vm2666 = vmor %vm2664, %vm2665
        %v2667 = vsel %vm2666, %v2659, %v2663
        %v2668 = vand.u32 2147483647, %v1951
        %vm2669 = vcmp.eq.f32.partialorder %v2668, 8.507059e+37
        %v2670 = vand.u32 %v1951, 2147483648
        %v2671 = vor.u32 1.1754944e-38, %v2670
        %v2672 = vsel %vm2669, %v2671, %v2667
        %v2673 = vmul.f32 1.0, %v2672
        %v2674 = vrcp.pop %v1952
        %v2675 = vmul.f32 %v1952, %v2674
        %v2676 = vsub.f32 1.0, %v2675
        %v2677 = vmul.f32 %v2674, %v2676
        %v2678 = vadd.f32 %v2674, %v2677
        %vm2679 = vweird.f32 %v1952
        %vm2680 = vweird.f32 %v2674
        %vm2681 = vmor %vm2679, %vm2680
        %v2682 = vsel %vm2681, %v2674, %v2678
        %v2683 = vand.u32 2147483647, %v1952
        %vm2684 = vcmp.eq.f32.partialorder %v2683, 8.507059e+37
        %v2685 = vand.u32 %v1952, 2147483648
        %v2686 = vor.u32 1.1754944e-38, %v2685
        %v2687 = vsel %vm2684, %v2686, %v2682
        %v2688 = vmul.f32 1.0, %v2687
        %v2689 = vrcp.pop %v1953
        %v2690 = vmul.f32 %v1953, %v2689
        %v2691 = vsub.f32 1.0, %v2690
        %v2692 = vmul.f32 %v2689, %v2691
        %v2693 = vadd.f32 %v2689, %v2692
        %vm2694 = vweird.f32 %v1953
        %vm2695 = vweird.f32 %v2689
        %vm2696 = vmor %vm2694, %vm2695
        %v2697 = vsel %vm2696, %v2689, %v2693
        %v2698 = vand.u32 2147483647, %v1953
        %vm2699 = vcmp.eq.f32.partialorder %v2698, 8.507059e+37
        %v2700 = vand.u32 %v1953, 2147483648
        %v2701 = vor.u32 1.1754944e-38, %v2700
        %v2702 = vsel %vm2699, %v2701, %v2697
        %v2703 = vmul.f32 1.0, %v2702
        %v2704 = vrcp.pop %v1954
        %v2705 = vmul.f32 %v1954, %v2704
        %v2706 = vsub.f32 1.0, %v2705
        %v2707 = vmul.f32 %v2704, %v2706
        %v2708 = vadd.f32 %v2704, %v2707
        %vm2709 = vweird.f32 %v1954
        %vm2710 = vweird.f32 %v2704
        %vm2711 = vmor %vm2709, %vm2710
        %v2712 = vsel %vm2711, %v2704, %v2708
        %v2713 = vand.u32 2147483647, %v1954
        %vm2714 = vcmp.eq.f32.partialorder %v2713, 8.507059e+37
        %v2715 = vand.u32 %v1954, 2147483648
        %v2716 = vor.u32 1.1754944e-38, %v2715
        %v2717 = vsel %vm2714, %v2716, %v2712
        %v2718 = vmul.f32 1.0, %v2717
        %v2719 = vrcp.pop %v1955
        %v2720 = vmul.f32 %v1955, %v2719
        %v2721 = vsub.f32 1.0, %v2720
        %v2722 = vmul.f32 %v2719, %v2721
        %v2723 = vadd.f32 %v2719, %v2722
        %vm2724 = vweird.f32 %v1955
        %vm2725 = vweird.f32 %v2719
        %vm2726 = vmor %vm2724, %vm2725
        %v2727 = vsel %vm2726, %v2719, %v2723
        %v2728 = vand.u32 2147483647, %v1955
        %vm2729 = vcmp.eq.f32.partialorder %v2728, 8.507059e+37
        %v2730 = vand.u32 %v1955, 2147483648
        %v2731 = vor.u32 1.1754944e-38, %v2730
        %v2732 = vsel %vm2729, %v2731, %v2727
        %v2733 = vmul.f32 1.0, %v2732
        %v2734 = vrcp.pop %v1956
        %v2735 = vmul.f32 %v1956, %v2734
        %v2736 = vsub.f32 1.0, %v2735
        %v2737 = vmul.f32 %v2734, %v2736
        %v2738 = vadd.f32 %v2734, %v2737
        %vm2739 = vweird.f32 %v1956
        %vm2740 = vweird.f32 %v2734
        %vm2741 = vmor %vm2739, %vm2740
        %v2742 = vsel %vm2741, %v2734, %v2738
        %v2743 = vand.u32 2147483647, %v1956
        %vm2744 = vcmp.eq.f32.partialorder %v2743, 8.507059e+37
        %v2745 = vand.u32 %v1956, 2147483648
        %v2746 = vor.u32 1.1754944e-38, %v2745
        %v2747 = vsel %vm2744, %v2746, %v2742
        %v2748 = vmul.f32 1.0, %v2747
        %v2749 = vrcp.pop %v1957
        %v2750 = vmul.f32 %v1957, %v2749
        %v2751 = vsub.f32 1.0, %v2750
        %v2752 = vmul.f32 %v2749, %v2751
        %v2753 = vadd.f32 %v2749, %v2752
        %vm2754 = vweird.f32 %v1957
        %vm2755 = vweird.f32 %v2749
        %vm2756 = vmor %vm2754, %vm2755
        %v2757 = vsel %vm2756, %v2749, %v2753
        %v2758 = vand.u32 2147483647, %v1957
        %vm2759 = vcmp.eq.f32.partialorder %v2758, 8.507059e+37
        %v2760 = vand.u32 %v1957, 2147483648
        %v2761 = vor.u32 1.1754944e-38, %v2760
        %v2762 = vsel %vm2759, %v2761, %v2757
        %v2763 = vmul.f32 1.0, %v2762
        %v2764 = vrcp.pop %v1958
        %v2765 = vmul.f32 %v1958, %v2764
        %v2766 = vsub.f32 1.0, %v2765
        %v2767 = vmul.f32 %v2764, %v2766
        %v2768 = vadd.f32 %v2764, %v2767
        %vm2769 = vweird.f32 %v1958
        %vm2770 = vweird.f32 %v2764
        %vm2771 = vmor %vm2769, %vm2770
        %v2772 = vsel %vm2771, %v2764, %v2768
        %v2773 = vand.u32 2147483647, %v1958
        %vm2774 = vcmp.eq.f32.partialorder %v2773, 8.507059e+37
        %v2775 = vand.u32 %v1958, 2147483648
        %v2776 = vor.u32 1.1754944e-38, %v2775
        %v2777 = vsel %vm2774, %v2776, %v2772
        %v2778 = vmul.f32 1.0, %v2777
        %v2779 = vrcp.pop %v1959
        %v2780 = vmul.f32 %v1959, %v2779
        %v2781 = vsub.f32 1.0, %v2780
        %v2782 = vmul.f32 %v2779, %v2781
        %v2783 = vadd.f32 %v2779, %v2782
        %vm2784 = vweird.f32 %v1959
        %vm2785 = vweird.f32 %v2779
        %vm2786 = vmor %vm2784, %vm2785
        %v2787 = vsel %vm2786, %v2779, %v2783
        %v2788 = vand.u32 2147483647, %v1959
        %vm2789 = vcmp.eq.f32.partialorder %v2788, 8.507059e+37
        %v2790 = vand.u32 %v1959, 2147483648
        %v2791 = vor.u32 1.1754944e-38, %v2790
        %v2792 = vsel %vm2789, %v2791, %v2787
        %v2793 = vmul.f32 1.0, %v2792
        %v2794 = vrcp.pop %v1960
        %v2795 = vmul.f32 %v1960, %v2794
        %v2796 = vsub.f32 1.0, %v2795
        %v2797 = vmul.f32 %v2794, %v2796
        %v2798 = vadd.f32 %v2794, %v2797
        %vm2799 = vweird.f32 %v1960
        %vm2800 = vweird.f32 %v2794
        %vm2801 = vmor %vm2799, %vm2800
        %v2802 = vsel %vm2801, %v2794, %v2798
        %v2803 = vand.u32 2147483647, %v1960
        %vm2804 = vcmp.eq.f32.partialorder %v2803, 8.507059e+37
        %v2805 = vand.u32 %v1960, 2147483648
        %v2806 = vor.u32 1.1754944e-38, %v2805
        %v2807 = vsel %vm2804, %v2806, %v2802
        %v2808 = vmul.f32 1.0, %v2807
        %v2809 = vrcp.pop %v1961
        %v2810 = vmul.f32 %v1961, %v2809
        %v2811 = vsub.f32 1.0, %v2810
        %v2812 = vmul.f32 %v2809, %v2811
        %v2813 = vadd.f32 %v2809, %v2812
        %vm2814 = vweird.f32 %v1961
        %vm2815 = vweird.f32 %v2809
        %vm2816 = vmor %vm2814, %vm2815
        %v2817 = vsel %vm2816, %v2809, %v2813
        %v2818 = vand.u32 2147483647, %v1961
        %vm2819 = vcmp.eq.f32.partialorder %v2818, 8.507059e+37
        %v2820 = vand.u32 %v1961, 2147483648
        %v2821 = vor.u32 1.1754944e-38, %v2820
        %v2822 = vsel %vm2819, %v2821, %v2817
        %v2823 = vmul.f32 1.0, %v2822
        %v2824 = vrcp.pop %v1962
        %v2825 = vmul.f32 %v1962, %v2824
        %v2826 = vsub.f32 1.0, %v2825
        %v2827 = vmul.f32 %v2824, %v2826
        %v2828 = vadd.f32 %v2824, %v2827
        %vm2829 = vweird.f32 %v1962
        %vm2830 = vweird.f32 %v2824
        %vm2831 = vmor %vm2829, %vm2830
        %v2832 = vsel %vm2831, %v2824, %v2828
        %v2833 = vand.u32 2147483647, %v1962
        %vm2834 = vcmp.eq.f32.partialorder %v2833, 8.507059e+37
        %v2835 = vand.u32 %v1962, 2147483648
        %v2836 = vor.u32 1.1754944e-38, %v2835
        %v2837 = vsel %vm2834, %v2836, %v2832
        %v2838 = vmul.f32 1.0, %v2837
        %v2839 = vrcp.pop %v1963
        %v2840 = vmul.f32 %v1963, %v2839
        %v2841 = vsub.f32 1.0, %v2840
        %v2842 = vmul.f32 %v2839, %v2841
        %v2843 = vadd.f32 %v2839, %v2842
        %vm2844 = vweird.f32 %v1963
        %vm2845 = vweird.f32 %v2839
        %vm2846 = vmor %vm2844, %vm2845
        %v2847 = vsel %vm2846, %v2839, %v2843
        %v2848 = vand.u32 2147483647, %v1963
        %vm2849 = vcmp.eq.f32.partialorder %v2848, 8.507059e+37
        %v2850 = vand.u32 %v1963, 2147483648
        %v2851 = vor.u32 1.1754944e-38, %v2850
        %v2852 = vsel %vm2849, %v2851, %v2847
        %v2853 = vmul.f32 1.0, %v2852
        %v2854 = vrcp.pop %v1964
        %v2855 = vmul.f32 %v1964, %v2854
        %v2856 = vsub.f32 1.0, %v2855
        %v2857 = vmul.f32 %v2854, %v2856
        %v2858 = vadd.f32 %v2854, %v2857
        %vm2859 = vweird.f32 %v1964
        %vm2860 = vweird.f32 %v2854
        %vm2861 = vmor %vm2859, %vm2860
        %v2862 = vsel %vm2861, %v2854, %v2858
        %v2863 = vand.u32 2147483647, %v1964
        %vm2864 = vcmp.eq.f32.partialorder %v2863, 8.507059e+37
        %v2865 = vand.u32 %v1964, 2147483648
        %v2866 = vor.u32 1.1754944e-38, %v2865
        %v2867 = vsel %vm2864, %v2866, %v2862
        %v2868 = vmul.f32 1.0, %v2867
        %v2869 = vrcp.pop %v1965
        %v2870 = vmul.f32 %v1965, %v2869
        %v2871 = vsub.f32 1.0, %v2870
        %v2872 = vmul.f32 %v2869, %v2871
        %v2873 = vadd.f32 %v2869, %v2872
        %vm2874 = vweird.f32 %v1965
        %vm2875 = vweird.f32 %v2869
        %vm2876 = vmor %vm2874, %vm2875
        %v2877 = vsel %vm2876, %v2869, %v2873
        %v2878 = vand.u32 2147483647, %v1965
        %vm2879 = vcmp.eq.f32.partialorder %v2878, 8.507059e+37
        %v2880 = vand.u32 %v1965, 2147483648
        %v2881 = vor.u32 1.1754944e-38, %v2880
        %v2882 = vsel %vm2879, %v2881, %v2877
        %v2883 = vmul.f32 1.0, %v2882
        %v2884 = vrcp.pop %v1966
        %v2885 = vmul.f32 %v1966, %v2884
        %v2886 = vsub.f32 1.0, %v2885
        %v2887 = vmul.f32 %v2884, %v2886
        %v2888 = vadd.f32 %v2884, %v2887
        %vm2889 = vweird.f32 %v1966
        %vm2890 = vweird.f32 %v2884
        %vm2891 = vmor %vm2889, %vm2890
        %v2892 = vsel %vm2891, %v2884, %v2888
        %v2893 = vand.u32 2147483647, %v1966
        %vm2894 = vcmp.eq.f32.partialorder %v2893, 8.507059e+37
        %v2895 = vand.u32 %v1966, 2147483648
        %v2896 = vor.u32 1.1754944e-38, %v2895
        %v2897 = vsel %vm2894, %v2896, %v2892
        %v2898 = vmul.f32 1.0, %v2897
        %v2899 = vrcp.pop %v1967
        %v2900 = vmul.f32 %v1967, %v2899
        %v2901 = vsub.f32 1.0, %v2900
        %v2902 = vmul.f32 %v2899, %v2901
        %v2903 = vadd.f32 %v2899, %v2902
        %vm2904 = vweird.f32 %v1967
        %vm2905 = vweird.f32 %v2899
        %vm2906 = vmor %vm2904, %vm2905
        %v2907 = vsel %vm2906, %v2899, %v2903
        %v2908 = vand.u32 2147483647, %v1967
        %vm2909 = vcmp.eq.f32.partialorder %v2908, 8.507059e+37
        %v2910 = vand.u32 %v1967, 2147483648
        %v2911 = vor.u32 1.1754944e-38, %v2910
        %v2912 = vsel %vm2909, %v2911, %v2907
        %v2913 = vmul.f32 1.0, %v2912
        %v2914 = vrcp.pop %v1968
        %v2915 = vmul.f32 %v1968, %v2914
        %v2916 = vsub.f32 1.0, %v2915
        %v2917 = vmul.f32 %v2914, %v2916
        %v2918 = vadd.f32 %v2914, %v2917
        %vm2919 = vweird.f32 %v1968
        %vm2920 = vweird.f32 %v2914
        %vm2921 = vmor %vm2919, %vm2920
        %v2922 = vsel %vm2921, %v2914, %v2918
        %v2923 = vand.u32 2147483647, %v1968
        %vm2924 = vcmp.eq.f32.partialorder %v2923, 8.507059e+37
        %v2925 = vand.u32 %v1968, 2147483648
        %v2926 = vor.u32 1.1754944e-38, %v2925
        %v2927 = vsel %vm2924, %v2926, %v2922
        %v2928 = vmul.f32 1.0, %v2927
        %v2929 = vld [vmem:[%s373] sm:$0xff]
        %v2930 = vld [vmem:[%s373 + $0x8] sm:$0xff]
        %v2931 = vld [vmem:[%s373 + $0x10] sm:$0xff]
        %v2932 = vld [vmem:[%s373 + $0x18] sm:$0xff]
        %v2933 = vld [vmem:[%s373 + $0x20] sm:$0xff]
        %v2934 = vld [vmem:[%s373 + $0x28] sm:$0xff]
        %v2935 = vld [vmem:[%s373 + $0x30] sm:$0xff]
        %v2936 = vld [vmem:[%s373 + $0x38] sm:$0xff]
        %v2937 = vld [vmem:[%s373 + $0x40] sm:$0xff]
        %v2938 = vld [vmem:[%s373 + $0x48] sm:$0xff]
        %v2939 = vld [vmem:[%s373 + $0x50] sm:$0xff]
        %v2940 = vld [vmem:[%s373 + $0x58] sm:$0xff]
        %v2941 = vld [vmem:[%s373 + $0x60] sm:$0xff]
        %v2942 = vld [vmem:[%s373 + $0x68] sm:$0xff]
        %v2943 = vld [vmem:[%s373 + $0x70] sm:$0xff]
        %v2944 = vld [vmem:[%s373 + $0x78] sm:$0xff]
        %v2945 = vld [vmem:[%s373 + $0x80] sm:$0xff]
        %v2946 = vld [vmem:[%s373 + $0x88] sm:$0xff]
        %v2947 = vld [vmem:[%s373 + $0x90] sm:$0xff]
        %v2948 = vld [vmem:[%s373 + $0x98] sm:$0xff]
        %v2949 = vld [vmem:[%s373 + $0xa0] sm:$0xff]
        %v2950 = vld [vmem:[%s373 + $0xa8] sm:$0xff]
        %v2951 = vld [vmem:[%s373 + $0xb0] sm:$0xff]
        %v2952 = vld [vmem:[%s373 + $0xb8] sm:$0xff]
        %v2953 = vld [vmem:[%s373 + $0xc0] sm:$0xff]
        %v2954 = vld [vmem:[%s373 + $0xc8] sm:$0xff]
        %v2955 = vld [vmem:[%s373 + $0xd0] sm:$0xff]
        %v2956 = vld [vmem:[%s373 + $0xd8] sm:$0xff]
        %v2957 = vld [vmem:[%s373 + $0xe0] sm:$0xff]
        %v2958 = vld [vmem:[%s373 + $0xe8] sm:$0xff]
        %v2959 = vld [vmem:[%s373 + $0xf0] sm:$0xff]
        %v2960 = vld [vmem:[%s373 + $0xf8] sm:$0xff]
        %v2961 = vld [vmem:[%s373 + $0x100] sm:$0xff]
        %v2962 = vld [vmem:[%s373 + $0x108] sm:$0xff]
        %v2963 = vld [vmem:[%s373 + $0x110] sm:$0xff]
        %v2964 = vld [vmem:[%s373 + $0x118] sm:$0xff]
        %v2965 = vld [vmem:[%s373 + $0x120] sm:$0xff]
        %v2966 = vld [vmem:[%s373 + $0x128] sm:$0xff]
        %v2967 = vld [vmem:[%s373 + $0x130] sm:$0xff]
        %v2968 = vld [vmem:[%s373 + $0x138] sm:$0xff]
        %v2969 = vld [vmem:[%s373 + $0x140] sm:$0xff]
        %v2970 = vld [vmem:[%s373 + $0x148] sm:$0xff]
        %v2971 = vld [vmem:[%s373 + $0x150] sm:$0xff]
        %v2972 = vld [vmem:[%s373 + $0x158] sm:$0xff]
        %v2973 = vld [vmem:[%s373 + $0x160] sm:$0xff]
        %v2974 = vld [vmem:[%s373 + $0x168] sm:$0xff]
        %v2975 = vld [vmem:[%s373 + $0x170] sm:$0xff]
        %v2976 = vld [vmem:[%s373 + $0x178] sm:$0xff]
        %v2977 = vld [vmem:[%s373 + $0x180] sm:$0xff]
        %v2978 = vld [vmem:[%s373 + $0x188] sm:$0xff]
        %v2979 = vld [vmem:[%s373 + $0x190] sm:$0xff]
        %v2980 = vld [vmem:[%s373 + $0x198] sm:$0xff]
        %v2981 = vld [vmem:[%s373 + $0x1a0] sm:$0xff]
        %v2982 = vld [vmem:[%s373 + $0x1a8] sm:$0xff]
        %v2983 = vld [vmem:[%s373 + $0x1b0] sm:$0xff]
        %v2984 = vld [vmem:[%s373 + $0x1b8] sm:$0xff]
        %v2985 = vld [vmem:[%s373 + $0x1c0] sm:$0xff]
        %v2986 = vld [vmem:[%s373 + $0x1c8] sm:$0xff]
        %v2987 = vld [vmem:[%s373 + $0x1d0] sm:$0xff]
        %v2988 = vld [vmem:[%s373 + $0x1d8] sm:$0xff]
        %v2989 = vld [vmem:[%s373 + $0x1e0] sm:$0xff]
        %v2990 = vld [vmem:[%s373 + $0x1e8] sm:$0xff]
        %v2991 = vld [vmem:[%s373 + $0x1f0] sm:$0xff]
        %v2992 = vld [vmem:[%s373 + $0x1f8] sm:$0xff]
        %vm2993 = vcmp.gt.f32.partialorder %v1983, %v2929
        %vm2994 = vcmp.gt.f32.partialorder %v1998, %v2930
        %vm2995 = vcmp.gt.f32.partialorder %v2013, %v2931
        %vm2996 = vcmp.gt.f32.partialorder %v2028, %v2932
        %vm2997 = vcmp.gt.f32.partialorder %v2043, %v2933
        %vm2998 = vcmp.gt.f32.partialorder %v2058, %v2934
        %vm2999 = vcmp.gt.f32.partialorder %v2073, %v2935
        %vm3000 = vcmp.gt.f32.partialorder %v2088, %v2936
        %vm3001 = vcmp.gt.f32.partialorder %v2103, %v2937
        %vm3002 = vcmp.gt.f32.partialorder %v2118, %v2938
        %vm3003 = vcmp.gt.f32.partialorder %v2133, %v2939
        %vm3004 = vcmp.gt.f32.partialorder %v2148, %v2940
        %vm3005 = vcmp.gt.f32.partialorder %v2163, %v2941
        %vm3006 = vcmp.gt.f32.partialorder %v2178, %v2942
        %vm3007 = vcmp.gt.f32.partialorder %v2193, %v2943
        %vm3008 = vcmp.gt.f32.partialorder %v2208, %v2944
        %vm3009 = vcmp.gt.f32.partialorder %v2223, %v2945
        %vm3010 = vcmp.gt.f32.partialorder %v2238, %v2946
        %vm3011 = vcmp.gt.f32.partialorder %v2253, %v2947
        %vm3012 = vcmp.gt.f32.partialorder %v2268, %v2948
        %vm3013 = vcmp.gt.f32.partialorder %v2283, %v2949
        %vm3014 = vcmp.gt.f32.partialorder %v2298, %v2950
        %vm3015 = vcmp.gt.f32.partialorder %v2313, %v2951
        %vm3016 = vcmp.gt.f32.partialorder %v2328, %v2952
        %vm3017 = vcmp.gt.f32.partialorder %v2343, %v2953
        %vm3018 = vcmp.gt.f32.partialorder %v2358, %v2954
        %vm3019 = vcmp.gt.f32.partialorder %v2373, %v2955
        %vm3020 = vcmp.gt.f32.partialorder %v2388, %v2956
        %vm3021 = vcmp.gt.f32.partialorder %v2403, %v2957
        %vm3022 = vcmp.gt.f32.partialorder %v2418, %v2958
        %vm3023 = vcmp.gt.f32.partialorder %v2433, %v2959
        %vm3024 = vcmp.gt.f32.partialorder %v2448, %v2960
        %vm3025 = vcmp.gt.f32.partialorder %v2463, %v2961
        %vm3026 = vcmp.gt.f32.partialorder %v2478, %v2962
        %vm3027 = vcmp.gt.f32.partialorder %v2493, %v2963
        %vm3028 = vcmp.gt.f32.partialorder %v2508, %v2964
        %vm3029 = vcmp.gt.f32.partialorder %v2523, %v2965
        %vm3030 = vcmp.gt.f32.partialorder %v2538, %v2966
        %vm3031 = vcmp.gt.f32.partialorder %v2553, %v2967
        %vm3032 = vcmp.gt.f32.partialorder %v2568, %v2968
        %vm3033 = vcmp.gt.f32.partialorder %v2583, %v2969
        %vm3034 = vcmp.gt.f32.partialorder %v2598, %v2970
        %vm3035 = vcmp.gt.f32.partialorder %v2613, %v2971
        %vm3036 = vcmp.gt.f32.partialorder %v2628, %v2972
        %vm3037 = vcmp.gt.f32.partialorder %v2643, %v2973
        %vm3038 = vcmp.gt.f32.partialorder %v2658, %v2974
        %vm3039 = vcmp.gt.f32.partialorder %v2673, %v2975
        %vm3040 = vcmp.gt.f32.partialorder %v2688, %v2976
        %vm3041 = vcmp.gt.f32.partialorder %v2703, %v2977
        %vm3042 = vcmp.gt.f32.partialorder %v2718, %v2978
        %vm3043 = vcmp.gt.f32.partialorder %v2733, %v2979
        %vm3044 = vcmp.gt.f32.partialorder %v2748, %v2980
        %vm3045 = vcmp.gt.f32.partialorder %v2763, %v2981
        %vm3046 = vcmp.gt.f32.partialorder %v2778, %v2982
        %vm3047 = vcmp.gt.f32.partialorder %v2793, %v2983
        %vm3048 = vcmp.gt.f32.partialorder %v2808, %v2984
        %vm3049 = vcmp.gt.f32.partialorder %v2823, %v2985
        %vm3050 = vcmp.gt.f32.partialorder %v2838, %v2986
        %vm3051 = vcmp.gt.f32.partialorder %v2853, %v2987
        %vm3052 = vcmp.gt.f32.partialorder %v2868, %v2988
        %vm3053 = vcmp.gt.f32.partialorder %v2883, %v2989
        %vm3054 = vcmp.gt.f32.partialorder %v2898, %v2990
        %vm3055 = vcmp.gt.f32.partialorder %v2913, %v2991
        %vm3056 = vcmp.gt.f32.partialorder %v2928, %v2992
        %v3057 = vsel %vm2993, 1.0, 0.0
        %v3058 = vsel %vm2994, 1.0, 0.0
        %v3059 = vsel %vm2995, 1.0, 0.0
        %v3060 = vsel %vm2996, 1.0, 0.0
        %v3061 = vsel %vm2997, 1.0, 0.0
        %v3062 = vsel %vm2998, 1.0, 0.0
        %v3063 = vsel %vm2999, 1.0, 0.0
        %v3064 = vsel %vm3000, 1.0, 0.0
        %v3065 = vsel %vm3001, 1.0, 0.0
        %v3066 = vsel %vm3002, 1.0, 0.0
        %v3067 = vsel %vm3003, 1.0, 0.0
        %v3068 = vsel %vm3004, 1.0, 0.0
        %v3069 = vsel %vm3005, 1.0, 0.0
        %v3070 = vsel %vm3006, 1.0, 0.0
        %v3071 = vsel %vm3007, 1.0, 0.0
        %v3072 = vsel %vm3008, 1.0, 0.0
        %v3073 = vsel %vm3009, 1.0, 0.0
        %v3074 = vsel %vm3010, 1.0, 0.0
        %v3075 = vsel %vm3011, 1.0, 0.0
        %v3076 = vsel %vm3012, 1.0, 0.0
        %v3077 = vsel %vm3013, 1.0, 0.0
        %v3078 = vsel %vm3014, 1.0, 0.0
        %v3079 = vsel %vm3015, 1.0, 0.0
        %v3080 = vsel %vm3016, 1.0, 0.0
        %v3081 = vsel %vm3017, 1.0, 0.0
        %v3082 = vsel %vm3018, 1.0, 0.0
        %v3083 = vsel %vm3019, 1.0, 0.0
        %v3084 = vsel %vm3020, 1.0, 0.0
        %v3085 = vsel %vm3021, 1.0, 0.0
        %v3086 = vsel %vm3022, 1.0, 0.0
        %v3087 = vsel %vm3023, 1.0, 0.0
        %v3088 = vsel %vm3024, 1.0, 0.0
        %v3089 = vsel %vm3025, 1.0, 0.0
        %v3090 = vsel %vm3026, 1.0, 0.0
        %v3091 = vsel %vm3027, 1.0, 0.0
        %v3092 = vsel %vm3028, 1.0, 0.0
        %v3093 = vsel %vm3029, 1.0, 0.0
        %v3094 = vsel %vm3030, 1.0, 0.0
        %v3095 = vsel %vm3031, 1.0, 0.0
        %v3096 = vsel %vm3032, 1.0, 0.0
        %v3097 = vsel %vm3033, 1.0, 0.0
        %v3098 = vsel %vm3034, 1.0, 0.0
        %v3099 = vsel %vm3035, 1.0, 0.0
        %v3100 = vsel %vm3036, 1.0, 0.0
        %v3101 = vsel %vm3037, 1.0, 0.0
        %v3102 = vsel %vm3038, 1.0, 0.0
        %v3103 = vsel %vm3039, 1.0, 0.0
        %v3104 = vsel %vm3040, 1.0, 0.0
        %v3105 = vsel %vm3041, 1.0, 0.0
        %v3106 = vsel %vm3042, 1.0, 0.0
        %v3107 = vsel %vm3043, 1.0, 0.0
        %v3108 = vsel %vm3044, 1.0, 0.0
        %v3109 = vsel %vm3045, 1.0, 0.0
        %v3110 = vsel %vm3046, 1.0, 0.0
        %v3111 = vsel %vm3047, 1.0, 0.0
        %v3112 = vsel %vm3048, 1.0, 0.0
        %v3113 = vsel %vm3049, 1.0, 0.0
        %v3114 = vsel %vm3050, 1.0, 0.0
        %v3115 = vsel %vm3051, 1.0, 0.0
        %v3116 = vsel %vm3052, 1.0, 0.0
        %v3117 = vsel %vm3053, 1.0, 0.0
        %v3118 = vsel %vm3054, 1.0, 0.0
        %v3119 = vsel %vm3055, 1.0, 0.0
        %v3120 = vsel %vm3056, 1.0, 0.0
        %3121 = vst [vmem:[%s414] sm:$0xff] %v3057
        %3122 = vst [vmem:[%s414 + $0x8] sm:$0xff] %v3058
        %3123 = vst [vmem:[%s414 + $0x10] sm:$0xff] %v3059
        %3124 = vst [vmem:[%s414 + $0x18] sm:$0xff] %v3060
        %3125 = vst [vmem:[%s414 + $0x20] sm:$0xff] %v3061
        %3126 = vst [vmem:[%s414 + $0x28] sm:$0xff] %v3062
        %3127 = vst [vmem:[%s414 + $0x30] sm:$0xff] %v3063
        %3128 = vst [vmem:[%s414 + $0x38] sm:$0xff] %v3064
        %3129 = vst [vmem:[%s414 + $0x40] sm:$0xff] %v3065
        %3130 = vst [vmem:[%s414 + $0x48] sm:$0xff] %v3066
        %3131 = vst [vmem:[%s414 + $0x50] sm:$0xff] %v3067
        %3132 = vst [vmem:[%s414 + $0x58] sm:$0xff] %v3068
        %3133 = vst [vmem:[%s414 + $0x60] sm:$0xff] %v3069
        %3134 = vst [vmem:[%s414 + $0x68] sm:$0xff] %v3070
        %3135 = vst [vmem:[%s414 + $0x70] sm:$0xff] %v3071
        %3136 = vst [vmem:[%s414 + $0x78] sm:$0xff] %v3072
        %3137 = vst [vmem:[%s414 + $0x80] sm:$0xff] %v3073
        %3138 = vst [vmem:[%s414 + $0x88] sm:$0xff] %v3074
        %3139 = vst [vmem:[%s414 + $0x90] sm:$0xff] %v3075
        %3140 = vst [vmem:[%s414 + $0x98] sm:$0xff] %v3076
        %3141 = vst [vmem:[%s414 + $0xa0] sm:$0xff] %v3077
        %3142 = vst [vmem:[%s414 + $0xa8] sm:$0xff] %v3078
        %3143 = vst [vmem:[%s414 + $0xb0] sm:$0xff] %v3079
        %3144 = vst [vmem:[%s414 + $0xb8] sm:$0xff] %v3080
        %3145 = vst [vmem:[%s414 + $0xc0] sm:$0xff] %v3081
        %3146 = vst [vmem:[%s414 + $0xc8] sm:$0xff] %v3082
        %3147 = vst [vmem:[%s414 + $0xd0] sm:$0xff] %v3083
        %3148 = vst [vmem:[%s414 + $0xd8] sm:$0xff] %v3084
        %3149 = vst [vmem:[%s414 + $0xe0] sm:$0xff] %v3085
        %3150 = vst [vmem:[%s414 + $0xe8] sm:$0xff] %v3086
        %3151 = vst [vmem:[%s414 + $0xf0] sm:$0xff] %v3087
        %3152 = vst [vmem:[%s414 + $0xf8] sm:$0xff] %v3088
        %3153 = vst [vmem:[%s414 + $0x100] sm:$0xff] %v3089
        %3154 = vst [vmem:[%s414 + $0x108] sm:$0xff] %v3090
        %3155 = vst [vmem:[%s414 + $0x110] sm:$0xff] %v3091
        %3156 = vst [vmem:[%s414 + $0x118] sm:$0xff] %v3092
        %3157 = vst [vmem:[%s414 + $0x120] sm:$0xff] %v3093
        %3158 = vst [vmem:[%s414 + $0x128] sm:$0xff] %v3094
        %3159 = vst [vmem:[%s414 + $0x130] sm:$0xff] %v3095
        %3160 = vst [vmem:[%s414 + $0x138] sm:$0xff] %v3096
        %3161 = vst [vmem:[%s414 + $0x140] sm:$0xff] %v3097
        %3162 = vst [vmem:[%s414 + $0x148] sm:$0xff] %v3098
        %3163 = vst [vmem:[%s414 + $0x150] sm:$0xff] %v3099
        %3164 = vst [vmem:[%s414 + $0x158] sm:$0xff] %v3100
        %3165 = vst [vmem:[%s414 + $0x160] sm:$0xff] %v3101
        %3166 = vst [vmem:[%s414 + $0x168] sm:$0xff] %v3102
        %3167 = vst [vmem:[%s414 + $0x170] sm:$0xff] %v3103
        %3168 = vst [vmem:[%s414 + $0x178] sm:$0xff] %v3104
        %3169 = vst [vmem:[%s414 + $0x180] sm:$0xff] %v3105
        %3170 = vst [vmem:[%s414 + $0x188] sm:$0xff] %v3106
        %3171 = vst [vmem:[%s414 + $0x190] sm:$0xff] %v3107
        %3172 = vst [vmem:[%s414 + $0x198] sm:$0xff] %v3108
        %3173 = vst [vmem:[%s414 + $0x1a0] sm:$0xff] %v3109
        %3174 = vst [vmem:[%s414 + $0x1a8] sm:$0xff] %v3110
        %3175 = vst [vmem:[%s414 + $0x1b0] sm:$0xff] %v3111
        %3176 = vst [vmem:[%s414 + $0x1b8] sm:$0xff] %v3112
        %3177 = vst [vmem:[%s414 + $0x1c0] sm:$0xff] %v3113
        %3178 = vst [vmem:[%s414 + $0x1c8] sm:$0xff] %v3114
        %3179 = vst [vmem:[%s414 + $0x1d0] sm:$0xff] %v3115
        %3180 = vst [vmem:[%s414 + $0x1d8] sm:$0xff] %v3116
        %3181 = vst [vmem:[%s414 + $0x1e0] sm:$0xff] %v3117
        %3182 = vst [vmem:[%s414 + $0x1e8] sm:$0xff] %v3118
        %3183 = vst [vmem:[%s414 + $0x1f0] sm:$0xff] %v3119
        %3184 = vst [vmem:[%s414 + $0x1f8] sm:$0xff] %v3120
        %s3185 = sand.u32 %s198, 1
        %s3186 = scalar_lea.sflag [#allocation4], %s3185
        %s3187 = sand.u32 %s198, 1
        %s3188 = smul.addr %s3187, 512
        %s3189 = scalar_lea.vmem [#allocation11], %s3188
        // Predicated region
        $region69: #{tpu_custom_call.1} parent=47 // pred_check
          %p3190 = pneg %p208
        $region70: #{tpu_custom_call.1} parent=47 // pred_check_branch
          %3192 = sbr.rel (%p3190) target = $region72
        $region71: #{tpu_custom_call.1} parent=47 // pred_region
          %s3193 = smul.u32 32, %s28
          %3195 = vsyncadd %s3186, 0
          %s3196 = smul.addr %s3193, 2
          %s3197 = smul.addr %s3196, 8
          %s3198 = scalar_lea.hbm %s7, %s3197
          %s3199 = sshll.u32 %s3189, 4
          %s3200 = int_to_ptr.vmem [resolvable:$true] %s3199
          %s3201 = sshll.u32 %s3198, 4
          %s3202 = int_to_ptr.hbm [resolvable:$true] %s3201
          %3207 = dma.vmem_to_hbm [thread:$0]  %s3200, 8192, %s3202, %s3186, 256, 256, 16
        $region72: #{tpu_custom_call.1} parent=47 // pred_fallthru
          _
      $region48: #{tpu_custom_call.1} parent=5 // pred_fallthru
        _
      %p3208 = scmp.le.s32.totalorder 2, %s23
      // Predicated region
      $region73: #{tpu_custom_call.1} parent=5 // pred_check
        %p3209 = pneg %p3208
      $region74: #{tpu_custom_call.1} parent=5 // pred_check_branch
        %3211 = sbr.rel (%p3209) target = $region76
      $region75: #{tpu_custom_call.1} parent=5 // pred_region
        %s3212 = ssub.s32 %s23, 2
        // Predicated region
        $region77: #{tpu_custom_call.1} parent=75 // pred_check
          %p3213 = pneg %p214
        $region78: #{tpu_custom_call.1} parent=75 // pred_check_branch
          %3215 = sbr.rel (%p3213) target = $region80
        $region79: #{tpu_custom_call.1} parent=75 // pred_region
          %s3216 = sand.u32 %s199, 1
          %s3217 = scalar_lea.sflag [#allocation4], %s3216
          %s3218 = sand.u32 %s199, 1
          %s3219 = smul.addr %s3218, 512
          %s3220 = scalar_lea.vmem [#allocation11], %s3219
          %3222 = dma.done %s3217, 8192
        $region80: #{tpu_custom_call.1} parent=75 // pred_fallthru
          _
      $region76: #{tpu_custom_call.1} parent=5 // pred_fallthru
        _
    $region6: #{tpu_custom_call.1} parent=1 // loop_footer
      %s27 = sadd.s32 1, %s23
    $region7: #{tpu_custom_call.1} parent=1 // loop_footer_branch
      %22 = sbr.rel target = $region3
    $region8: #{tpu_custom_call.1} parent=1 // loop_exit
      _
    %3223 = vsyncpa [#allocation3], 1
    %s3224 = scalar_lea.sflag [#allocation3], 1
    %3225 = vsyncpa %s3224, 1
    %3226 = vsyncpa [#allocation6], 1
    %3227 = vsyncpa [#allocation9], 1
    %s3228 = scalar_lea.sflag [#allocation9], 1
    %3229 = vsyncpa %s3228, 1
    %3230 = vsyncpa [#allocation4], 1
    %s3231 = scalar_lea.sflag [#allocation4], 1
    %3232 = vsyncpa %s3231, 1

</llo_original>
